<compile_context>
chip_gen: v5e
topology: v5e:2x2
jax: 0.10.0
libtpu: 0.0.40
codegen_flags: <defaults>
</compile_context>

<pallas_src>
import functools

import numpy as np
import jax
import jax.numpy as jnp
from jax.experimental import pallas as pl
from jax.experimental.pallas import tpu as pltpu


# ----------------------------------------------------------------------------
# Fused kernel: conv (16 shifted matmuls) + InstanceNorm + LeakyReLU + BlurPool
# ----------------------------------------------------------------------------
def fused_unet_down_kernel(x_ref, w_ref, mask_ref, b_ref, o_ref, *,
                           Wp, S, inv_hw, n_taps):
    # x_ref   : (Hp*Wp, Cin)        bf16  padded input, channels-last, spatial flat
    # w_ref   : (16, Cin, Ct)       bf16  per-tap conv weights (ky*4+kx, ci, co)
    # mask_ref: (S, 1)              f32   1.0 on valid spatial rows, 0.0 on pad junk
    # b_ref   : (Hb*Wb, S)          bf16  folded reflect-pad + blur + stride-2 matrix
    # o_ref   : (Hb*Wb, Ct)         f32   final output tile
    ct = o_ref.shape[-1]

    # ---- Conv2d(k=4, s=1, p=1, bias=False): accumulate 16 shifted matmuls ----
    acc = jnp.zeros((S, ct), jnp.float32)
    for t in range(n_taps):
        ky, kx = divmod(t, 4)
        off = ky * Wp + kx                              # static offset
        xs = x_ref[off:off + S, :]                      # (S, Cin) bf16
        acc = acc + jnp.dot(xs, w_ref[t], preferred_element_type=jnp.float32)

    # ---- InstanceNorm2d (affine=False, eps=1e-5), one-pass masked stats ----
    m = mask_ref[...]                                   # (S, 1) f32
    s1 = jnp.sum(acc * m, axis=0, keepdims=True)        # (1, Ct)
    s2 = jnp.sum(acc * acc * m, axis=0, keepdims=True)  # (1, Ct)
    mean = s1 * inv_hw
    var = jnp.maximum(s2 * inv_hw - mean * mean, 0.0)
    y = (acc - mean) * jax.lax.rsqrt(var + 1e-5)

    # ---- LeakyReLU(0.2) ----
    y = jnp.where(y > 0, y, 0.2 * y)

    # ---- BlurPool: one matmul with the folded (Hb*Wb, S) blur matrix ----
    # (pad-junk rows of y hit all-zero columns of B, so they never contribute)
    o_ref[...] = jnp.dot(b_ref[...], y.astype(jnp.bfloat16),
                         preferred_element_type=jnp.float32).astype(o_ref.dtype)


# ----------------------------------------------------------------------------
# Host-side construction of the folded blur / mask matrices
# ----------------------------------------------------------------------------
def blur_fold_matrix(n):
    """(n_out, n) matrix folding ReflectionPad(1,2) + [1,3,3,1]/8 blur + stride 2."""
    assert n >= 3
    b = np.array([1.0, 3.0, 3.0, 1.0]) / 8.0
    pad_left, pad_right = 1, 2
    npad = n + pad_left + pad_right
    idx = np.arange(npad) - pad_left
    idx = np.where(idx < 0, -idx, idx)                 # reflect (no edge repeat)
    idx = np.where(idx >= n, 2 * (n - 1) - idx, idx)
    n_out = (npad - 4) // 2 + 1
    m = np.zeros((n_out, n), np.float32)
    for i in range(n_out):
        for k in range(4):
            m[i, idx[2 * i + k]] += b[k]
    return m


def build_blur_matrix(Ho, Wo, Wp, S):
    """Full separable blur (both axes) folded into one (Hb*Wb, S) matrix whose
    columns are indexed by the flattened padded-stride layout r = i*Wp + j."""
    Mh = blur_fold_matrix(Ho)                           # (Hb, Ho)
    Mw = blur_fold_matrix(Wo)                           # (Wb, Wo)
    Hb, Wb = Mh.shape[0], Mw.shape[0]
    K = np.einsum("ai,bj->abij", Mh, Mw)                # (Hb, Wb, Ho, Wo)
    full = np.zeros((Hb, Wb, Ho, Wp), np.float32)
    full[:, :, :, :Wo] = K
    B = full.reshape(Hb * Wb, Ho * Wp)[:, :S]           # coeffs are k/64 -> exact bf16
    return B, Hb, Wb


def build_valid_mask(Ho, Wo, Wp, S):
    m = np.zeros((Ho, Wp), np.float32)
    m[:, :Wo] = 1.0
    return m.reshape(-1)[:S].reshape(S, 1)


# ----------------------------------------------------------------------------
# Wrapper
# ----------------------------------------------------------------------------
def unet_down(x, w_conv, *, cout_tile=None):
    """x: (N, Cin, H, W) f32; w_conv: (Cout, Cin, 4, 4) f32 -> (N, Cout, Hb, Wb) f32."""
    N, Cin, H, W = x.shape
    Cout = w_conv.shape[0]
    K = 4
    Ho, Wo = H - 1, W - 1                   # k=4, stride=1, pad=1
    Hp, Wp = H + 2, W + 2
    S = (Ho - 1) * Wp + Wo                  # flattened shifted-window length
    inv_hw = 1.0 / float(Ho * Wo)

    # --- cheap host prep (1x data, no 16x im2col) ---
    xpad = jnp.pad(x, ((0, 0), (0, 0), (1, 1), (1, 1)))
    x_flat = (jnp.transpose(xpad, (0, 2, 3, 1))         # (N, Hp, Wp, Cin)
              .reshape(N, Hp * Wp, Cin)
              .astype(jnp.bfloat16))
    w_taps = (jnp.transpose(w_conv, (2, 3, 1, 0))       # (ky, kx, Cin, Cout)
              .reshape(K * K, Cin, Cout)
              .astype(jnp.bfloat16))

    Bnp, Hb, Wb = build_blur_matrix(Ho, Wo, Wp, S)
    Bmat = jnp.asarray(Bnp, jnp.bfloat16)
    mask = jnp.asarray(build_valid_mask(Ho, Wo, Wp, S))

    if cout_tile is None:
        cout_tile = Cout if Cout <= 128 else 128
    assert Cout % cout_tile == 0
    grid = (N, Cout // cout_tile)

    kern = functools.partial(fused_unet_down_kernel,
                             Wp=Wp, S=S, inv_hw=inv_hw, n_taps=K * K)

    out = pl.pallas_call(
        kern,
        out_shape=jax.ShapeDtypeStruct((N, Hb * Wb, Cout), jnp.float32),
        grid_spec=pl.GridSpec(
            grid=grid,
            in_specs=[
                pl.BlockSpec((pl.Squeezed(), Hp * Wp, Cin), lambda n, c: (n, 0, 0)),
                pl.BlockSpec((K * K, Cin, cout_tile), lambda n, c: (0, 0, c)),
                pl.BlockSpec((S, 1), lambda n, c: (0, 0)),
                pl.BlockSpec((Hb * Wb, S), lambda n, c: (0, 0)),
            ],
            out_specs=pl.BlockSpec((pl.Squeezed(), Hb * Wb, cout_tile),
                                   lambda n, c: (n, 0, c)),
        ),
        compiler_params=pltpu.CompilerParams(
            dimension_semantics=("parallel", "parallel"),
            vmem_limit_bytes=32 * 1024 * 1024),
    )(x_flat, w_taps, mask, Bmat)

    # (N, Hb*Wb, Cout) -> (N, Cout, Hb, Wb)
    return out.reshape(N, Hb, Wb, Cout).transpose(0, 3, 1, 2)


# ----------------------------------------------------------------------------
# Pure-JAX reference (for self-check)
# ----------------------------------------------------------------------------
def unet_down_ref(x, w_conv):
    y = jax.lax.conv_general_dilated(
        x, w_conv, window_strides=(1, 1), padding=((1, 1), (1, 1)),
        dimension_numbers=("NCHW", "OIHW", "NCHW"),
        precision=jax.lax.Precision.HIGHEST)
    mean = jnp.mean(y, axis=(2, 3), keepdims=True)
    var = jnp.mean((y - mean) ** 2, axis=(2, 3), keepdims=True)
    y = (y - mean) / jnp.sqrt(var + 1e-5)
    y = jnp.where(y > 0, y, 0.2 * y)
    y = jnp.pad(y, ((0, 0), (0, 0), (1, 2), (1, 2)), mode="reflect")
    a = jnp.array([1.0, 3.0, 3.0, 1.0])
    f = a[:, None] * a[None, :]
    f = f / f.sum()
    C = y.shape[1]
    filt = jnp.broadcast_to(f, (C, 1, 4, 4)).astype(y.dtype)
    return jax.lax.conv_general_dilated(
        y, filt, window_strides=(2, 2), padding="VALID",
        dimension_numbers=("NCHW", "OIHW", "NCHW"), feature_group_count=C,
        precision=jax.lax.Precision.HIGHEST)


if __name__ == "__main__":
    key = jax.random.PRNGKey(0)
    k_x, k_w = jax.random.split(key)

    N, Cin, Cout, H, W = 2, 4, 8, 16, 16
    x = jax.random.normal(k_x, (N, Cin, H, W), jnp.float32)
    w_conv = jax.random.normal(k_w, (Cout, Cin, 4, 4), jnp.float32) * 0.05

    out = jax.block_until_ready(unet_down(x, w_conv))
    ref = jax.block_until_ready(unet_down_ref(x, w_conv))

    assert out.shape == (N, Cout, 8, 8), out.shape
    # bf16 MXU inputs -> compare against the f32 reference at bf16-level tolerance
    np.testing.assert_allclose(np.asarray(out), np.asarray(ref), atol=3e-2, rtol=3e-2)

    print("KERNEL_OK")
</pallas_src>

<mosaic_0001>
module attributes {stable_mosaic.version = 11 : i64} {
  func.func @fused_unet_down_kernel(%arg0: i32, %arg1: i32, %arg2: memref<1x324x4xbf16, #tpu.memory_space<vmem>>, %arg3: memref<16x4x8xbf16, #tpu.memory_space<vmem>>, %arg4: memref<267x1xf32, #tpu.memory_space<vmem>>, %arg5: memref<64x267xbf16, #tpu.memory_space<vmem>>, %arg6: memref<1x64x8xf32, #tpu.memory_space<vmem>>) attributes {dimension_semantics = [#tpu.dimension_semantics<parallel>, #tpu.dimension_semantics<parallel>], iteration_bounds = array<i64: 2, 1>, scalar_prefetch = 0 : i64, scratch_operands = 0 : i64, tpu.core_type = #tpu.core_type<tc>, window_params = [{transform_indices = @transform_0, window_bounds = array<i64: 1, 324, 4>}, {transform_indices = @transform_1, window_bounds = array<i64: 16, 4, 8>}, {pipeline_mode = #tpu.pipeline_mode<synchronous>, transform_indices = @transform_2, window_bounds = array<i64: 267, 1>}, {pipeline_mode = #tpu.pipeline_mode<synchronous>, transform_indices = @transform_3, window_bounds = array<i64: 64, 267>}, {transform_indices = @transform_4, window_bounds = array<i64: 1, 64, 8>}]} {
    %cst = arith.constant 0.000000e+00 : f32
    %0 = vector.broadcast %cst : f32 to vector<267x8xf32>
    %c0 = arith.constant 0 : index
    %c0_0 = arith.constant 0 : index
    %c0_1 = arith.constant 0 : index
    %1 = vector.load %arg2[%c0, %c0_0, %c0_1] : memref<1x324x4xbf16, #tpu.memory_space<vmem>>, vector<1x267x4xbf16>
    %2 = vector.shape_cast %1 : vector<1x267x4xbf16> to vector<267x4xbf16>
    %c0_2 = arith.constant 0 : index
    %c0_3 = arith.constant 0 : index
    %c0_4 = arith.constant 0 : index
    %3 = vector.load %arg3[%c0_2, %c0_3, %c0_4] : memref<16x4x8xbf16, #tpu.memory_space<vmem>>, vector<1x4x8xbf16>
    %4 = vector.shape_cast %3 : vector<1x4x8xbf16> to vector<4x8xbf16>
    %cst_5 = arith.constant dense<0.000000e+00> : vector<267x8xf32>
    %5 = tpu.matmul %2, %4, %cst_5 {dimension_numbers = #tpu.dot_dimension_numbers<[1], [0], [0], [1], [0, 0, 1, 1], [], []>} : vector<267x4xbf16>, vector<4x8xbf16>, vector<267x8xf32> -> vector<267x8xf32>
    %6 = arith.addf %0, %5 : vector<267x8xf32>
    %c0_6 = arith.constant 0 : index
    %c1 = arith.constant 1 : index
    %c0_7 = arith.constant 0 : index
    %7 = vector.load %arg2[%c0_6, %c1, %c0_7] : memref<1x324x4xbf16, #tpu.memory_space<vmem>>, vector<1x267x4xbf16>
    %8 = vector.shape_cast %7 : vector<1x267x4xbf16> to vector<267x4xbf16>
    %c1_8 = arith.constant 1 : index
    %c0_9 = arith.constant 0 : index
    %c0_10 = arith.constant 0 : index
    %9 = vector.load %arg3[%c1_8, %c0_9, %c0_10] : memref<16x4x8xbf16, #tpu.memory_space<vmem>>, vector<1x4x8xbf16>
    %10 = vector.shape_cast %9 : vector<1x4x8xbf16> to vector<4x8xbf16>
    %cst_11 = arith.constant dense<0.000000e+00> : vector<267x8xf32>
    %11 = tpu.matmul %8, %10, %cst_11 {dimension_numbers = #tpu.dot_dimension_numbers<[1], [0], [0], [1], [0, 0, 1, 1], [], []>} : vector<267x4xbf16>, vector<4x8xbf16>, vector<267x8xf32> -> vector<267x8xf32>
    %12 = arith.addf %6, %11 : vector<267x8xf32>
    %c0_12 = arith.constant 0 : index
    %c2 = arith.constant 2 : index
    %c0_13 = arith.constant 0 : index
    %13 = vector.load %arg2[%c0_12, %c2, %c0_13] : memref<1x324x4xbf16, #tpu.memory_space<vmem>>, vector<1x267x4xbf16>
    %14 = vector.shape_cast %13 : vector<1x267x4xbf16> to vector<267x4xbf16>
    %c2_14 = arith.constant 2 : index
    %c0_15 = arith.constant 0 : index
    %c0_16 = arith.constant 0 : index
    %15 = vector.load %arg3[%c2_14, %c0_15, %c0_16] : memref<16x4x8xbf16, #tpu.memory_space<vmem>>, vector<1x4x8xbf16>
    %16 = vector.shape_cast %15 : vector<1x4x8xbf16> to vector<4x8xbf16>
    %cst_17 = arith.constant dense<0.000000e+00> : vector<267x8xf32>
    %17 = tpu.matmul %14, %16, %cst_17 {dimension_numbers = #tpu.dot_dimension_numbers<[1], [0], [0], [1], [0, 0, 1, 1], [], []>} : vector<267x4xbf16>, vector<4x8xbf16>, vector<267x8xf32> -> vector<267x8xf32>
    %18 = arith.addf %12, %17 : vector<267x8xf32>
    %c0_18 = arith.constant 0 : index
    %c3 = arith.constant 3 : index
    %c0_19 = arith.constant 0 : index
    %19 = vector.load %arg2[%c0_18, %c3, %c0_19] : memref<1x324x4xbf16, #tpu.memory_space<vmem>>, vector<1x267x4xbf16>
    %20 = vector.shape_cast %19 : vector<1x267x4xbf16> to vector<267x4xbf16>
    %c3_20 = arith.constant 3 : index
    %c0_21 = arith.constant 0 : index
    %c0_22 = arith.constant 0 : index
    %21 = vector.load %arg3[%c3_20, %c0_21, %c0_22] : memref<16x4x8xbf16, #tpu.memory_space<vmem>>, vector<1x4x8xbf16>
    %22 = vector.shape_cast %21 : vector<1x4x8xbf16> to vector<4x8xbf16>
    %cst_23 = arith.constant dense<0.000000e+00> : vector<267x8xf32>
    %23 = tpu.matmul %20, %22, %cst_23 {dimension_numbers = #tpu.dot_dimension_numbers<[1], [0], [0], [1], [0, 0, 1, 1], [], []>} : vector<267x4xbf16>, vector<4x8xbf16>, vector<267x8xf32> -> vector<267x8xf32>
    %24 = arith.addf %18, %23 : vector<267x8xf32>
    %c0_24 = arith.constant 0 : index
    %c18 = arith.constant 18 : index
    %c0_25 = arith.constant 0 : index
    %25 = vector.load %arg2[%c0_24, %c18, %c0_25] : memref<1x324x4xbf16, #tpu.memory_space<vmem>>, vector<1x267x4xbf16>
    %26 = vector.shape_cast %25 : vector<1x267x4xbf16> to vector<267x4xbf16>
    %c4 = arith.constant 4 : index
    %c0_26 = arith.constant 0 : index
    %c0_27 = arith.constant 0 : index
    %27 = vector.load %arg3[%c4, %c0_26, %c0_27] : memref<16x4x8xbf16, #tpu.memory_space<vmem>>, vector<1x4x8xbf16>
    %28 = vector.shape_cast %27 : vector<1x4x8xbf16> to vector<4x8xbf16>
    %cst_28 = arith.constant dense<0.000000e+00> : vector<267x8xf32>
    %29 = tpu.matmul %26, %28, %cst_28 {dimension_numbers = #tpu.dot_dimension_numbers<[1], [0], [0], [1], [0, 0, 1, 1], [], []>} : vector<267x4xbf16>, vector<4x8xbf16>, vector<267x8xf32> -> vector<267x8xf32>
    %30 = arith.addf %24, %29 : vector<267x8xf32>
    %c0_29 = arith.constant 0 : index
    %c19 = arith.constant 19 : index
    %c0_30 = arith.constant 0 : index
    %31 = vector.load %arg2[%c0_29, %c19, %c0_30] : memref<1x324x4xbf16, #tpu.memory_space<vmem>>, vector<1x267x4xbf16>
    %32 = vector.shape_cast %31 : vector<1x267x4xbf16> to vector<267x4xbf16>
    %c5 = arith.constant 5 : index
    %c0_31 = arith.constant 0 : index
    %c0_32 = arith.constant 0 : index
    %33 = vector.load %arg3[%c5, %c0_31, %c0_32] : memref<16x4x8xbf16, #tpu.memory_space<vmem>>, vector<1x4x8xbf16>
    %34 = vector.shape_cast %33 : vector<1x4x8xbf16> to vector<4x8xbf16>
    %cst_33 = arith.constant dense<0.000000e+00> : vector<267x8xf32>
    %35 = tpu.matmul %32, %34, %cst_33 {dimension_numbers = #tpu.dot_dimension_numbers<[1], [0], [0], [1], [0, 0, 1, 1], [], []>} : vector<267x4xbf16>, vector<4x8xbf16>, vector<267x8xf32> -> vector<267x8xf32>
    %36 = arith.addf %30, %35 : vector<267x8xf32>
    %c0_34 = arith.constant 0 : index
    %c20 = arith.constant 20 : index
    %c0_35 = arith.constant 0 : index
    %37 = vector.load %arg2[%c0_34, %c20, %c0_35] : memref<1x324x4xbf16, #tpu.memory_space<vmem>>, vector<1x267x4xbf16>
    %38 = vector.shape_cast %37 : vector<1x267x4xbf16> to vector<267x4xbf16>
    %c6 = arith.constant 6 : index
    %c0_36 = arith.constant 0 : index
    %c0_37 = arith.constant 0 : index
    %39 = vector.load %arg3[%c6, %c0_36, %c0_37] : memref<16x4x8xbf16, #tpu.memory_space<vmem>>, vector<1x4x8xbf16>
    %40 = vector.shape_cast %39 : vector<1x4x8xbf16> to vector<4x8xbf16>
    %cst_38 = arith.constant dense<0.000000e+00> : vector<267x8xf32>
    %41 = tpu.matmul %38, %40, %cst_38 {dimension_numbers = #tpu.dot_dimension_numbers<[1], [0], [0], [1], [0, 0, 1, 1], [], []>} : vector<267x4xbf16>, vector<4x8xbf16>, vector<267x8xf32> -> vector<267x8xf32>
    %42 = arith.addf %36, %41 : vector<267x8xf32>
    %c0_39 = arith.constant 0 : index
    %c21 = arith.constant 21 : index
    %c0_40 = arith.constant 0 : index
    %43 = vector.load %arg2[%c0_39, %c21, %c0_40] : memref<1x324x4xbf16, #tpu.memory_space<vmem>>, vector<1x267x4xbf16>
    %44 = vector.shape_cast %43 : vector<1x267x4xbf16> to vector<267x4xbf16>
    %c7 = arith.constant 7 : index
    %c0_41 = arith.constant 0 : index
    %c0_42 = arith.constant 0 : index
    %45 = vector.load %arg3[%c7, %c0_41, %c0_42] : memref<16x4x8xbf16, #tpu.memory_space<vmem>>, vector<1x4x8xbf16>
    %46 = vector.shape_cast %45 : vector<1x4x8xbf16> to vector<4x8xbf16>
    %cst_43 = arith.constant dense<0.000000e+00> : vector<267x8xf32>
    %47 = tpu.matmul %44, %46, %cst_43 {dimension_numbers = #tpu.dot_dimension_numbers<[1], [0], [0], [1], [0, 0, 1, 1], [], []>} : vector<267x4xbf16>, vector<4x8xbf16>, vector<267x8xf32> -> vector<267x8xf32>
    %48 = arith.addf %42, %47 : vector<267x8xf32>
    %c0_44 = arith.constant 0 : index
    %c36 = arith.constant 36 : index
    %c0_45 = arith.constant 0 : index
    %49 = vector.load %arg2[%c0_44, %c36, %c0_45] : memref<1x324x4xbf16, #tpu.memory_space<vmem>>, vector<1x267x4xbf16>
    %50 = vector.shape_cast %49 : vector<1x267x4xbf16> to vector<267x4xbf16>
    %c8 = arith.constant 8 : index
    %c0_46 = arith.constant 0 : index
    %c0_47 = arith.constant 0 : index
    %51 = vector.load %arg3[%c8, %c0_46, %c0_47] : memref<16x4x8xbf16, #tpu.memory_space<vmem>>, vector<1x4x8xbf16>
    %52 = vector.shape_cast %51 : vector<1x4x8xbf16> to vector<4x8xbf16>
    %cst_48 = arith.constant dense<0.000000e+00> : vector<267x8xf32>
    %53 = tpu.matmul %50, %52, %cst_48 {dimension_numbers = #tpu.dot_dimension_numbers<[1], [0], [0], [1], [0, 0, 1, 1], [], []>} : vector<267x4xbf16>, vector<4x8xbf16>, vector<267x8xf32> -> vector<267x8xf32>
    %54 = arith.addf %48, %53 : vector<267x8xf32>
    %c0_49 = arith.constant 0 : index
    %c37 = arith.constant 37 : index
    %c0_50 = arith.constant 0 : index
    %55 = vector.load %arg2[%c0_49, %c37, %c0_50] : memref<1x324x4xbf16, #tpu.memory_space<vmem>>, vector<1x267x4xbf16>
    %56 = vector.shape_cast %55 : vector<1x267x4xbf16> to vector<267x4xbf16>
    %c9 = arith.constant 9 : index
    %c0_51 = arith.constant 0 : index
    %c0_52 = arith.constant 0 : index
    %57 = vector.load %arg3[%c9, %c0_51, %c0_52] : memref<16x4x8xbf16, #tpu.memory_space<vmem>>, vector<1x4x8xbf16>
    %58 = vector.shape_cast %57 : vector<1x4x8xbf16> to vector<4x8xbf16>
    %cst_53 = arith.constant dense<0.000000e+00> : vector<267x8xf32>
    %59 = tpu.matmul %56, %58, %cst_53 {dimension_numbers = #tpu.dot_dimension_numbers<[1], [0], [0], [1], [0, 0, 1, 1], [], []>} : vector<267x4xbf16>, vector<4x8xbf16>, vector<267x8xf32> -> vector<267x8xf32>
    %60 = arith.addf %54, %59 : vector<267x8xf32>
    %c0_54 = arith.constant 0 : index
    %c38 = arith.constant 38 : index
    %c0_55 = arith.constant 0 : index
    %61 = vector.load %arg2[%c0_54, %c38, %c0_55] : memref<1x324x4xbf16, #tpu.memory_space<vmem>>, vector<1x267x4xbf16>
    %62 = vector.shape_cast %61 : vector<1x267x4xbf16> to vector<267x4xbf16>
    %c10 = arith.constant 10 : index
    %c0_56 = arith.constant 0 : index
    %c0_57 = arith.constant 0 : index
    %63 = vector.load %arg3[%c10, %c0_56, %c0_57] : memref<16x4x8xbf16, #tpu.memory_space<vmem>>, vector<1x4x8xbf16>
    %64 = vector.shape_cast %63 : vector<1x4x8xbf16> to vector<4x8xbf16>
    %cst_58 = arith.constant dense<0.000000e+00> : vector<267x8xf32>
    %65 = tpu.matmul %62, %64, %cst_58 {dimension_numbers = #tpu.dot_dimension_numbers<[1], [0], [0], [1], [0, 0, 1, 1], [], []>} : vector<267x4xbf16>, vector<4x8xbf16>, vector<267x8xf32> -> vector<267x8xf32>
    %66 = arith.addf %60, %65 : vector<267x8xf32>
    %c0_59 = arith.constant 0 : index
    %c39 = arith.constant 39 : index
    %c0_60 = arith.constant 0 : index
    %67 = vector.load %arg2[%c0_59, %c39, %c0_60] : memref<1x324x4xbf16, #tpu.memory_space<vmem>>, vector<1x267x4xbf16>
    %68 = vector.shape_cast %67 : vector<1x267x4xbf16> to vector<267x4xbf16>
    %c11 = arith.constant 11 : index
    %c0_61 = arith.constant 0 : index
    %c0_62 = arith.constant 0 : index
    %69 = vector.load %arg3[%c11, %c0_61, %c0_62] : memref<16x4x8xbf16, #tpu.memory_space<vmem>>, vector<1x4x8xbf16>
    %70 = vector.shape_cast %69 : vector<1x4x8xbf16> to vector<4x8xbf16>
    %cst_63 = arith.constant dense<0.000000e+00> : vector<267x8xf32>
    %71 = tpu.matmul %68, %70, %cst_63 {dimension_numbers = #tpu.dot_dimension_numbers<[1], [0], [0], [1], [0, 0, 1, 1], [], []>} : vector<267x4xbf16>, vector<4x8xbf16>, vector<267x8xf32> -> vector<267x8xf32>
    %72 = arith.addf %66, %71 : vector<267x8xf32>
    %c0_64 = arith.constant 0 : index
    %c54 = arith.constant 54 : index
    %c0_65 = arith.constant 0 : index
    %73 = vector.load %arg2[%c0_64, %c54, %c0_65] : memref<1x324x4xbf16, #tpu.memory_space<vmem>>, vector<1x267x4xbf16>
    %74 = vector.shape_cast %73 : vector<1x267x4xbf16> to vector<267x4xbf16>
    %c12 = arith.constant 12 : index
    %c0_66 = arith.constant 0 : index
    %c0_67 = arith.constant 0 : index
    %75 = vector.load %arg3[%c12, %c0_66, %c0_67] : memref<16x4x8xbf16, #tpu.memory_space<vmem>>, vector<1x4x8xbf16>
    %76 = vector.shape_cast %75 : vector<1x4x8xbf16> to vector<4x8xbf16>
    %cst_68 = arith.constant dense<0.000000e+00> : vector<267x8xf32>
    %77 = tpu.matmul %74, %76, %cst_68 {dimension_numbers = #tpu.dot_dimension_numbers<[1], [0], [0], [1], [0, 0, 1, 1], [], []>} : vector<267x4xbf16>, vector<4x8xbf16>, vector<267x8xf32> -> vector<267x8xf32>
    %78 = arith.addf %72, %77 : vector<267x8xf32>
    %c0_69 = arith.constant 0 : index
    %c55 = arith.constant 55 : index
    %c0_70 = arith.constant 0 : index
    %79 = vector.load %arg2[%c0_69, %c55, %c0_70] : memref<1x324x4xbf16, #tpu.memory_space<vmem>>, vector<1x267x4xbf16>
    %80 = vector.shape_cast %79 : vector<1x267x4xbf16> to vector<267x4xbf16>
    %c13 = arith.constant 13 : index
    %c0_71 = arith.constant 0 : index
    %c0_72 = arith.constant 0 : index
    %81 = vector.load %arg3[%c13, %c0_71, %c0_72] : memref<16x4x8xbf16, #tpu.memory_space<vmem>>, vector<1x4x8xbf16>
    %82 = vector.shape_cast %81 : vector<1x4x8xbf16> to vector<4x8xbf16>
    %cst_73 = arith.constant dense<0.000000e+00> : vector<267x8xf32>
    %83 = tpu.matmul %80, %82, %cst_73 {dimension_numbers = #tpu.dot_dimension_numbers<[1], [0], [0], [1], [0, 0, 1, 1], [], []>} : vector<267x4xbf16>, vector<4x8xbf16>, vector<267x8xf32> -> vector<267x8xf32>
    %84 = arith.addf %78, %83 : vector<267x8xf32>
    %c0_74 = arith.constant 0 : index
    %c56 = arith.constant 56 : index
    %c0_75 = arith.constant 0 : index
    %85 = vector.load %arg2[%c0_74, %c56, %c0_75] : memref<1x324x4xbf16, #tpu.memory_space<vmem>>, vector<1x267x4xbf16>
    %86 = vector.shape_cast %85 : vector<1x267x4xbf16> to vector<267x4xbf16>
    %c14 = arith.constant 14 : index
    %c0_76 = arith.constant 0 : index
    %c0_77 = arith.constant 0 : index
    %87 = vector.load %arg3[%c14, %c0_76, %c0_77] : memref<16x4x8xbf16, #tpu.memory_space<vmem>>, vector<1x4x8xbf16>
    %88 = vector.shape_cast %87 : vector<1x4x8xbf16> to vector<4x8xbf16>
    %cst_78 = arith.constant dense<0.000000e+00> : vector<267x8xf32>
    %89 = tpu.matmul %86, %88, %cst_78 {dimension_numbers = #tpu.dot_dimension_numbers<[1], [0], [0], [1], [0, 0, 1, 1], [], []>} : vector<267x4xbf16>, vector<4x8xbf16>, vector<267x8xf32> -> vector<267x8xf32>
    %90 = arith.addf %84, %89 : vector<267x8xf32>
    %c0_79 = arith.constant 0 : index
    %c57 = arith.constant 57 : index
    %c0_80 = arith.constant 0 : index
    %91 = vector.load %arg2[%c0_79, %c57, %c0_80] : memref<1x324x4xbf16, #tpu.memory_space<vmem>>, vector<1x267x4xbf16>
    %92 = vector.shape_cast %91 : vector<1x267x4xbf16> to vector<267x4xbf16>
    %c15 = arith.constant 15 : index
    %c0_81 = arith.constant 0 : index
    %c0_82 = arith.constant 0 : index
    %93 = vector.load %arg3[%c15, %c0_81, %c0_82] : memref<16x4x8xbf16, #tpu.memory_space<vmem>>, vector<1x4x8xbf16>
    %94 = vector.shape_cast %93 : vector<1x4x8xbf16> to vector<4x8xbf16>
    %cst_83 = arith.constant dense<0.000000e+00> : vector<267x8xf32>
    %95 = tpu.matmul %92, %94, %cst_83 {dimension_numbers = #tpu.dot_dimension_numbers<[1], [0], [0], [1], [0, 0, 1, 1], [], []>} : vector<267x4xbf16>, vector<4x8xbf16>, vector<267x8xf32> -> vector<267x8xf32>
    %96 = arith.addf %90, %95 : vector<267x8xf32>
    %c0_84 = arith.constant 0 : index
    %c0_85 = arith.constant 0 : index
    %97 = vector.load %arg4[%c0_84, %c0_85] : memref<267x1xf32, #tpu.memory_space<vmem>>, vector<267x1xf32>
    %98 = vector.broadcast %97 : vector<267x1xf32> to vector<267x8xf32>
    %99 = arith.mulf %96, %98 : vector<267x8xf32>
    %cst_86 = arith.constant dense<0.000000e+00> : vector<8xf32>
    %100 = vector.multi_reduction <add>, %99, %cst_86 [0] : vector<267x8xf32> to vector<8xf32>
    %101 = vector.shape_cast %100 : vector<8xf32> to vector<1x8xf32>
    %102 = arith.mulf %96, %96 : vector<267x8xf32>
    %103 = vector.broadcast %97 : vector<267x1xf32> to vector<267x8xf32>
    %104 = arith.mulf %102, %103 : vector<267x8xf32>
    %cst_87 = arith.constant dense<0.000000e+00> : vector<8xf32>
    %105 = vector.multi_reduction <add>, %104, %cst_87 [0] : vector<267x8xf32> to vector<8xf32>
    %106 = vector.shape_cast %105 : vector<8xf32> to vector<1x8xf32>
    %cst_88 = arith.constant 0.00444444455 : f32
    %107 = vector.broadcast %cst_88 : f32 to vector<1x8xf32>
    %108 = arith.mulf %101, %107 : vector<1x8xf32>
    %cst_89 = arith.constant 0.00444444455 : f32
    %109 = vector.broadcast %cst_89 : f32 to vector<1x8xf32>
    %110 = arith.mulf %106, %109 : vector<1x8xf32>
    %111 = arith.mulf %108, %108 : vector<1x8xf32>
    %112 = arith.subf %110, %111 : vector<1x8xf32>
    %cst_90 = arith.constant 0.000000e+00 : f32
    %113 = vector.broadcast %cst_90 : f32 to vector<1x8xf32>
    %114 = arith.maximumf %112, %113 : vector<1x8xf32>
    %115 = vector.broadcast %108 : vector<1x8xf32> to vector<267x8xf32>
    %116 = arith.subf %96, %115 : vector<267x8xf32>
    %cst_91 = arith.constant 9.99999974E-6 : f32
    %117 = vector.broadcast %cst_91 : f32 to vector<1x8xf32>
    %118 = arith.addf %114, %117 : vector<1x8xf32>
    %119 = math.rsqrt %118 : vector<1x8xf32>
    %120 = vector.broadcast %119 : vector<1x8xf32> to vector<267x8xf32>
    %121 = arith.mulf %116, %120 : vector<267x8xf32>
    %cst_92 = arith.constant 0.000000e+00 : f32
    %122 = vector.broadcast %cst_92 : f32 to vector<267x8xf32>
    %123 = arith.cmpf ogt, %121, %122 : vector<267x8xf32>
    %cst_93 = arith.constant 2.000000e-01 : f32
    %124 = vector.broadcast %cst_93 : f32 to vector<267x8xf32>
    %125 = arith.mulf %124, %121 : vector<267x8xf32>
    %126 = arith.select %123, %121, %125 : vector<267x8xi1>, vector<267x8xf32>
    %c0_94 = arith.constant 0 : index
    %c0_95 = arith.constant 0 : index
    %127 = vector.load %arg5[%c0_94, %c0_95] : memref<64x267xbf16, #tpu.memory_space<vmem>>, vector<64x267xbf16>
    %128 = arith.truncf %126 : vector<267x8xf32> to vector<267x8xbf16>
    %cst_96 = arith.constant dense<0.000000e+00> : vector<64x8xf32>
    %129 = tpu.matmul %127, %128, %cst_96 {dimension_numbers = #tpu.dot_dimension_numbers<[1], [0], [0], [1], [0, 0, 1, 1], [], []>} : vector<64x267xbf16>, vector<267x8xbf16>, vector<64x8xf32> -> vector<64x8xf32>
    %c0_97 = arith.constant 0 : index
    %c0_98 = arith.constant 0 : index
    %c0_99 = arith.constant 0 : index
    %130 = vector.load %arg6[%c0_97, %c0_98, %c0_99] : memref<1x64x8xf32, #tpu.memory_space<vmem>>, vector<1x64x8xf32>
    %131 = vector.shape_cast %130 : vector<1x64x8xf32> to vector<64x8xf32>
    %132 = vector.shape_cast %129 : vector<64x8xf32> to vector<1x64x8xf32>
    tpu.vector_store %arg6[%c0_97, %c0_98, %c0_99], %132 {strides = array<i32>} : memref<1x64x8xf32, #tpu.memory_space<vmem>>, vector<1x64x8xf32>,
    return
  }
  func.func @transform_0(%arg0: i32, %arg1: i32) -> (i32, i32, i32) {
    %c0_i32 = arith.constant 0 : i32
    %c0_i32_0 = arith.constant 0 : i32
    %c0_i32_1 = arith.constant 0 : i32
    return %arg0, %c0_i32, %c0_i32_0 : i32, i32, i32
  }
  func.func @transform_1(%arg0: i32, %arg1: i32) -> (i32, i32, i32) {
    %c0_i32 = arith.constant 0 : i32
    %c0_i32_0 = arith.constant 0 : i32
    %c0_i32_1 = arith.constant 0 : i32
    return %c0_i32, %c0_i32_0, %arg1 : i32, i32, i32
  }
  func.func @transform_2(%arg0: i32, %arg1: i32) -> (i32, i32) {
    %c0_i32 = arith.constant 0 : i32
    %c0_i32_0 = arith.constant 0 : i32
    %c0_i32_1 = arith.constant 0 : i32
    return %c0_i32, %c0_i32_0 : i32, i32
  }
  func.func @transform_3(%arg0: i32, %arg1: i32) -> (i32, i32) {
    %c0_i32 = arith.constant 0 : i32
    %c0_i32_0 = arith.constant 0 : i32
    %c0_i32_1 = arith.constant 0 : i32
    return %c0_i32, %c0_i32_0 : i32, i32
  }
  func.func @transform_4(%arg0: i32, %arg1: i32) -> (i32, i32, i32) {
    %c0_i32 = arith.constant 0 : i32
    %c0_i32_0 = arith.constant 0 : i32
    return %arg0, %c0_i32, %arg1 : i32, i32, i32
  }
}

</mosaic_0001>

<llo_original>
// kernel: tpu_custom_call.1
$region0: #{tpu_custom_call.1}
  #allocation0 [shape = 'u32[]', space=smem, size = 0x4, offset = 0x4, fixed_abs, tag = 'smem constant byte address 0x4 - core index']
  #allocation1 [shape = 'u32[72,128]{1,0:T(1,128)}', space=vmem, size = 0x9000, scoped, tag = 'internal scratch']
  %s0 = inlined_call_operand.vmem [shape: bf16[2,324,4], index: 0, kind: input, shape index: {}]
  %s1 = inlined_call_operand.vmem [shape: bf16[16,4,8], index: 1, kind: input, shape index: {}]
  %s2 = inlined_call_operand.vmem [shape: f32[267,1], index: 2, kind: input, shape index: {}]
  %s3 = inlined_call_operand.vmem [shape: bf16[64,267], index: 3, kind: input, shape index: {}]
  %s4 = inlined_call_operand.vmem [shape: f32[2,64,8], index: 4, kind: output, shape index: {}]
  %s5 = sld [smem:[#allocation0]]
  $region49: #{tpu_custom_call.1} parent=0
    _
  %s7 = ssub.s32 1, %s5
  %s8 = scalar_select 0, %s7, %s5
  loop: start=0, step=1, limit=4
  $region2: #{tpu_custom_call.1} parent=0 // loop_pre_header
    _
  $region3: #{tpu_custom_call.1} parent=0 // loop_header
    %s10 = sphi 0, %s14
    %p11 = scmp.ge.s32.totalorder %s10, 4
    %s17 = sphi 0, %s29
    %s18 = sphi 0, %s25
    %s19 = sphi 0, %s17
    %s20 = sphi 0, %s18
    %s21 = sphi 0, %s19
    %s22 = sphi 0, %s20
    %s32 = sphi 0, %s34
    %s35 = sphi 0, %s32
    %s36 = sphi 0, %s35
    %s52 = sphi 0, %s36
    %s58 = sphi 0, %s60
    %s61 = sphi 0, %s58
    %s62 = sphi 0, %s61
    %s78 = sphi 0, %s62
    %s82 = sphi 0, %s82
    %s84 = sphi 0, %s82
    %s85 = sphi 0, %s84
    %s99 = sphi 0, %s85
    %s103 = sphi 0, %s103
    %s105 = sphi 0, %s103
    %s106 = sphi 0, %s105
    %s120 = sphi 0, %s106
    %s128 = sphi 0, %s130
    %s131 = sphi 0, %s128
    %s132 = sphi 0, %s131
    %s148 = sphi 0, %s132
  $region4: #{tpu_custom_call.1} parent=0 // loop_header_branch
    %13 = sbr.rel (%p11) target = $region8
  $region5: #{tpu_custom_call.1} parent=0 // loop_body
    %s15 = ssub.s32 %s10, 1
    %s16 = ssub.s32 %s10, 2
    %s23 = sadd.s32 1, %s18
    %p24 = scmp.ge.s32.totalorder %s23, 1
    %s25 = scalar_select %p24, 0, %s23
    %s26 = sadd.s32 1, %s17
    %s27 = scalar_select %p24, %s26, %s17
    %p28 = scmp.ge.s32.totalorder %s27, 2
    %s29 = scalar_select %p28, 0, %s27
    %s30 = ssub.s32 %s17, %s29
    %p31 = scmp.eq.s32.totalorder %s30, 0
    %s33 = sadd.s32 %s32, 1
    %s34 = scalar_select %p31, %s32, %s33
    %p37 = pneg %p31
    %p38 = scmp.eq.s32.totalorder %s10, 1
    %p39 = por %p37, %p38
    %p40 = scmp.ne.s32.totalorder %s32, %s35
    %p41 = scmp.eq.s32.totalorder %s10, 0
    %p42 = por %p40, %p41
    %p43 = scmp.ne.s32.totalorder %s32, %s35
    %p44 = scmp.eq.s32.totalorder %s15, 1
    %p45 = por %p43, %p44
    %p46 = scmp.ne.s32.totalorder %s35, %s36
    %p47 = scmp.eq.s32.totalorder %s15, 0
    %p48 = por %p46, %p47
    %p49 = scmp.ne.s32.totalorder %s35, %s36
    %p50 = scmp.eq.s32.totalorder %s16, 1
    %p51 = por %p49, %p50
    %p53 = scmp.ne.s32.totalorder %s36, %s52
    %p54 = scmp.eq.s32.totalorder %s16, 0
    %p55 = por %p53, %p54
    %s56 = ssub.s32 %s18, %s25
    %p57 = scmp.eq.s32.totalorder %s56, 0
    %s59 = sadd.s32 %s58, 1
    %s60 = scalar_select %p57, %s58, %s59
    %p63 = pneg %p57
    %p64 = scmp.eq.s32.totalorder %s10, 1
    %p65 = por %p63, %p64
    %p66 = scmp.ne.s32.totalorder %s58, %s61
    %p67 = scmp.eq.s32.totalorder %s10, 0
    %p68 = por %p66, %p67
    %p69 = scmp.ne.s32.totalorder %s58, %s61
    %p70 = scmp.eq.s32.totalorder %s15, 1
    %p71 = por %p69, %p70
    %p72 = scmp.ne.s32.totalorder %s61, %s62
    %p73 = scmp.eq.s32.totalorder %s15, 0
    %p74 = por %p72, %p73
    %p75 = scmp.ne.s32.totalorder %s61, %s62
    %p76 = scmp.eq.s32.totalorder %s16, 1
    %p77 = por %p75, %p76
    %p79 = scmp.ne.s32.totalorder %s62, %s78
    %p80 = scmp.eq.s32.totalorder %s16, 0
    %p81 = por %p79, %p80
    %s83 = sadd.s32 %s82, 1
    %p86 = scmp.eq.s32.totalorder %s10, 1
    %p87 = scmp.ne.s32.totalorder %s82, %s84
    %p88 = scmp.eq.s32.totalorder %s10, 0
    %p89 = por %p87, %p88
    %p90 = scmp.ne.s32.totalorder %s82, %s84
    %p91 = scmp.eq.s32.totalorder %s15, 1
    %p92 = por %p90, %p91
    %p93 = scmp.ne.s32.totalorder %s84, %s85
    %p94 = scmp.eq.s32.totalorder %s15, 0
    %p95 = por %p93, %p94
    %p96 = scmp.ne.s32.totalorder %s84, %s85
    %p97 = scmp.eq.s32.totalorder %s16, 1
    %p98 = por %p96, %p97
    %p100 = scmp.ne.s32.totalorder %s85, %s99
    %p101 = scmp.eq.s32.totalorder %s16, 0
    %p102 = por %p100, %p101
    %s104 = sadd.s32 %s103, 1
    %p107 = scmp.eq.s32.totalorder %s10, 1
    %p108 = scmp.ne.s32.totalorder %s103, %s105
    %p109 = scmp.eq.s32.totalorder %s10, 0
    %p110 = por %p108, %p109
    %p111 = scmp.ne.s32.totalorder %s103, %s105
    %p112 = scmp.eq.s32.totalorder %s15, 1
    %p113 = por %p111, %p112
    %p114 = scmp.ne.s32.totalorder %s105, %s106
    %p115 = scmp.eq.s32.totalorder %s15, 0
    %p116 = por %p114, %p115
    %p117 = scmp.ne.s32.totalorder %s105, %s106
    %p118 = scmp.eq.s32.totalorder %s16, 1
    %p119 = por %p117, %p118
    %p121 = scmp.ne.s32.totalorder %s106, %s120
    %p122 = scmp.eq.s32.totalorder %s16, 0
    %p123 = por %p121, %p122
    %s124 = ssub.s32 %s17, %s29
    %s125 = ssub.s32 %s18, %s25
    %s126 = sor.u32 %s124, %s125
    %p127 = scmp.eq.s32.totalorder %s126, 0
    %s129 = sadd.s32 %s128, 1
    %s130 = scalar_select %p127, %s128, %s129
    %p133 = pneg %p127
    %p134 = scmp.eq.s32.totalorder %s10, 1
    %p135 = por %p133, %p134
    %p136 = scmp.ne.s32.totalorder %s128, %s131
    %p137 = scmp.eq.s32.totalorder %s10, 0
    %p138 = por %p136, %p137
    %p139 = scmp.ne.s32.totalorder %s128, %s131
    %p140 = scmp.eq.s32.totalorder %s15, 1
    %p141 = por %p139, %p140
    %p142 = scmp.ne.s32.totalorder %s131, %s132
    %p143 = scmp.eq.s32.totalorder %s15, 0
    %p144 = por %p142, %p143
    %p145 = scmp.ne.s32.totalorder %s131, %s132
    %p146 = scmp.eq.s32.totalorder %s16, 1
    %p147 = por %p145, %p146
    %p149 = scmp.ne.s32.totalorder %s132, %s148
    %p150 = scmp.eq.s32.totalorder %s16, 0
    %p151 = por %p149, %p150
    %p152 = scmp.le.s32.totalorder 1, %s10
    %p153 = scmp.lt.s32.totalorder %s10, 3
    %p154 = pnand %p152, %p153
    %p155 = pneg %p154
    // Predicated region
    $region9: #{tpu_custom_call.1} parent=5 // pred_check
      _
    $region10: #{tpu_custom_call.1} parent=5 // pred_check_branch
      %157 = sbr.rel (%p154) target = $region12
    $region11: #{tpu_custom_call.1} parent=5 // pred_region
      %s158 = ssub.s32 %s10, 1
      // Predicated region
      $region13: #{tpu_custom_call.1} parent=11 // pred_check
        %p159 = pneg %p74
      $region14: #{tpu_custom_call.1} parent=11 // pred_check_branch
        %161 = sbr.rel (%p159) target = $region16
      $region15: #{tpu_custom_call.1} parent=11 // pred_region
        %p162 = scmp.lt.s32.totalorder %s20, 0
        %s163 = scalar_select %p162, %s20, 0
        %s164 = smul.addr %s163, 2
        %s165 = scalar_lea.vmem %s1, %s164
      $region16: #{tpu_custom_call.1} parent=11 // pred_fallthru
        _
      // Predicated region
      $region17: #{tpu_custom_call.1} parent=11 // pred_check
        %p166 = pneg %p95
      $region18: #{tpu_custom_call.1} parent=11 // pred_check_branch
        %168 = sbr.rel (%p166) target = $region20
      $region19: #{tpu_custom_call.1} parent=11 // pred_region
        _
      $region20: #{tpu_custom_call.1} parent=11 // pred_fallthru
        _
      // Predicated region
      $region21: #{tpu_custom_call.1} parent=11 // pred_check
        %p169 = pneg %p116
      $region22: #{tpu_custom_call.1} parent=11 // pred_check_branch
        %171 = sbr.rel (%p169) target = $region24
      $region23: #{tpu_custom_call.1} parent=11 // pred_region
        _
      $region24: #{tpu_custom_call.1} parent=11 // pred_fallthru
        _
    $region12: #{tpu_custom_call.1} parent=5 // pred_fallthru
      _
    %p172 = scmp.lt.s32.totalorder %s10, 2
    // Predicated region
    $region25: #{tpu_custom_call.1} parent=5 // pred_check
      %p173 = pneg %p172
    $region26: #{tpu_custom_call.1} parent=5 // pred_check_branch
      %175 = sbr.rel (%p173) target = $region28
    $region27: #{tpu_custom_call.1} parent=5 // pred_region
      // Predicated region
      $region29: #{tpu_custom_call.1} parent=27 // pred_check
        %p176 = pneg %p42
      $region30: #{tpu_custom_call.1} parent=27 // pred_check_branch
        %178 = sbr.rel (%p176) target = $region32
      $region31: #{tpu_custom_call.1} parent=27 // pred_region
        %p179 = scmp.lt.s32.totalorder %s17, 1
        %s180 = scalar_select %p179, %s17, 1
        %s181 = smul.addr %s180, 41
        %s182 = smul.addr %s181, 4
        %s183 = scalar_lea.vmem %s0, %s182
      $region32: #{tpu_custom_call.1} parent=27 // pred_fallthru
        _
    $region28: #{tpu_custom_call.1} parent=5 // pred_fallthru
      _
    %p184 = scmp.le.s32.totalorder 1, %s10
    %p185 = scmp.lt.s32.totalorder %s10, 3
    %p186 = pnand %p184, %p185
    %p187 = pneg %p186
    // Predicated region
    $region33: #{tpu_custom_call.1} parent=5 // pred_check
      _
    $region34: #{tpu_custom_call.1} parent=5 // pred_check_branch
      %189 = sbr.rel (%p186) target = $region36
    $region35: #{tpu_custom_call.1} parent=5 // pred_region
      %s190 = ssub.s32 %s10, 1
      %p191 = scmp.lt.s32.totalorder %s19, 1
      %s192 = scalar_select %p191, %s19, 1
      %s193 = smul.addr %s192, 41
      %s194 = smul.addr %s193, 4
      %s195 = scalar_lea.vmem %s0, %s194
      %p196 = pneg %p48
      %p197 = pneg %p45
      %p198 = scmp.lt.s32.totalorder %s20, 0
      %s199 = scalar_select %p198, %s20, 0
      %s200 = smul.addr %s199, 2
      %s201 = scalar_lea.vmem %s1, %s200
      %p202 = pneg %p74
      %p203 = pneg %p71
      %p204 = pneg %p95
      %p205 = pneg %p92
      %p206 = pneg %p116
      %p207 = pneg %p113
      %p208 = pneg %p144
      %p209 = pneg %p141
      %p210 = scmp.lt.s32.totalorder %s19, 1
      %s211 = scalar_select %p210, %s19, 1
      %p212 = scmp.lt.s32.totalorder %s20, 0
      %s213 = scalar_select %p212, %s20, 0
      %s214 = smul.addr %s211, 8
      %s215 = sadd.s32 %s213, %s214
      %s216 = smul.addr %s215, 8
      %s217 = scalar_lea.vmem %s4, %s216
      %p218 = scmp.lt.s32.totalorder %s19, 1
      %s219 = scalar_select %p218, %s19, 1
      %s220 = smul.addr %s219, 41
      %s221 = smul.addr %s220, 4
      %s222 = scalar_lea.vmem %s0, %s221
      %p223 = scmp.lt.s32.totalorder %s20, 0
      %s224 = scalar_select %p223, %s20, 0
      %s225 = smul.addr %s224, 2
      %s226 = scalar_lea.vmem %s1, %s225
      %p227 = scmp.lt.s32.totalorder %s19, 1
      %s228 = scalar_select %p227, %s19, 1
      %p229 = scmp.lt.s32.totalorder %s20, 0
      %s230 = scalar_select %p229, %s20, 0
      %s231 = smul.addr %s228, 8
      %s232 = sadd.s32 %s230, %s231
      %s233 = smul.addr %s232, 8
      %s234 = scalar_lea.vmem %s4, %s233
      %v236 = vld [vmem:[%s222] sm:$0xf]
      %v237 = vld [vmem:[%s222 + $0x4] sm:$0xf]
      %v238 = vld [vmem:[%s222 + $0x8] sm:$0xf]
      %v239 = vld [vmem:[%s222 + $0xc] sm:$0xf]
      %v240 = vld [vmem:[%s222 + $0x10] sm:$0xf]
      %v241 = vld [vmem:[%s222 + $0x14] sm:$0xf]
      %v242 = vld [vmem:[%s222 + $0x18] sm:$0xf]
      %v243 = vld [vmem:[%s222 + $0x1c] sm:$0xf]
      %v244 = vld [vmem:[%s222 + $0x20] sm:$0xf]
      %v245 = vld [vmem:[%s222 + $0x24] sm:$0xf]
      %v246 = vld [vmem:[%s222 + $0x28] sm:$0xf]
      %v247 = vld [vmem:[%s222 + $0x2c] sm:$0xf]
      %v248 = vld [vmem:[%s222 + $0x30] sm:$0xf]
      %v249 = vld [vmem:[%s222 + $0x34] sm:$0xf]
      %v250 = vld [vmem:[%s222 + $0x38] sm:$0xf]
      %v251 = vld [vmem:[%s222 + $0x3c] sm:$0xf]
      %v252 = vld [vmem:[%s222 + $0x40] sm:$0xf]
      %v253 = vld [vmem:[%s222 + $0x44] sm:$0xf]
      %v254 = vld [vmem:[%s222 + $0x48] sm:$0xf]
      %v255 = vld [vmem:[%s222 + $0x4c] sm:$0xf]
      %v256 = vld [vmem:[%s222 + $0x50] sm:$0xf]
      %v257 = vld [vmem:[%s222 + $0x54] sm:$0xf]
      %v258 = vld [vmem:[%s222 + $0x58] sm:$0xf]
      %v259 = vld [vmem:[%s222 + $0x5c] sm:$0xf]
      %v260 = vld [vmem:[%s222 + $0x60] sm:$0xf]
      %v261 = vld [vmem:[%s222 + $0x64] sm:$0xf]
      %v262 = vld [vmem:[%s222 + $0x68] sm:$0xf]
      %v263 = vld [vmem:[%s222 + $0x6c] sm:$0xf]
      %v264 = vld [vmem:[%s222 + $0x70] sm:$0xf]
      %v265 = vld [vmem:[%s222 + $0x74] sm:$0xf]
      %v266 = vld [vmem:[%s222 + $0x78] sm:$0xf]
      %v267 = vld [vmem:[%s222 + $0x7c] sm:$0xf]
      %v268 = vld [vmem:[%s222 + $0x80] sm:$0xf]
      %v269 = vld [vmem:[%s222 + $0x84] sm:$0x3]
      %v270 = vld [vmem:[%s226] sm:$0x3]
      %s271 = scalar_lea.vmem %s226, 2
      %v272 = vld [vmem:[%s271] sm:$0x3]
      %v307 = vunpack.c.l.b16 %v236
      %v308 = vunpack.c.l.b16 %v237
      %v309 = vunpack.c.l.b16 %v238
      %v310 = vunpack.c.l.b16 %v239
      %v311 = vunpack.c.l.b16 %v240
      %v312 = vunpack.c.l.b16 %v241
      %v313 = vunpack.c.l.b16 %v242
      %v314 = vunpack.c.l.b16 %v243
      %v315 = vunpack.c.l.b16 %v244
      %v316 = vunpack.c.l.b16 %v245
      %v317 = vunpack.c.l.b16 %v246
      %v318 = vunpack.c.l.b16 %v247
      %v319 = vunpack.c.l.b16 %v248
      %v320 = vunpack.c.l.b16 %v249
      %v321 = vunpack.c.l.b16 %v250
      %v322 = vunpack.c.l.b16 %v251
      %v323 = vunpack.c.l.b16 %v252
      %v324 = vunpack.c.l.b16 %v253
      %v325 = vunpack.c.l.b16 %v254
      %v326 = vunpack.c.l.b16 %v255
      %v327 = vunpack.c.l.b16 %v256
      %v328 = vunpack.c.l.b16 %v257
      %v329 = vunpack.c.l.b16 %v258
      %v330 = vunpack.c.l.b16 %v259
      %v331 = vunpack.c.l.b16 %v260
      %v332 = vunpack.c.l.b16 %v261
      %v333 = vunpack.c.l.b16 %v262
      %v334 = vunpack.c.l.b16 %v263
      %v335 = vunpack.c.l.b16 %v264
      %v336 = vunpack.c.l.b16 %v265
      %v337 = vunpack.c.l.b16 %v266
      %v338 = vunpack.c.l.b16 %v267
      %v339 = vunpack.c.l.b16 %v268
      %v340 = vunpack.c.l.b16 %v269
      %v341 = vpack.c.b16 %v308, %v307
      %v342 = vpack.c.b16 %v310, %v309
      %v343 = vpack.c.b16 %v312, %v311
      %v344 = vpack.c.b16 %v314, %v313
      %v345 = vpack.c.b16 %v316, %v315
      %v346 = vpack.c.b16 %v318, %v317
      %v347 = vpack.c.b16 %v320, %v319
      %v348 = vpack.c.b16 %v322, %v321
      %v349 = vpack.c.b16 %v324, %v323
      %v350 = vpack.c.b16 %v326, %v325
      %v351 = vpack.c.b16 %v328, %v327
      %v352 = vpack.c.b16 %v330, %v329
      %v353 = vpack.c.b16 %v332, %v331
      %v354 = vpack.c.b16 %v334, %v333
      %v355 = vpack.c.b16 %v336, %v335
      %v356 = vpack.c.b16 %v338, %v337
      %v357 = vpack.c.b16 %v340, %v339
      %vm358 = vsmask.f32 7424
      %v360 = vshrl.u32 %v341, 16
      %v362 = vshll.u32 %v341, 16
      %v364 = vrot.slane %v362, 1
      %v365 = vor.u32 %v360, %v364
      %v367 = vshll.u32 %v342, 16
      %v369 = vrot.slane %v367, 1
      %v370 = vsel %vm358, %v365, %v369
      %v371 = vshrl.u32 %v342, 16
      %v373 = vor.u32 %v371, %v369
      %v375 = vshll.u32 %v343, 16
      %v377 = vrot.slane %v375, 1
      %v378 = vsel %vm358, %v373, %v377
      %v379 = vshrl.u32 %v343, 16
      %v381 = vor.u32 %v379, %v377
      %v383 = vshll.u32 %v344, 16
      %v385 = vrot.slane %v383, 1
      %v386 = vsel %vm358, %v381, %v385
      %v387 = vshrl.u32 %v344, 16
      %v389 = vor.u32 %v387, %v385
      %v391 = vshll.u32 %v345, 16
      %v393 = vrot.slane %v391, 1
      %v394 = vsel %vm358, %v389, %v393
      %v395 = vshrl.u32 %v345, 16
      %v397 = vor.u32 %v395, %v393
      %v399 = vshll.u32 %v346, 16
      %v401 = vrot.slane %v399, 1
      %v402 = vsel %vm358, %v397, %v401
      %v403 = vshrl.u32 %v346, 16
      %v405 = vor.u32 %v403, %v401
      %v407 = vshll.u32 %v347, 16
      %v409 = vrot.slane %v407, 1
      %v410 = vsel %vm358, %v405, %v409
      %v411 = vshrl.u32 %v347, 16
      %v413 = vor.u32 %v411, %v409
      %v415 = vshll.u32 %v348, 16
      %v417 = vrot.slane %v415, 1
      %v418 = vsel %vm358, %v413, %v417
      %v419 = vshrl.u32 %v348, 16
      %v421 = vor.u32 %v419, %v417
      %v423 = vshll.u32 %v349, 16
      %v425 = vrot.slane %v423, 1
      %v426 = vsel %vm358, %v421, %v425
      %v427 = vshrl.u32 %v349, 16
      %v429 = vor.u32 %v427, %v425
      %v431 = vshll.u32 %v350, 16
      %v433 = vrot.slane %v431, 1
      %v434 = vsel %vm358, %v429, %v433
      %v435 = vshrl.u32 %v350, 16
      %v437 = vor.u32 %v435, %v433
      %v439 = vshll.u32 %v351, 16
      %v441 = vrot.slane %v439, 1
      %v442 = vsel %vm358, %v437, %v441
      %v443 = vshrl.u32 %v351, 16
      %v445 = vor.u32 %v443, %v441
      %v447 = vshll.u32 %v352, 16
      %v449 = vrot.slane %v447, 1
      %v450 = vsel %vm358, %v445, %v449
      %v451 = vshrl.u32 %v352, 16
      %v453 = vor.u32 %v451, %v449
      %v455 = vshll.u32 %v353, 16
      %v457 = vrot.slane %v455, 1
      %v458 = vsel %vm358, %v453, %v457
      %v459 = vshrl.u32 %v353, 16
      %v461 = vor.u32 %v459, %v457
      %v463 = vshll.u32 %v354, 16
      %v465 = vrot.slane %v463, 1
      %v466 = vsel %vm358, %v461, %v465
      %v467 = vshrl.u32 %v354, 16
      %v469 = vor.u32 %v467, %v465
      %v471 = vshll.u32 %v355, 16
      %v473 = vrot.slane %v471, 1
      %v474 = vsel %vm358, %v469, %v473
      %v475 = vshrl.u32 %v355, 16
      %v477 = vor.u32 %v475, %v473
      %v479 = vshll.u32 %v356, 16
      %v481 = vrot.slane %v479, 1
      %v482 = vsel %vm358, %v477, %v481
      %v483 = vshrl.u32 %v356, 16
      %v485 = vor.u32 %v483, %v481
      %v487 = vshll.u32 %v357, 16
      %v489 = vrot.slane %v487, 1
      %v490 = vsel %vm358, %v485, %v489
      %v491 = vshrl.u32 %v357, 16
      %v493 = vor.u32 %v491, %v489
      %vm494 = vcmask 31744
      %v496 = vsel %vm494, %v370, 0
      %v499 = vsel %vm494, %v378, 0
      %v502 = vsel %vm494, %v386, 0
      %v505 = vsel %vm494, %v394, 0
      %v508 = vsel %vm494, %v402, 0
      %v511 = vsel %vm494, %v410, 0
      %v514 = vsel %vm494, %v418, 0
      %v517 = vsel %vm494, %v426, 0
      %v520 = vsel %vm494, %v434, 0
      %v523 = vsel %vm494, %v442, 0
      %v526 = vsel %vm494, %v450, 0
      %v529 = vsel %vm494, %v458, 0
      %v532 = vsel %vm494, %v466, 0
      %v535 = vsel %vm494, %v474, 0
      %v538 = vsel %vm494, %v482, 0
      %v541 = vsel %vm494, %v490, 0
      %v544 = vsel %vm494, %v493, 0
      %vm546 = vcmask 1041408
      %v548 = vsel %vm546, %v272, 0
      %550 = vmatpush.bf16.msra.mxu0 0
      %551 = vmatpush.bf16.msra.mxu0 0
      %552 = vmatpush.bf16.msra.mxu0 0
      %553 = vmatpush.bf16.msra.mxu0 0
      %554 = vmatpush.bf16.msra.mxu0 0
      %555 = vmatpush.bf16.msra.mxu0 0
      %556 = vmatpush.bf16.msra.mxu0 0
      %557 = vmatpush.bf16.msra.mxu0 %v548
      %558 = vmatmul.bf16.gmra.mxu0 %v496
      %v559 = vpop.f32.mrf.mxu0
      %v560 = vadd.f32 0.0, %v559
      %v561 = vpop.f32.mrf.mxu0
      %v562 = vadd.f32 0.0, %v561
      %563 = vmatmul.bf16.gmra.mxu0 %v499
      %v564 = vpop.f32.mrf.mxu0
      %v565 = vadd.f32 0.0, %v564
      %v566 = vpop.f32.mrf.mxu0
      %v567 = vadd.f32 0.0, %v566
      %568 = vmatmul.bf16.gmra.mxu0 %v502
      %v569 = vpop.f32.mrf.mxu0
      %v570 = vadd.f32 0.0, %v569
      %v571 = vpop.f32.mrf.mxu0
      %v572 = vadd.f32 0.0, %v571
      %573 = vmatmul.bf16.gmra.mxu0 %v505
      %v574 = vpop.f32.mrf.mxu0
      %v575 = vadd.f32 0.0, %v574
      %v576 = vpop.f32.mrf.mxu0
      %v577 = vadd.f32 0.0, %v576
      %578 = vmatmul.bf16.gmra.mxu0 %v508
      %v579 = vpop.f32.mrf.mxu0
      %v580 = vadd.f32 0.0, %v579
      %v581 = vpop.f32.mrf.mxu0
      %v582 = vadd.f32 0.0, %v581
      %583 = vmatmul.bf16.gmra.mxu0 %v511
      %v584 = vpop.f32.mrf.mxu0
      %v585 = vadd.f32 0.0, %v584
      %v586 = vpop.f32.mrf.mxu0
      %v587 = vadd.f32 0.0, %v586
      %588 = vmatmul.bf16.gmra.mxu0 %v514
      %v589 = vpop.f32.mrf.mxu0
      %v590 = vadd.f32 0.0, %v589
      %v591 = vpop.f32.mrf.mxu0
      %v592 = vadd.f32 0.0, %v591
      %593 = vmatmul.bf16.gmra.mxu0 %v517
      %v594 = vpop.f32.mrf.mxu0
      %v595 = vadd.f32 0.0, %v594
      %v596 = vpop.f32.mrf.mxu0
      %v597 = vadd.f32 0.0, %v596
      %598 = vmatmul.bf16.gmra.mxu0 %v520
      %v599 = vpop.f32.mrf.mxu0
      %v600 = vadd.f32 0.0, %v599
      %v601 = vpop.f32.mrf.mxu0
      %v602 = vadd.f32 0.0, %v601
      %603 = vmatmul.bf16.gmra.mxu0 %v523
      %v604 = vpop.f32.mrf.mxu0
      %v605 = vadd.f32 0.0, %v604
      %v606 = vpop.f32.mrf.mxu0
      %v607 = vadd.f32 0.0, %v606
      %608 = vmatmul.bf16.gmra.mxu0 %v526
      %v609 = vpop.f32.mrf.mxu0
      %v610 = vadd.f32 0.0, %v609
      %v611 = vpop.f32.mrf.mxu0
      %v612 = vadd.f32 0.0, %v611
      %613 = vmatmul.bf16.gmra.mxu0 %v529
      %v614 = vpop.f32.mrf.mxu0
      %v615 = vadd.f32 0.0, %v614
      %v616 = vpop.f32.mrf.mxu0
      %v617 = vadd.f32 0.0, %v616
      %618 = vmatmul.bf16.gmra.mxu0 %v532
      %v619 = vpop.f32.mrf.mxu0
      %v620 = vadd.f32 0.0, %v619
      %v621 = vpop.f32.mrf.mxu0
      %v622 = vadd.f32 0.0, %v621
      %623 = vmatmul.bf16.gmra.mxu0 %v535
      %v624 = vpop.f32.mrf.mxu0
      %v625 = vadd.f32 0.0, %v624
      %v626 = vpop.f32.mrf.mxu0
      %v627 = vadd.f32 0.0, %v626
      %628 = vmatmul.bf16.gmra.mxu0 %v538
      %v629 = vpop.f32.mrf.mxu0
      %v630 = vadd.f32 0.0, %v629
      %v631 = vpop.f32.mrf.mxu0
      %v632 = vadd.f32 0.0, %v631
      %633 = vmatmul.bf16.gmra.mxu0 %v541
      %v634 = vpop.f32.mrf.mxu0
      %v635 = vadd.f32 0.0, %v634
      %v636 = vpop.f32.mrf.mxu0
      %v637 = vadd.f32 0.0, %v636
      %638 = vmatmul.bf16.gmra.mxu0 %v544
      %v639 = vpop.f32.mrf.mxu0
      %v640 = vadd.f32 0.0, %v639
      %v641 = vpop.f32.mrf.mxu0
      %v642 = vadd.f32 0.0, %v641
      %643 = vdwg.mxu0
      %v644 = vsel %vm494, %v341, 0
      %v646 = vsel %vm494, %v342, 0
      %v648 = vsel %vm494, %v343, 0
      %v650 = vsel %vm494, %v344, 0
      %v652 = vsel %vm494, %v345, 0
      %v654 = vsel %vm494, %v346, 0
      %v656 = vsel %vm494, %v347, 0
      %v658 = vsel %vm494, %v348, 0
      %v660 = vsel %vm494, %v349, 0
      %v662 = vsel %vm494, %v350, 0
      %v664 = vsel %vm494, %v351, 0
      %v666 = vsel %vm494, %v352, 0
      %v668 = vsel %vm494, %v353, 0
      %v670 = vsel %vm494, %v354, 0
      %v672 = vsel %vm494, %v355, 0
      %v674 = vsel %vm494, %v356, 0
      %v676 = vsel %vm494, %v357, 0
      %v679 = vsel %vm546, %v270, 0
      %681 = vmatpush.bf16.msra.mxu0 0
      %682 = vmatpush.bf16.msra.mxu0 0
      %683 = vmatpush.bf16.msra.mxu0 0
      %684 = vmatpush.bf16.msra.mxu0 0
      %685 = vmatpush.bf16.msra.mxu0 0
      %686 = vmatpush.bf16.msra.mxu0 0
      %687 = vmatpush.bf16.msra.mxu0 0
      %688 = vmatpush.bf16.msra.mxu0 %v679
      %689 = vmatmul.bf16.gmra.mxu0 %v644
      %v690 = vpop.f32.mrf.mxu0
      %v691 = vadd.f32 %v560, %v690
      %v692 = vpop.f32.mrf.mxu0
      %v693 = vadd.f32 %v562, %v692
      %694 = vmatmul.bf16.gmra.mxu0 %v646
      %v695 = vpop.f32.mrf.mxu0
      %v696 = vadd.f32 %v565, %v695
      %v697 = vpop.f32.mrf.mxu0
      %v698 = vadd.f32 %v567, %v697
      %699 = vmatmul.bf16.gmra.mxu0 %v648
      %v700 = vpop.f32.mrf.mxu0
      %v701 = vadd.f32 %v570, %v700
      %v702 = vpop.f32.mrf.mxu0
      %v703 = vadd.f32 %v572, %v702
      %704 = vmatmul.bf16.gmra.mxu0 %v650
      %v705 = vpop.f32.mrf.mxu0
      %v706 = vadd.f32 %v575, %v705
      %v707 = vpop.f32.mrf.mxu0
      %v708 = vadd.f32 %v577, %v707
      %709 = vmatmul.bf16.gmra.mxu0 %v652
      %v710 = vpop.f32.mrf.mxu0
      %v711 = vadd.f32 %v580, %v710
      %v712 = vpop.f32.mrf.mxu0
      %v713 = vadd.f32 %v582, %v712
      %714 = vmatmul.bf16.gmra.mxu0 %v654
      %v715 = vpop.f32.mrf.mxu0
      %v716 = vadd.f32 %v585, %v715
      %v717 = vpop.f32.mrf.mxu0
      %v718 = vadd.f32 %v587, %v717
      %719 = vmatmul.bf16.gmra.mxu0 %v656
      %v720 = vpop.f32.mrf.mxu0
      %v721 = vadd.f32 %v590, %v720
      %v722 = vpop.f32.mrf.mxu0
      %v723 = vadd.f32 %v592, %v722
      %724 = vmatmul.bf16.gmra.mxu0 %v658
      %v725 = vpop.f32.mrf.mxu0
      %v726 = vadd.f32 %v595, %v725
      %v727 = vpop.f32.mrf.mxu0
      %v728 = vadd.f32 %v597, %v727
      %729 = vmatmul.bf16.gmra.mxu0 %v660
      %v730 = vpop.f32.mrf.mxu0
      %v731 = vadd.f32 %v600, %v730
      %v732 = vpop.f32.mrf.mxu0
      %v733 = vadd.f32 %v602, %v732
      %734 = vmatmul.bf16.gmra.mxu0 %v662
      %v735 = vpop.f32.mrf.mxu0
      %v736 = vadd.f32 %v605, %v735
      %v737 = vpop.f32.mrf.mxu0
      %v738 = vadd.f32 %v607, %v737
      %739 = vmatmul.bf16.gmra.mxu0 %v664
      %v740 = vpop.f32.mrf.mxu0
      %v741 = vadd.f32 %v610, %v740
      %v742 = vpop.f32.mrf.mxu0
      %v743 = vadd.f32 %v612, %v742
      %744 = vmatmul.bf16.gmra.mxu0 %v666
      %v745 = vpop.f32.mrf.mxu0
      %v746 = vadd.f32 %v615, %v745
      %v747 = vpop.f32.mrf.mxu0
      %v748 = vadd.f32 %v617, %v747
      %749 = vmatmul.bf16.gmra.mxu0 %v668
      %v750 = vpop.f32.mrf.mxu0
      %v751 = vadd.f32 %v620, %v750
      %v752 = vpop.f32.mrf.mxu0
      %v753 = vadd.f32 %v622, %v752
      %754 = vmatmul.bf16.gmra.mxu0 %v670
      %v755 = vpop.f32.mrf.mxu0
      %v756 = vadd.f32 %v625, %v755
      %v757 = vpop.f32.mrf.mxu0
      %v758 = vadd.f32 %v627, %v757
      %759 = vmatmul.bf16.gmra.mxu0 %v672
      %v760 = vpop.f32.mrf.mxu0
      %v761 = vadd.f32 %v630, %v760
      %v762 = vpop.f32.mrf.mxu0
      %v763 = vadd.f32 %v632, %v762
      %764 = vmatmul.bf16.gmra.mxu0 %v674
      %v765 = vpop.f32.mrf.mxu0
      %v766 = vadd.f32 %v635, %v765
      %v767 = vpop.f32.mrf.mxu0
      %v768 = vadd.f32 %v637, %v767
      %769 = vmatmul.bf16.gmra.mxu0 %v676
      %v770 = vpop.f32.mrf.mxu0
      %v771 = vadd.f32 %v640, %v770
      %v772 = vpop.f32.mrf.mxu0
      %v773 = vadd.f32 %v642, %v772
      %774 = vdwg.mxu0
      %v775 = vld [vmem:[%s222] sm:$0xe]
      %v776 = vld [vmem:[%s222 + $0x84] sm:$0x7]
      %s777 = scalar_lea.vmem %s226, 4
      %v778 = vld [vmem:[%s777] sm:$0x3]
      %v781 = vunpack.c.l.b16 %v775
      %v782 = vunpack.c.l.b16 %v776
      %v783 = vpack.c.b16 %v308, %v781
      %v784 = vpack.c.b16 %v782, %v339
      %vm785 = vcmask 1046528
      %v786 = vrot.slane %v783, 1
      %v787 = vrot.slane %v342, 1
      %v788 = vsel %vm785, %v786, %v787
      %v789 = vrot.slane %v343, 1
      %v790 = vsel %vm785, %v787, %v789
      %v791 = vrot.slane %v344, 1
      %v792 = vsel %vm785, %v789, %v791
      %v793 = vrot.slane %v345, 1
      %v794 = vsel %vm785, %v791, %v793
      %v795 = vrot.slane %v346, 1
      %v796 = vsel %vm785, %v793, %v795
      %v797 = vrot.slane %v347, 1
      %v798 = vsel %vm785, %v795, %v797
      %v799 = vrot.slane %v348, 1
      %v800 = vsel %vm785, %v797, %v799
      %v801 = vrot.slane %v349, 1
      %v802 = vsel %vm785, %v799, %v801
      %v803 = vrot.slane %v350, 1
      %v804 = vsel %vm785, %v801, %v803
      %v805 = vrot.slane %v351, 1
      %v806 = vsel %vm785, %v803, %v805
      %v807 = vrot.slane %v352, 1
      %v808 = vsel %vm785, %v805, %v807
      %v809 = vrot.slane %v353, 1
      %v810 = vsel %vm785, %v807, %v809
      %v811 = vrot.slane %v354, 1
      %v812 = vsel %vm785, %v809, %v811
      %v813 = vrot.slane %v355, 1
      %v814 = vsel %vm785, %v811, %v813
      %v815 = vrot.slane %v356, 1
      %v816 = vsel %vm785, %v813, %v815
      %v817 = vrot.slane %v784, 1
      %v818 = vsel %vm785, %v815, %v817
      %v820 = vsel %vm494, %v788, 0
      %v823 = vsel %vm494, %v790, 0
      %v826 = vsel %vm494, %v792, 0
      %v829 = vsel %vm494, %v794, 0
      %v832 = vsel %vm494, %v796, 0
      %v835 = vsel %vm494, %v798, 0
      %v838 = vsel %vm494, %v800, 0
      %v841 = vsel %vm494, %v802, 0
      %v844 = vsel %vm494, %v804, 0
      %v847 = vsel %vm494, %v806, 0
      %v850 = vsel %vm494, %v808, 0
      %v853 = vsel %vm494, %v810, 0
      %v856 = vsel %vm494, %v812, 0
      %v859 = vsel %vm494, %v814, 0
      %v862 = vsel %vm494, %v816, 0
      %v865 = vsel %vm494, %v818, 0
      %v868 = vsel %vm494, %v817, 0
      %v871 = vsel %vm546, %v778, 0
      %873 = vmatpush.bf16.msra.mxu0 0
      %874 = vmatpush.bf16.msra.mxu0 0
      %875 = vmatpush.bf16.msra.mxu0 0
      %876 = vmatpush.bf16.msra.mxu0 0
      %877 = vmatpush.bf16.msra.mxu0 0
      %878 = vmatpush.bf16.msra.mxu0 0
      %879 = vmatpush.bf16.msra.mxu0 0
      %880 = vmatpush.bf16.msra.mxu0 %v871
      %881 = vmatmul.bf16.gmra.mxu0 %v820
      %v882 = vpop.f32.mrf.mxu0
      %v883 = vadd.f32 0.0, %v882
      %v884 = vpop.f32.mrf.mxu0
      %v885 = vadd.f32 0.0, %v884
      %886 = vmatmul.bf16.gmra.mxu0 %v823
      %v887 = vpop.f32.mrf.mxu0
      %v888 = vadd.f32 0.0, %v887
      %v889 = vpop.f32.mrf.mxu0
      %v890 = vadd.f32 0.0, %v889
      %891 = vmatmul.bf16.gmra.mxu0 %v826
      %v892 = vpop.f32.mrf.mxu0
      %v893 = vadd.f32 0.0, %v892
      %v894 = vpop.f32.mrf.mxu0
      %v895 = vadd.f32 0.0, %v894
      %896 = vmatmul.bf16.gmra.mxu0 %v829
      %v897 = vpop.f32.mrf.mxu0
      %v898 = vadd.f32 0.0, %v897
      %v899 = vpop.f32.mrf.mxu0
      %v900 = vadd.f32 0.0, %v899
      %901 = vmatmul.bf16.gmra.mxu0 %v832
      %v902 = vpop.f32.mrf.mxu0
      %v903 = vadd.f32 0.0, %v902
      %v904 = vpop.f32.mrf.mxu0
      %v905 = vadd.f32 0.0, %v904
      %906 = vmatmul.bf16.gmra.mxu0 %v835
      %v907 = vpop.f32.mrf.mxu0
      %v908 = vadd.f32 0.0, %v907
      %v909 = vpop.f32.mrf.mxu0
      %v910 = vadd.f32 0.0, %v909
      %911 = vmatmul.bf16.gmra.mxu0 %v838
      %v912 = vpop.f32.mrf.mxu0
      %v913 = vadd.f32 0.0, %v912
      %v914 = vpop.f32.mrf.mxu0
      %v915 = vadd.f32 0.0, %v914
      %916 = vmatmul.bf16.gmra.mxu0 %v841
      %v917 = vpop.f32.mrf.mxu0
      %v918 = vadd.f32 0.0, %v917
      %v919 = vpop.f32.mrf.mxu0
      %v920 = vadd.f32 0.0, %v919
      %921 = vmatmul.bf16.gmra.mxu0 %v844
      %v922 = vpop.f32.mrf.mxu0
      %v923 = vadd.f32 0.0, %v922
      %v924 = vpop.f32.mrf.mxu0
      %v925 = vadd.f32 0.0, %v924
      %926 = vmatmul.bf16.gmra.mxu0 %v847
      %v927 = vpop.f32.mrf.mxu0
      %v928 = vadd.f32 0.0, %v927
      %v929 = vpop.f32.mrf.mxu0
      %v930 = vadd.f32 0.0, %v929
      %931 = vmatmul.bf16.gmra.mxu0 %v850
      %v932 = vpop.f32.mrf.mxu0
      %v933 = vadd.f32 0.0, %v932
      %v934 = vpop.f32.mrf.mxu0
      %v935 = vadd.f32 0.0, %v934
      %936 = vmatmul.bf16.gmra.mxu0 %v853
      %v937 = vpop.f32.mrf.mxu0
      %v938 = vadd.f32 0.0, %v937
      %v939 = vpop.f32.mrf.mxu0
      %v940 = vadd.f32 0.0, %v939
      %941 = vmatmul.bf16.gmra.mxu0 %v856
      %v942 = vpop.f32.mrf.mxu0
      %v943 = vadd.f32 0.0, %v942
      %v944 = vpop.f32.mrf.mxu0
      %v945 = vadd.f32 0.0, %v944
      %946 = vmatmul.bf16.gmra.mxu0 %v859
      %v947 = vpop.f32.mrf.mxu0
      %v948 = vadd.f32 0.0, %v947
      %v949 = vpop.f32.mrf.mxu0
      %v950 = vadd.f32 0.0, %v949
      %951 = vmatmul.bf16.gmra.mxu0 %v862
      %v952 = vpop.f32.mrf.mxu0
      %v953 = vadd.f32 0.0, %v952
      %v954 = vpop.f32.mrf.mxu0
      %v955 = vadd.f32 0.0, %v954
      %956 = vmatmul.bf16.gmra.mxu0 %v865
      %v957 = vpop.f32.mrf.mxu0
      %v958 = vadd.f32 0.0, %v957
      %v959 = vpop.f32.mrf.mxu0
      %v960 = vadd.f32 0.0, %v959
      %961 = vmatmul.bf16.gmra.mxu0 %v868
      %v962 = vpop.f32.mrf.mxu0
      %v963 = vadd.f32 0.0, %v962
      %v964 = vpop.f32.mrf.mxu0
      %v965 = vadd.f32 0.0, %v964
      %966 = vdwg.mxu0
      %v967 = vadd.f32 %v691, %v883
      %v968 = vadd.f32 %v693, %v885
      %v969 = vadd.f32 %v696, %v888
      %v970 = vadd.f32 %v698, %v890
      %v971 = vadd.f32 %v701, %v893
      %v972 = vadd.f32 %v703, %v895
      %v973 = vadd.f32 %v706, %v898
      %v974 = vadd.f32 %v708, %v900
      %v975 = vadd.f32 %v711, %v903
      %v976 = vadd.f32 %v713, %v905
      %v977 = vadd.f32 %v716, %v908
      %v978 = vadd.f32 %v718, %v910
      %v979 = vadd.f32 %v721, %v913
      %v980 = vadd.f32 %v723, %v915
      %v981 = vadd.f32 %v726, %v918
      %v982 = vadd.f32 %v728, %v920
      %v983 = vadd.f32 %v731, %v923
      %v984 = vadd.f32 %v733, %v925
      %v985 = vadd.f32 %v736, %v928
      %v986 = vadd.f32 %v738, %v930
      %v987 = vadd.f32 %v741, %v933
      %v988 = vadd.f32 %v743, %v935
      %v989 = vadd.f32 %v746, %v938
      %v990 = vadd.f32 %v748, %v940
      %v991 = vadd.f32 %v751, %v943
      %v992 = vadd.f32 %v753, %v945
      %v993 = vadd.f32 %v756, %v948
      %v994 = vadd.f32 %v758, %v950
      %v995 = vadd.f32 %v761, %v953
      %v996 = vadd.f32 %v763, %v955
      %v997 = vadd.f32 %v766, %v958
      %v998 = vadd.f32 %v768, %v960
      %v999 = vadd.f32 %v771, %v963
      %v1000 = vadd.f32 %v773, %v965
      %s1001 = scalar_lea.vmem %s226, 6
      %v1002 = vld [vmem:[%s1001] sm:$0x3]
      %vm1003 = vsmask.f32 6400
      %v1005 = vshrl.u32 %v783, 16
      %v1007 = vrot.slane %v1005, 1
      %v1008 = vshll.u32 %v783, 16
      %v1010 = vrot.slane %v1008, 2
      %v1011 = vor.u32 %v1007, %v1010
      %v1012 = vrot.slane %v371, 1
      %v1013 = vrot.slane %v367, 2
      %v1014 = vor.u32 %v1012, %v1013
      %v1015 = vsel %vm1003, %v1011, %v1014
      %v1016 = vrot.slane %v379, 1
      %v1017 = vrot.slane %v375, 2
      %v1018 = vor.u32 %v1016, %v1017
      %v1019 = vsel %vm1003, %v1014, %v1018
      %v1020 = vrot.slane %v387, 1
      %v1021 = vrot.slane %v383, 2
      %v1022 = vor.u32 %v1020, %v1021
      %v1023 = vsel %vm1003, %v1018, %v1022
      %v1024 = vrot.slane %v395, 1
      %v1025 = vrot.slane %v391, 2
      %v1026 = vor.u32 %v1024, %v1025
      %v1027 = vsel %vm1003, %v1022, %v1026
      %v1028 = vrot.slane %v403, 1
      %v1029 = vrot.slane %v399, 2
      %v1030 = vor.u32 %v1028, %v1029
      %v1031 = vsel %vm1003, %v1026, %v1030
      %v1032 = vrot.slane %v411, 1
      %v1033 = vrot.slane %v407, 2
      %v1034 = vor.u32 %v1032, %v1033
      %v1035 = vsel %vm1003, %v1030, %v1034
      %v1036 = vrot.slane %v419, 1
      %v1037 = vrot.slane %v415, 2
      %v1038 = vor.u32 %v1036, %v1037
      %v1039 = vsel %vm1003, %v1034, %v1038
      %v1040 = vrot.slane %v427, 1
      %v1041 = vrot.slane %v423, 2
      %v1042 = vor.u32 %v1040, %v1041
      %v1043 = vsel %vm1003, %v1038, %v1042
      %v1044 = vrot.slane %v435, 1
      %v1045 = vrot.slane %v431, 2
      %v1046 = vor.u32 %v1044, %v1045
      %v1047 = vsel %vm1003, %v1042, %v1046
      %v1048 = vrot.slane %v443, 1
      %v1049 = vrot.slane %v439, 2
      %v1050 = vor.u32 %v1048, %v1049
      %v1051 = vsel %vm1003, %v1046, %v1050
      %v1052 = vrot.slane %v451, 1
      %v1053 = vrot.slane %v447, 2
      %v1054 = vor.u32 %v1052, %v1053
      %v1055 = vsel %vm1003, %v1050, %v1054
      %v1056 = vrot.slane %v459, 1
      %v1057 = vrot.slane %v455, 2
      %v1058 = vor.u32 %v1056, %v1057
      %v1059 = vsel %vm1003, %v1054, %v1058
      %v1060 = vrot.slane %v467, 1
      %v1061 = vrot.slane %v463, 2
      %v1062 = vor.u32 %v1060, %v1061
      %v1063 = vsel %vm1003, %v1058, %v1062
      %v1064 = vrot.slane %v475, 1
      %v1065 = vrot.slane %v471, 2
      %v1066 = vor.u32 %v1064, %v1065
      %v1067 = vsel %vm1003, %v1062, %v1066
      %v1068 = vrot.slane %v483, 1
      %v1069 = vrot.slane %v479, 2
      %v1070 = vor.u32 %v1068, %v1069
      %v1071 = vsel %vm1003, %v1066, %v1070
      %v1073 = vshrl.u32 %v784, 16
      %v1075 = vrot.slane %v1073, 1
      %v1076 = vshll.u32 %v784, 16
      %v1078 = vrot.slane %v1076, 2
      %v1079 = vor.u32 %v1075, %v1078
      %v1080 = vsel %vm1003, %v1070, %v1079
      %v1082 = vsel %vm494, %v1015, 0
      %v1085 = vsel %vm494, %v1019, 0
      %v1088 = vsel %vm494, %v1023, 0
      %v1091 = vsel %vm494, %v1027, 0
      %v1094 = vsel %vm494, %v1031, 0
      %v1097 = vsel %vm494, %v1035, 0
      %v1100 = vsel %vm494, %v1039, 0
      %v1103 = vsel %vm494, %v1043, 0
      %v1106 = vsel %vm494, %v1047, 0
      %v1109 = vsel %vm494, %v1051, 0
      %v1112 = vsel %vm494, %v1055, 0
      %v1115 = vsel %vm494, %v1059, 0
      %v1118 = vsel %vm494, %v1063, 0
      %v1121 = vsel %vm494, %v1067, 0
      %v1124 = vsel %vm494, %v1071, 0
      %v1127 = vsel %vm494, %v1080, 0
      %v1130 = vsel %vm494, %v1079, 0
      %v1133 = vsel %vm546, %v1002, 0
      %1135 = vmatpush.bf16.msra.mxu0 0
      %1136 = vmatpush.bf16.msra.mxu0 0
      %1137 = vmatpush.bf16.msra.mxu0 0
      %1138 = vmatpush.bf16.msra.mxu0 0
      %1139 = vmatpush.bf16.msra.mxu0 0
      %1140 = vmatpush.bf16.msra.mxu0 0
      %1141 = vmatpush.bf16.msra.mxu0 0
      %1142 = vmatpush.bf16.msra.mxu0 %v1133
      %1143 = vmatmul.bf16.gmra.mxu0 %v1082
      %v1144 = vpop.f32.mrf.mxu0
      %v1145 = vadd.f32 0.0, %v1144
      %v1146 = vpop.f32.mrf.mxu0
      %v1147 = vadd.f32 0.0, %v1146
      %1148 = vmatmul.bf16.gmra.mxu0 %v1085
      %v1149 = vpop.f32.mrf.mxu0
      %v1150 = vadd.f32 0.0, %v1149
      %v1151 = vpop.f32.mrf.mxu0
      %v1152 = vadd.f32 0.0, %v1151
      %1153 = vmatmul.bf16.gmra.mxu0 %v1088
      %v1154 = vpop.f32.mrf.mxu0
      %v1155 = vadd.f32 0.0, %v1154
      %v1156 = vpop.f32.mrf.mxu0
      %v1157 = vadd.f32 0.0, %v1156
      %1158 = vmatmul.bf16.gmra.mxu0 %v1091
      %v1159 = vpop.f32.mrf.mxu0
      %v1160 = vadd.f32 0.0, %v1159
      %v1161 = vpop.f32.mrf.mxu0
      %v1162 = vadd.f32 0.0, %v1161
      %1163 = vmatmul.bf16.gmra.mxu0 %v1094
      %v1164 = vpop.f32.mrf.mxu0
      %v1165 = vadd.f32 0.0, %v1164
      %v1166 = vpop.f32.mrf.mxu0
      %v1167 = vadd.f32 0.0, %v1166
      %1168 = vmatmul.bf16.gmra.mxu0 %v1097
      %v1169 = vpop.f32.mrf.mxu0
      %v1170 = vadd.f32 0.0, %v1169
      %v1171 = vpop.f32.mrf.mxu0
      %v1172 = vadd.f32 0.0, %v1171
      %1173 = vmatmul.bf16.gmra.mxu0 %v1100
      %v1174 = vpop.f32.mrf.mxu0
      %v1175 = vadd.f32 0.0, %v1174
      %v1176 = vpop.f32.mrf.mxu0
      %v1177 = vadd.f32 0.0, %v1176
      %1178 = vmatmul.bf16.gmra.mxu0 %v1103
      %v1179 = vpop.f32.mrf.mxu0
      %v1180 = vadd.f32 0.0, %v1179
      %v1181 = vpop.f32.mrf.mxu0
      %v1182 = vadd.f32 0.0, %v1181
      %1183 = vmatmul.bf16.gmra.mxu0 %v1106
      %v1184 = vpop.f32.mrf.mxu0
      %v1185 = vadd.f32 0.0, %v1184
      %v1186 = vpop.f32.mrf.mxu0
      %v1187 = vadd.f32 0.0, %v1186
      %1188 = vmatmul.bf16.gmra.mxu0 %v1109
      %v1189 = vpop.f32.mrf.mxu0
      %v1190 = vadd.f32 0.0, %v1189
      %v1191 = vpop.f32.mrf.mxu0
      %v1192 = vadd.f32 0.0, %v1191
      %1193 = vmatmul.bf16.gmra.mxu0 %v1112
      %v1194 = vpop.f32.mrf.mxu0
      %v1195 = vadd.f32 0.0, %v1194
      %v1196 = vpop.f32.mrf.mxu0
      %v1197 = vadd.f32 0.0, %v1196
      %1198 = vmatmul.bf16.gmra.mxu0 %v1115
      %v1199 = vpop.f32.mrf.mxu0
      %v1200 = vadd.f32 0.0, %v1199
      %v1201 = vpop.f32.mrf.mxu0
      %v1202 = vadd.f32 0.0, %v1201
      %1203 = vmatmul.bf16.gmra.mxu0 %v1118
      %v1204 = vpop.f32.mrf.mxu0
      %v1205 = vadd.f32 0.0, %v1204
      %v1206 = vpop.f32.mrf.mxu0
      %v1207 = vadd.f32 0.0, %v1206
      %1208 = vmatmul.bf16.gmra.mxu0 %v1121
      %v1209 = vpop.f32.mrf.mxu0
      %v1210 = vadd.f32 0.0, %v1209
      %v1211 = vpop.f32.mrf.mxu0
      %v1212 = vadd.f32 0.0, %v1211
      %1213 = vmatmul.bf16.gmra.mxu0 %v1124
      %v1214 = vpop.f32.mrf.mxu0
      %v1215 = vadd.f32 0.0, %v1214
      %v1216 = vpop.f32.mrf.mxu0
      %v1217 = vadd.f32 0.0, %v1216
      %1218 = vmatmul.bf16.gmra.mxu0 %v1127
      %v1219 = vpop.f32.mrf.mxu0
      %v1220 = vadd.f32 0.0, %v1219
      %v1221 = vpop.f32.mrf.mxu0
      %v1222 = vadd.f32 0.0, %v1221
      %1223 = vmatmul.bf16.gmra.mxu0 %v1130
      %v1224 = vpop.f32.mrf.mxu0
      %v1225 = vadd.f32 0.0, %v1224
      %v1226 = vpop.f32.mrf.mxu0
      %v1227 = vadd.f32 0.0, %v1226
      %1228 = vdwg.mxu0
      %v1229 = vadd.f32 %v967, %v1145
      %v1230 = vadd.f32 %v968, %v1147
      %v1231 = vadd.f32 %v969, %v1150
      %v1232 = vadd.f32 %v970, %v1152
      %v1233 = vadd.f32 %v971, %v1155
      %v1234 = vadd.f32 %v972, %v1157
      %v1235 = vadd.f32 %v973, %v1160
      %v1236 = vadd.f32 %v974, %v1162
      %v1237 = vadd.f32 %v975, %v1165
      %v1238 = vadd.f32 %v976, %v1167
      %v1239 = vadd.f32 %v977, %v1170
      %v1240 = vadd.f32 %v978, %v1172
      %v1241 = vadd.f32 %v979, %v1175
      %v1242 = vadd.f32 %v980, %v1177
      %v1243 = vadd.f32 %v981, %v1180
      %v1244 = vadd.f32 %v982, %v1182
      %v1245 = vadd.f32 %v983, %v1185
      %v1246 = vadd.f32 %v984, %v1187
      %v1247 = vadd.f32 %v985, %v1190
      %v1248 = vadd.f32 %v986, %v1192
      %v1249 = vadd.f32 %v987, %v1195
      %v1250 = vadd.f32 %v988, %v1197
      %v1251 = vadd.f32 %v989, %v1200
      %v1252 = vadd.f32 %v990, %v1202
      %v1253 = vadd.f32 %v991, %v1205
      %v1254 = vadd.f32 %v992, %v1207
      %v1255 = vadd.f32 %v993, %v1210
      %v1256 = vadd.f32 %v994, %v1212
      %v1257 = vadd.f32 %v995, %v1215
      %v1258 = vadd.f32 %v996, %v1217
      %v1259 = vadd.f32 %v997, %v1220
      %v1260 = vadd.f32 %v998, %v1222
      %v1261 = vadd.f32 %v999, %v1225
      %v1262 = vadd.f32 %v1000, %v1227
      %v1263 = vld [vmem:[%s222 + $0x8] sm:$0xe]
      %v1264 = vld [vmem:[%s222 + $0xc] sm:$0xf]
      %v1265 = vld [vmem:[%s222 + $0x10] sm:$0xf]
      %v1266 = vld [vmem:[%s222 + $0x14] sm:$0xf]
      %v1267 = vld [vmem:[%s222 + $0x18] sm:$0xf]
      %v1268 = vld [vmem:[%s222 + $0x1c] sm:$0xf]
      %v1269 = vld [vmem:[%s222 + $0x20] sm:$0xf]
      %v1270 = vld [vmem:[%s222 + $0x24] sm:$0xf]
      %v1271 = vld [vmem:[%s222 + $0x28] sm:$0xf]
      %v1272 = vld [vmem:[%s222 + $0x2c] sm:$0xf]
      %v1273 = vld [vmem:[%s222 + $0x30] sm:$0xf]
      %v1274 = vld [vmem:[%s222 + $0x34] sm:$0xf]
      %v1275 = vld [vmem:[%s222 + $0x38] sm:$0xf]
      %v1276 = vld [vmem:[%s222 + $0x3c] sm:$0xf]
      %v1277 = vld [vmem:[%s222 + $0x40] sm:$0xf]
      %v1278 = vld [vmem:[%s222 + $0x44] sm:$0xf]
      %v1279 = vld [vmem:[%s222 + $0x48] sm:$0xf]
      %v1280 = vld [vmem:[%s222 + $0x4c] sm:$0xf]
      %v1281 = vld [vmem:[%s222 + $0x50] sm:$0xf]
      %v1282 = vld [vmem:[%s222 + $0x54] sm:$0xf]
      %v1283 = vld [vmem:[%s222 + $0x58] sm:$0xf]
      %v1284 = vld [vmem:[%s222 + $0x5c] sm:$0xf]
      %v1285 = vld [vmem:[%s222 + $0x60] sm:$0xf]
      %v1286 = vld [vmem:[%s222 + $0x64] sm:$0xf]
      %v1287 = vld [vmem:[%s222 + $0x68] sm:$0xf]
      %v1288 = vld [vmem:[%s222 + $0x6c] sm:$0xf]
      %v1289 = vld [vmem:[%s222 + $0x70] sm:$0xf]
      %v1290 = vld [vmem:[%s222 + $0x74] sm:$0xf]
      %v1291 = vld [vmem:[%s222 + $0x78] sm:$0xf]
      %v1292 = vld [vmem:[%s222 + $0x7c] sm:$0xf]
      %v1293 = vld [vmem:[%s222 + $0x80] sm:$0xf]
      %v1294 = vld [vmem:[%s222 + $0x84] sm:$0xf]
      %v1295 = vld [vmem:[%s222 + $0x88] sm:$0xf]
      %v1296 = vld [vmem:[%s222 + $0x8c] sm:$0x7]
      %s1297 = scalar_lea.vmem %s226, 8
      %v1298 = vld [vmem:[%s1297] sm:$0x3]
      %v1333 = vunpack.c.l.b16 %v1263
      %v1334 = vunpack.c.l.b16 %v1264
      %v1335 = vunpack.c.l.b16 %v1265
      %v1336 = vunpack.c.l.b16 %v1266
      %v1337 = vunpack.c.l.b16 %v1267
      %v1338 = vunpack.c.l.b16 %v1268
      %v1339 = vunpack.c.l.b16 %v1269
      %v1340 = vunpack.c.l.b16 %v1270
      %v1341 = vunpack.c.l.b16 %v1271
      %v1342 = vunpack.c.l.b16 %v1272
      %v1343 = vunpack.c.l.b16 %v1273
      %v1344 = vunpack.c.l.b16 %v1274
      %v1345 = vunpack.c.l.b16 %v1275
      %v1346 = vunpack.c.l.b16 %v1276
      %v1347 = vunpack.c.l.b16 %v1277
      %v1348 = vunpack.c.l.b16 %v1278
      %v1349 = vunpack.c.l.b16 %v1279
      %v1350 = vunpack.c.l.b16 %v1280
      %v1351 = vunpack.c.l.b16 %v1281
      %v1352 = vunpack.c.l.b16 %v1282
      %v1353 = vunpack.c.l.b16 %v1283
      %v1354 = vunpack.c.l.b16 %v1284
      %v1355 = vunpack.c.l.b16 %v1285
      %v1356 = vunpack.c.l.b16 %v1286
      %v1357 = vunpack.c.l.b16 %v1287
      %v1358 = vunpack.c.l.b16 %v1288
      %v1359 = vunpack.c.l.b16 %v1289
      %v1360 = vunpack.c.l.b16 %v1290
      %v1361 = vunpack.c.l.b16 %v1291
      %v1362 = vunpack.c.l.b16 %v1292
      %v1363 = vunpack.c.l.b16 %v1293
      %v1364 = vunpack.c.l.b16 %v1294
      %v1365 = vunpack.c.l.b16 %v1295
      %v1366 = vunpack.c.l.b16 %v1296
      %v1367 = vpack.c.b16 %v1334, %v1333
      %v1368 = vpack.c.b16 %v1336, %v1335
      %v1369 = vpack.c.b16 %v1338, %v1337
      %v1370 = vpack.c.b16 %v1340, %v1339
      %v1371 = vpack.c.b16 %v1342, %v1341
      %v1372 = vpack.c.b16 %v1344, %v1343
      %v1373 = vpack.c.b16 %v1346, %v1345
      %v1374 = vpack.c.b16 %v1348, %v1347
      %v1375 = vpack.c.b16 %v1350, %v1349
      %v1376 = vpack.c.b16 %v1352, %v1351
      %v1377 = vpack.c.b16 %v1354, %v1353
      %v1378 = vpack.c.b16 %v1356, %v1355
      %v1379 = vpack.c.b16 %v1358, %v1357
      %v1380 = vpack.c.b16 %v1360, %v1359
      %v1381 = vpack.c.b16 %v1362, %v1361
      %v1382 = vpack.c.b16 %v1364, %v1363
      %v1383 = vpack.c.b16 %v1366, %v1365
      %v1384 = vrot.slane %v1367, 1
      %v1385 = vrot.slane %v1368, 1
      %v1386 = vsel %vm785, %v1384, %v1385
      %v1387 = vrot.slane %v1369, 1
      %v1388 = vsel %vm785, %v1385, %v1387
      %v1389 = vrot.slane %v1370, 1
      %v1390 = vsel %vm785, %v1387, %v1389
      %v1391 = vrot.slane %v1371, 1
      %v1392 = vsel %vm785, %v1389, %v1391
      %v1393 = vrot.slane %v1372, 1
      %v1394 = vsel %vm785, %v1391, %v1393
      %v1395 = vrot.slane %v1373, 1
      %v1396 = vsel %vm785, %v1393, %v1395
      %v1397 = vrot.slane %v1374, 1
      %v1398 = vsel %vm785, %v1395, %v1397
      %v1399 = vrot.slane %v1375, 1
      %v1400 = vsel %vm785, %v1397, %v1399
      %v1401 = vrot.slane %v1376, 1
      %v1402 = vsel %vm785, %v1399, %v1401
      %v1403 = vrot.slane %v1377, 1
      %v1404 = vsel %vm785, %v1401, %v1403
      %v1405 = vrot.slane %v1378, 1
      %v1406 = vsel %vm785, %v1403, %v1405
      %v1407 = vrot.slane %v1379, 1
      %v1408 = vsel %vm785, %v1405, %v1407
      %v1409 = vrot.slane %v1380, 1
      %v1410 = vsel %vm785, %v1407, %v1409
      %v1411 = vrot.slane %v1381, 1
      %v1412 = vsel %vm785, %v1409, %v1411
      %v1413 = vrot.slane %v1382, 1
      %v1414 = vsel %vm785, %v1411, %v1413
      %v1415 = vrot.slane %v1383, 1
      %v1416 = vsel %vm785, %v1413, %v1415
      %v1418 = vsel %vm494, %v1386, 0
      %v1421 = vsel %vm494, %v1388, 0
      %v1424 = vsel %vm494, %v1390, 0
      %v1427 = vsel %vm494, %v1392, 0
      %v1430 = vsel %vm494, %v1394, 0
      %v1433 = vsel %vm494, %v1396, 0
      %v1436 = vsel %vm494, %v1398, 0
      %v1439 = vsel %vm494, %v1400, 0
      %v1442 = vsel %vm494, %v1402, 0
      %v1445 = vsel %vm494, %v1404, 0
      %v1448 = vsel %vm494, %v1406, 0
      %v1451 = vsel %vm494, %v1408, 0
      %v1454 = vsel %vm494, %v1410, 0
      %v1457 = vsel %vm494, %v1412, 0
      %v1460 = vsel %vm494, %v1414, 0
      %v1463 = vsel %vm494, %v1416, 0
      %v1466 = vsel %vm494, %v1415, 0
      %v1469 = vsel %vm546, %v1298, 0
      %1471 = vmatpush.bf16.msra.mxu0 0
      %1472 = vmatpush.bf16.msra.mxu0 0
      %1473 = vmatpush.bf16.msra.mxu0 0
      %1474 = vmatpush.bf16.msra.mxu0 0
      %1475 = vmatpush.bf16.msra.mxu0 0
      %1476 = vmatpush.bf16.msra.mxu0 0
      %1477 = vmatpush.bf16.msra.mxu0 0
      %1478 = vmatpush.bf16.msra.mxu0 %v1469
      %1479 = vmatmul.bf16.gmra.mxu0 %v1418
      %v1480 = vpop.f32.mrf.mxu0
      %v1481 = vadd.f32 0.0, %v1480
      %v1482 = vpop.f32.mrf.mxu0
      %v1483 = vadd.f32 0.0, %v1482
      %1484 = vmatmul.bf16.gmra.mxu0 %v1421
      %v1485 = vpop.f32.mrf.mxu0
      %v1486 = vadd.f32 0.0, %v1485
      %v1487 = vpop.f32.mrf.mxu0
      %v1488 = vadd.f32 0.0, %v1487
      %1489 = vmatmul.bf16.gmra.mxu0 %v1424
      %v1490 = vpop.f32.mrf.mxu0
      %v1491 = vadd.f32 0.0, %v1490
      %v1492 = vpop.f32.mrf.mxu0
      %v1493 = vadd.f32 0.0, %v1492
      %1494 = vmatmul.bf16.gmra.mxu0 %v1427
      %v1495 = vpop.f32.mrf.mxu0
      %v1496 = vadd.f32 0.0, %v1495
      %v1497 = vpop.f32.mrf.mxu0
      %v1498 = vadd.f32 0.0, %v1497
      %1499 = vmatmul.bf16.gmra.mxu0 %v1430
      %v1500 = vpop.f32.mrf.mxu0
      %v1501 = vadd.f32 0.0, %v1500
      %v1502 = vpop.f32.mrf.mxu0
      %v1503 = vadd.f32 0.0, %v1502
      %1504 = vmatmul.bf16.gmra.mxu0 %v1433
      %v1505 = vpop.f32.mrf.mxu0
      %v1506 = vadd.f32 0.0, %v1505
      %v1507 = vpop.f32.mrf.mxu0
      %v1508 = vadd.f32 0.0, %v1507
      %1509 = vmatmul.bf16.gmra.mxu0 %v1436
      %v1510 = vpop.f32.mrf.mxu0
      %v1511 = vadd.f32 0.0, %v1510
      %v1512 = vpop.f32.mrf.mxu0
      %v1513 = vadd.f32 0.0, %v1512
      %1514 = vmatmul.bf16.gmra.mxu0 %v1439
      %v1515 = vpop.f32.mrf.mxu0
      %v1516 = vadd.f32 0.0, %v1515
      %v1517 = vpop.f32.mrf.mxu0
      %v1518 = vadd.f32 0.0, %v1517
      %1519 = vmatmul.bf16.gmra.mxu0 %v1442
      %v1520 = vpop.f32.mrf.mxu0
      %v1521 = vadd.f32 0.0, %v1520
      %v1522 = vpop.f32.mrf.mxu0
      %v1523 = vadd.f32 0.0, %v1522
      %1524 = vmatmul.bf16.gmra.mxu0 %v1445
      %v1525 = vpop.f32.mrf.mxu0
      %v1526 = vadd.f32 0.0, %v1525
      %v1527 = vpop.f32.mrf.mxu0
      %v1528 = vadd.f32 0.0, %v1527
      %1529 = vmatmul.bf16.gmra.mxu0 %v1448
      %v1530 = vpop.f32.mrf.mxu0
      %v1531 = vadd.f32 0.0, %v1530
      %v1532 = vpop.f32.mrf.mxu0
      %v1533 = vadd.f32 0.0, %v1532
      %1534 = vmatmul.bf16.gmra.mxu0 %v1451
      %v1535 = vpop.f32.mrf.mxu0
      %v1536 = vadd.f32 0.0, %v1535
      %v1537 = vpop.f32.mrf.mxu0
      %v1538 = vadd.f32 0.0, %v1537
      %1539 = vmatmul.bf16.gmra.mxu0 %v1454
      %v1540 = vpop.f32.mrf.mxu0
      %v1541 = vadd.f32 0.0, %v1540
      %v1542 = vpop.f32.mrf.mxu0
      %v1543 = vadd.f32 0.0, %v1542
      %1544 = vmatmul.bf16.gmra.mxu0 %v1457
      %v1545 = vpop.f32.mrf.mxu0
      %v1546 = vadd.f32 0.0, %v1545
      %v1547 = vpop.f32.mrf.mxu0
      %v1548 = vadd.f32 0.0, %v1547
      %1549 = vmatmul.bf16.gmra.mxu0 %v1460
      %v1550 = vpop.f32.mrf.mxu0
      %v1551 = vadd.f32 0.0, %v1550
      %v1552 = vpop.f32.mrf.mxu0
      %v1553 = vadd.f32 0.0, %v1552
      %1554 = vmatmul.bf16.gmra.mxu0 %v1463
      %v1555 = vpop.f32.mrf.mxu0
      %v1556 = vadd.f32 0.0, %v1555
      %v1557 = vpop.f32.mrf.mxu0
      %v1558 = vadd.f32 0.0, %v1557
      %1559 = vmatmul.bf16.gmra.mxu0 %v1466
      %v1560 = vpop.f32.mrf.mxu0
      %v1561 = vadd.f32 0.0, %v1560
      %v1562 = vpop.f32.mrf.mxu0
      %v1563 = vadd.f32 0.0, %v1562
      %1564 = vdwg.mxu0
      %v1565 = vadd.f32 %v1229, %v1481
      %v1566 = vadd.f32 %v1230, %v1483
      %v1567 = vadd.f32 %v1231, %v1486
      %v1568 = vadd.f32 %v1232, %v1488
      %v1569 = vadd.f32 %v1233, %v1491
      %v1570 = vadd.f32 %v1234, %v1493
      %v1571 = vadd.f32 %v1235, %v1496
      %v1572 = vadd.f32 %v1236, %v1498
      %v1573 = vadd.f32 %v1237, %v1501
      %v1574 = vadd.f32 %v1238, %v1503
      %v1575 = vadd.f32 %v1239, %v1506
      %v1576 = vadd.f32 %v1240, %v1508
      %v1577 = vadd.f32 %v1241, %v1511
      %v1578 = vadd.f32 %v1242, %v1513
      %v1579 = vadd.f32 %v1243, %v1516
      %v1580 = vadd.f32 %v1244, %v1518
      %v1581 = vadd.f32 %v1245, %v1521
      %v1582 = vadd.f32 %v1246, %v1523
      %v1583 = vadd.f32 %v1247, %v1526
      %v1584 = vadd.f32 %v1248, %v1528
      %v1585 = vadd.f32 %v1249, %v1531
      %v1586 = vadd.f32 %v1250, %v1533
      %v1587 = vadd.f32 %v1251, %v1536
      %v1588 = vadd.f32 %v1252, %v1538
      %v1589 = vadd.f32 %v1253, %v1541
      %v1590 = vadd.f32 %v1254, %v1543
      %v1591 = vadd.f32 %v1255, %v1546
      %v1592 = vadd.f32 %v1256, %v1548
      %v1593 = vadd.f32 %v1257, %v1551
      %v1594 = vadd.f32 %v1258, %v1553
      %v1595 = vadd.f32 %v1259, %v1556
      %v1596 = vadd.f32 %v1260, %v1558
      %v1597 = vadd.f32 %v1261, %v1561
      %v1598 = vadd.f32 %v1262, %v1563
      %s1599 = scalar_lea.vmem %s226, 10
      %v1600 = vld [vmem:[%s1599] sm:$0x3]
      %v1602 = vshrl.u32 %v1367, 16
      %v1604 = vrot.slane %v1602, 1
      %v1605 = vshll.u32 %v1367, 16
      %v1607 = vrot.slane %v1605, 2
      %v1608 = vor.u32 %v1604, %v1607
      %v1610 = vshrl.u32 %v1368, 16
      %v1612 = vrot.slane %v1610, 1
      %v1613 = vshll.u32 %v1368, 16
      %v1615 = vrot.slane %v1613, 2
      %v1616 = vor.u32 %v1612, %v1615
      %v1617 = vsel %vm1003, %v1608, %v1616
      %v1619 = vshrl.u32 %v1369, 16
      %v1621 = vrot.slane %v1619, 1
      %v1622 = vshll.u32 %v1369, 16
      %v1624 = vrot.slane %v1622, 2
      %v1625 = vor.u32 %v1621, %v1624
      %v1626 = vsel %vm1003, %v1616, %v1625
      %v1628 = vshrl.u32 %v1370, 16
      %v1630 = vrot.slane %v1628, 1
      %v1631 = vshll.u32 %v1370, 16
      %v1633 = vrot.slane %v1631, 2
      %v1634 = vor.u32 %v1630, %v1633
      %v1635 = vsel %vm1003, %v1625, %v1634
      %v1637 = vshrl.u32 %v1371, 16
      %v1639 = vrot.slane %v1637, 1
      %v1640 = vshll.u32 %v1371, 16
      %v1642 = vrot.slane %v1640, 2
      %v1643 = vor.u32 %v1639, %v1642
      %v1644 = vsel %vm1003, %v1634, %v1643
      %v1646 = vshrl.u32 %v1372, 16
      %v1648 = vrot.slane %v1646, 1
      %v1649 = vshll.u32 %v1372, 16
      %v1651 = vrot.slane %v1649, 2
      %v1652 = vor.u32 %v1648, %v1651
      %v1653 = vsel %vm1003, %v1643, %v1652
      %v1655 = vshrl.u32 %v1373, 16
      %v1657 = vrot.slane %v1655, 1
      %v1658 = vshll.u32 %v1373, 16
      %v1660 = vrot.slane %v1658, 2
      %v1661 = vor.u32 %v1657, %v1660
      %v1662 = vsel %vm1003, %v1652, %v1661
      %v1664 = vshrl.u32 %v1374, 16
      %v1666 = vrot.slane %v1664, 1
      %v1667 = vshll.u32 %v1374, 16
      %v1669 = vrot.slane %v1667, 2
      %v1670 = vor.u32 %v1666, %v1669
      %v1671 = vsel %vm1003, %v1661, %v1670
      %v1673 = vshrl.u32 %v1375, 16
      %v1675 = vrot.slane %v1673, 1
      %v1676 = vshll.u32 %v1375, 16
      %v1678 = vrot.slane %v1676, 2
      %v1679 = vor.u32 %v1675, %v1678
      %v1680 = vsel %vm1003, %v1670, %v1679
      %v1682 = vshrl.u32 %v1376, 16
      %v1684 = vrot.slane %v1682, 1
      %v1685 = vshll.u32 %v1376, 16
      %v1687 = vrot.slane %v1685, 2
      %v1688 = vor.u32 %v1684, %v1687
      %v1689 = vsel %vm1003, %v1679, %v1688
      %v1691 = vshrl.u32 %v1377, 16
      %v1693 = vrot.slane %v1691, 1
      %v1694 = vshll.u32 %v1377, 16
      %v1696 = vrot.slane %v1694, 2
      %v1697 = vor.u32 %v1693, %v1696
      %v1698 = vsel %vm1003, %v1688, %v1697
      %v1700 = vshrl.u32 %v1378, 16
      %v1702 = vrot.slane %v1700, 1
      %v1703 = vshll.u32 %v1378, 16
      %v1705 = vrot.slane %v1703, 2
      %v1706 = vor.u32 %v1702, %v1705
      %v1707 = vsel %vm1003, %v1697, %v1706
      %v1709 = vshrl.u32 %v1379, 16
      %v1711 = vrot.slane %v1709, 1
      %v1712 = vshll.u32 %v1379, 16
      %v1714 = vrot.slane %v1712, 2
      %v1715 = vor.u32 %v1711, %v1714
      %v1716 = vsel %vm1003, %v1706, %v1715
      %v1718 = vshrl.u32 %v1380, 16
      %v1720 = vrot.slane %v1718, 1
      %v1721 = vshll.u32 %v1380, 16
      %v1723 = vrot.slane %v1721, 2
      %v1724 = vor.u32 %v1720, %v1723
      %v1725 = vsel %vm1003, %v1715, %v1724
      %v1727 = vshrl.u32 %v1381, 16
      %v1729 = vrot.slane %v1727, 1
      %v1730 = vshll.u32 %v1381, 16
      %v1732 = vrot.slane %v1730, 2
      %v1733 = vor.u32 %v1729, %v1732
      %v1734 = vsel %vm1003, %v1724, %v1733
      %v1736 = vshrl.u32 %v1382, 16
      %v1738 = vrot.slane %v1736, 1
      %v1739 = vshll.u32 %v1382, 16
      %v1741 = vrot.slane %v1739, 2
      %v1742 = vor.u32 %v1738, %v1741
      %v1743 = vsel %vm1003, %v1733, %v1742
      %v1745 = vshrl.u32 %v1383, 16
      %v1747 = vrot.slane %v1745, 1
      %v1748 = vshll.u32 %v1383, 16
      %v1750 = vrot.slane %v1748, 2
      %v1751 = vor.u32 %v1747, %v1750
      %v1752 = vsel %vm1003, %v1742, %v1751
      %v1754 = vsel %vm494, %v1617, 0
      %v1757 = vsel %vm494, %v1626, 0
      %v1760 = vsel %vm494, %v1635, 0
      %v1763 = vsel %vm494, %v1644, 0
      %v1766 = vsel %vm494, %v1653, 0
      %v1769 = vsel %vm494, %v1662, 0
      %v1772 = vsel %vm494, %v1671, 0
      %v1775 = vsel %vm494, %v1680, 0
      %v1778 = vsel %vm494, %v1689, 0
      %v1781 = vsel %vm494, %v1698, 0
      %v1784 = vsel %vm494, %v1707, 0
      %v1787 = vsel %vm494, %v1716, 0
      %v1790 = vsel %vm494, %v1725, 0
      %v1793 = vsel %vm494, %v1734, 0
      %v1796 = vsel %vm494, %v1743, 0
      %v1799 = vsel %vm494, %v1752, 0
      %v1802 = vsel %vm494, %v1751, 0
      %v1805 = vsel %vm546, %v1600, 0
      %1807 = vmatpush.bf16.msra.mxu0 0
      %1808 = vmatpush.bf16.msra.mxu0 0
      %1809 = vmatpush.bf16.msra.mxu0 0
      %1810 = vmatpush.bf16.msra.mxu0 0
      %1811 = vmatpush.bf16.msra.mxu0 0
      %1812 = vmatpush.bf16.msra.mxu0 0
      %1813 = vmatpush.bf16.msra.mxu0 0
      %1814 = vmatpush.bf16.msra.mxu0 %v1805
      %1815 = vmatmul.bf16.gmra.mxu0 %v1754
      %v1816 = vpop.f32.mrf.mxu0
      %v1817 = vadd.f32 0.0, %v1816
      %v1818 = vpop.f32.mrf.mxu0
      %v1819 = vadd.f32 0.0, %v1818
      %1820 = vmatmul.bf16.gmra.mxu0 %v1757
      %v1821 = vpop.f32.mrf.mxu0
      %v1822 = vadd.f32 0.0, %v1821
      %v1823 = vpop.f32.mrf.mxu0
      %v1824 = vadd.f32 0.0, %v1823
      %1825 = vmatmul.bf16.gmra.mxu0 %v1760
      %v1826 = vpop.f32.mrf.mxu0
      %v1827 = vadd.f32 0.0, %v1826
      %v1828 = vpop.f32.mrf.mxu0
      %v1829 = vadd.f32 0.0, %v1828
      %1830 = vmatmul.bf16.gmra.mxu0 %v1763
      %v1831 = vpop.f32.mrf.mxu0
      %v1832 = vadd.f32 0.0, %v1831
      %v1833 = vpop.f32.mrf.mxu0
      %v1834 = vadd.f32 0.0, %v1833
      %1835 = vmatmul.bf16.gmra.mxu0 %v1766
      %v1836 = vpop.f32.mrf.mxu0
      %v1837 = vadd.f32 0.0, %v1836
      %v1838 = vpop.f32.mrf.mxu0
      %v1839 = vadd.f32 0.0, %v1838
      %1840 = vmatmul.bf16.gmra.mxu0 %v1769
      %v1841 = vpop.f32.mrf.mxu0
      %v1842 = vadd.f32 0.0, %v1841
      %v1843 = vpop.f32.mrf.mxu0
      %v1844 = vadd.f32 0.0, %v1843
      %1845 = vmatmul.bf16.gmra.mxu0 %v1772
      %v1846 = vpop.f32.mrf.mxu0
      %v1847 = vadd.f32 0.0, %v1846
      %v1848 = vpop.f32.mrf.mxu0
      %v1849 = vadd.f32 0.0, %v1848
      %1850 = vmatmul.bf16.gmra.mxu0 %v1775
      %v1851 = vpop.f32.mrf.mxu0
      %v1852 = vadd.f32 0.0, %v1851
      %v1853 = vpop.f32.mrf.mxu0
      %v1854 = vadd.f32 0.0, %v1853
      %1855 = vmatmul.bf16.gmra.mxu0 %v1778
      %v1856 = vpop.f32.mrf.mxu0
      %v1857 = vadd.f32 0.0, %v1856
      %v1858 = vpop.f32.mrf.mxu0
      %v1859 = vadd.f32 0.0, %v1858
      %1860 = vmatmul.bf16.gmra.mxu0 %v1781
      %v1861 = vpop.f32.mrf.mxu0
      %v1862 = vadd.f32 0.0, %v1861
      %v1863 = vpop.f32.mrf.mxu0
      %v1864 = vadd.f32 0.0, %v1863
      %1865 = vmatmul.bf16.gmra.mxu0 %v1784
      %v1866 = vpop.f32.mrf.mxu0
      %v1867 = vadd.f32 0.0, %v1866
      %v1868 = vpop.f32.mrf.mxu0
      %v1869 = vadd.f32 0.0, %v1868
      %1870 = vmatmul.bf16.gmra.mxu0 %v1787
      %v1871 = vpop.f32.mrf.mxu0
      %v1872 = vadd.f32 0.0, %v1871
      %v1873 = vpop.f32.mrf.mxu0
      %v1874 = vadd.f32 0.0, %v1873
      %1875 = vmatmul.bf16.gmra.mxu0 %v1790
      %v1876 = vpop.f32.mrf.mxu0
      %v1877 = vadd.f32 0.0, %v1876
      %v1878 = vpop.f32.mrf.mxu0
      %v1879 = vadd.f32 0.0, %v1878
      %1880 = vmatmul.bf16.gmra.mxu0 %v1793
      %v1881 = vpop.f32.mrf.mxu0
      %v1882 = vadd.f32 0.0, %v1881
      %v1883 = vpop.f32.mrf.mxu0
      %v1884 = vadd.f32 0.0, %v1883
      %1885 = vmatmul.bf16.gmra.mxu0 %v1796
      %v1886 = vpop.f32.mrf.mxu0
      %v1887 = vadd.f32 0.0, %v1886
      %v1888 = vpop.f32.mrf.mxu0
      %v1889 = vadd.f32 0.0, %v1888
      %1890 = vmatmul.bf16.gmra.mxu0 %v1799
      %v1891 = vpop.f32.mrf.mxu0
      %v1892 = vadd.f32 0.0, %v1891
      %v1893 = vpop.f32.mrf.mxu0
      %v1894 = vadd.f32 0.0, %v1893
      %1895 = vmatmul.bf16.gmra.mxu0 %v1802
      %v1896 = vpop.f32.mrf.mxu0
      %v1897 = vadd.f32 0.0, %v1896
      %v1898 = vpop.f32.mrf.mxu0
      %v1899 = vadd.f32 0.0, %v1898
      %1900 = vdwg.mxu0
      %v1901 = vadd.f32 %v1565, %v1817
      %v1902 = vadd.f32 %v1566, %v1819
      %v1903 = vadd.f32 %v1567, %v1822
      %v1904 = vadd.f32 %v1568, %v1824
      %v1905 = vadd.f32 %v1569, %v1827
      %v1906 = vadd.f32 %v1570, %v1829
      %v1907 = vadd.f32 %v1571, %v1832
      %v1908 = vadd.f32 %v1572, %v1834
      %v1909 = vadd.f32 %v1573, %v1837
      %v1910 = vadd.f32 %v1574, %v1839
      %v1911 = vadd.f32 %v1575, %v1842
      %v1912 = vadd.f32 %v1576, %v1844
      %v1913 = vadd.f32 %v1577, %v1847
      %v1914 = vadd.f32 %v1578, %v1849
      %v1915 = vadd.f32 %v1579, %v1852
      %v1916 = vadd.f32 %v1580, %v1854
      %v1917 = vadd.f32 %v1581, %v1857
      %v1918 = vadd.f32 %v1582, %v1859
      %v1919 = vadd.f32 %v1583, %v1862
      %v1920 = vadd.f32 %v1584, %v1864
      %v1921 = vadd.f32 %v1585, %v1867
      %v1922 = vadd.f32 %v1586, %v1869
      %v1923 = vadd.f32 %v1587, %v1872
      %v1924 = vadd.f32 %v1588, %v1874
      %v1925 = vadd.f32 %v1589, %v1877
      %v1926 = vadd.f32 %v1590, %v1879
      %v1927 = vadd.f32 %v1591, %v1882
      %v1928 = vadd.f32 %v1592, %v1884
      %v1929 = vadd.f32 %v1593, %v1887
      %v1930 = vadd.f32 %v1594, %v1889
      %v1931 = vadd.f32 %v1595, %v1892
      %v1932 = vadd.f32 %v1596, %v1894
      %v1933 = vadd.f32 %v1597, %v1897
      %v1934 = vadd.f32 %v1598, %v1899
      %v1935 = vld [vmem:[%s222 + $0x8] sm:$0xc]
      %v1936 = vld [vmem:[%s222 + $0x8c] sm:$0xf]
      %s1937 = scalar_lea.vmem %s226, 12
      %v1938 = vld [vmem:[%s1937] sm:$0x3]
      %v1941 = vunpack.c.l.b16 %v1935
      %v1942 = vunpack.c.l.b16 %v1936
      %v1943 = vpack.c.b16 %v1334, %v1941
      %v1944 = vpack.c.b16 %v1942, %v1365
      %vm1945 = vcmask 1045504
      %v1946 = vrot.slane %v1943, 2
      %v1947 = vrot.slane %v1368, 2
      %v1948 = vsel %vm1945, %v1946, %v1947
      %v1949 = vrot.slane %v1369, 2
      %v1950 = vsel %vm1945, %v1947, %v1949
      %v1951 = vrot.slane %v1370, 2
      %v1952 = vsel %vm1945, %v1949, %v1951
      %v1953 = vrot.slane %v1371, 2
      %v1954 = vsel %vm1945, %v1951, %v1953
      %v1955 = vrot.slane %v1372, 2
      %v1956 = vsel %vm1945, %v1953, %v1955
      %v1957 = vrot.slane %v1373, 2
      %v1958 = vsel %vm1945, %v1955, %v1957
      %v1959 = vrot.slane %v1374, 2
      %v1960 = vsel %vm1945, %v1957, %v1959
      %v1961 = vrot.slane %v1375, 2
      %v1962 = vsel %vm1945, %v1959, %v1961
      %v1963 = vrot.slane %v1376, 2
      %v1964 = vsel %vm1945, %v1961, %v1963
      %v1965 = vrot.slane %v1377, 2
      %v1966 = vsel %vm1945, %v1963, %v1965
      %v1967 = vrot.slane %v1378, 2
      %v1968 = vsel %vm1945, %v1965, %v1967
      %v1969 = vrot.slane %v1379, 2
      %v1970 = vsel %vm1945, %v1967, %v1969
      %v1971 = vrot.slane %v1380, 2
      %v1972 = vsel %vm1945, %v1969, %v1971
      %v1973 = vrot.slane %v1381, 2
      %v1974 = vsel %vm1945, %v1971, %v1973
      %v1975 = vrot.slane %v1382, 2
      %v1976 = vsel %vm1945, %v1973, %v1975
      %v1977 = vrot.slane %v1944, 2
      %v1978 = vsel %vm1945, %v1975, %v1977
      %v1980 = vsel %vm494, %v1948, 0
      %v1983 = vsel %vm494, %v1950, 0
      %v1986 = vsel %vm494, %v1952, 0
      %v1989 = vsel %vm494, %v1954, 0
      %v1992 = vsel %vm494, %v1956, 0
      %v1995 = vsel %vm494, %v1958, 0
      %v1998 = vsel %vm494, %v1960, 0
      %v2001 = vsel %vm494, %v1962, 0
      %v2004 = vsel %vm494, %v1964, 0
      %v2007 = vsel %vm494, %v1966, 0
      %v2010 = vsel %vm494, %v1968, 0
      %v2013 = vsel %vm494, %v1970, 0
      %v2016 = vsel %vm494, %v1972, 0
      %v2019 = vsel %vm494, %v1974, 0
      %v2022 = vsel %vm494, %v1976, 0
      %v2025 = vsel %vm494, %v1978, 0
      %v2028 = vsel %vm494, %v1977, 0
      %v2031 = vsel %vm546, %v1938, 0
      %2033 = vmatpush.bf16.msra.mxu0 0
      %2034 = vmatpush.bf16.msra.mxu0 0
      %2035 = vmatpush.bf16.msra.mxu0 0
      %2036 = vmatpush.bf16.msra.mxu0 0
      %2037 = vmatpush.bf16.msra.mxu0 0
      %2038 = vmatpush.bf16.msra.mxu0 0
      %2039 = vmatpush.bf16.msra.mxu0 0
      %2040 = vmatpush.bf16.msra.mxu0 %v2031
      %2041 = vmatmul.bf16.gmra.mxu0 %v1980
      %v2042 = vpop.f32.mrf.mxu0
      %v2043 = vadd.f32 0.0, %v2042
      %v2044 = vpop.f32.mrf.mxu0
      %v2045 = vadd.f32 0.0, %v2044
      %2046 = vmatmul.bf16.gmra.mxu0 %v1983
      %v2047 = vpop.f32.mrf.mxu0
      %v2048 = vadd.f32 0.0, %v2047
      %v2049 = vpop.f32.mrf.mxu0
      %v2050 = vadd.f32 0.0, %v2049
      %2051 = vmatmul.bf16.gmra.mxu0 %v1986
      %v2052 = vpop.f32.mrf.mxu0
      %v2053 = vadd.f32 0.0, %v2052
      %v2054 = vpop.f32.mrf.mxu0
      %v2055 = vadd.f32 0.0, %v2054
      %2056 = vmatmul.bf16.gmra.mxu0 %v1989
      %v2057 = vpop.f32.mrf.mxu0
      %v2058 = vadd.f32 0.0, %v2057
      %v2059 = vpop.f32.mrf.mxu0
      %v2060 = vadd.f32 0.0, %v2059
      %2061 = vmatmul.bf16.gmra.mxu0 %v1992
      %v2062 = vpop.f32.mrf.mxu0
      %v2063 = vadd.f32 0.0, %v2062
      %v2064 = vpop.f32.mrf.mxu0
      %v2065 = vadd.f32 0.0, %v2064
      %2066 = vmatmul.bf16.gmra.mxu0 %v1995
      %v2067 = vpop.f32.mrf.mxu0
      %v2068 = vadd.f32 0.0, %v2067
      %v2069 = vpop.f32.mrf.mxu0
      %v2070 = vadd.f32 0.0, %v2069
      %2071 = vmatmul.bf16.gmra.mxu0 %v1998
      %v2072 = vpop.f32.mrf.mxu0
      %v2073 = vadd.f32 0.0, %v2072
      %v2074 = vpop.f32.mrf.mxu0
      %v2075 = vadd.f32 0.0, %v2074
      %2076 = vmatmul.bf16.gmra.mxu0 %v2001
      %v2077 = vpop.f32.mrf.mxu0
      %v2078 = vadd.f32 0.0, %v2077
      %v2079 = vpop.f32.mrf.mxu0
      %v2080 = vadd.f32 0.0, %v2079
      %2081 = vmatmul.bf16.gmra.mxu0 %v2004
      %v2082 = vpop.f32.mrf.mxu0
      %v2083 = vadd.f32 0.0, %v2082
      %v2084 = vpop.f32.mrf.mxu0
      %v2085 = vadd.f32 0.0, %v2084
      %2086 = vmatmul.bf16.gmra.mxu0 %v2007
      %v2087 = vpop.f32.mrf.mxu0
      %v2088 = vadd.f32 0.0, %v2087
      %v2089 = vpop.f32.mrf.mxu0
      %v2090 = vadd.f32 0.0, %v2089
      %2091 = vmatmul.bf16.gmra.mxu0 %v2010
      %v2092 = vpop.f32.mrf.mxu0
      %v2093 = vadd.f32 0.0, %v2092
      %v2094 = vpop.f32.mrf.mxu0
      %v2095 = vadd.f32 0.0, %v2094
      %2096 = vmatmul.bf16.gmra.mxu0 %v2013
      %v2097 = vpop.f32.mrf.mxu0
      %v2098 = vadd.f32 0.0, %v2097
      %v2099 = vpop.f32.mrf.mxu0
      %v2100 = vadd.f32 0.0, %v2099
      %2101 = vmatmul.bf16.gmra.mxu0 %v2016
      %v2102 = vpop.f32.mrf.mxu0
      %v2103 = vadd.f32 0.0, %v2102
      %v2104 = vpop.f32.mrf.mxu0
      %v2105 = vadd.f32 0.0, %v2104
      %2106 = vmatmul.bf16.gmra.mxu0 %v2019
      %v2107 = vpop.f32.mrf.mxu0
      %v2108 = vadd.f32 0.0, %v2107
      %v2109 = vpop.f32.mrf.mxu0
      %v2110 = vadd.f32 0.0, %v2109
      %2111 = vmatmul.bf16.gmra.mxu0 %v2022
      %v2112 = vpop.f32.mrf.mxu0
      %v2113 = vadd.f32 0.0, %v2112
      %v2114 = vpop.f32.mrf.mxu0
      %v2115 = vadd.f32 0.0, %v2114
      %2116 = vmatmul.bf16.gmra.mxu0 %v2025
      %v2117 = vpop.f32.mrf.mxu0
      %v2118 = vadd.f32 0.0, %v2117
      %v2119 = vpop.f32.mrf.mxu0
      %v2120 = vadd.f32 0.0, %v2119
      %2121 = vmatmul.bf16.gmra.mxu0 %v2028
      %v2122 = vpop.f32.mrf.mxu0
      %v2123 = vadd.f32 0.0, %v2122
      %v2124 = vpop.f32.mrf.mxu0
      %v2125 = vadd.f32 0.0, %v2124
      %2126 = vdwg.mxu0
      %v2127 = vadd.f32 %v1901, %v2043
      %v2128 = vadd.f32 %v1902, %v2045
      %v2129 = vadd.f32 %v1903, %v2048
      %v2130 = vadd.f32 %v1904, %v2050
      %v2131 = vadd.f32 %v1905, %v2053
      %v2132 = vadd.f32 %v1906, %v2055
      %v2133 = vadd.f32 %v1907, %v2058
      %v2134 = vadd.f32 %v1908, %v2060
      %v2135 = vadd.f32 %v1909, %v2063
      %v2136 = vadd.f32 %v1910, %v2065
      %v2137 = vadd.f32 %v1911, %v2068
      %v2138 = vadd.f32 %v1912, %v2070
      %v2139 = vadd.f32 %v1913, %v2073
      %v2140 = vadd.f32 %v1914, %v2075
      %v2141 = vadd.f32 %v1915, %v2078
      %v2142 = vadd.f32 %v1916, %v2080
      %v2143 = vadd.f32 %v1917, %v2083
      %v2144 = vadd.f32 %v1918, %v2085
      %v2145 = vadd.f32 %v1919, %v2088
      %v2146 = vadd.f32 %v1920, %v2090
      %v2147 = vadd.f32 %v1921, %v2093
      %v2148 = vadd.f32 %v1922, %v2095
      %v2149 = vadd.f32 %v1923, %v2098
      %v2150 = vadd.f32 %v1924, %v2100
      %v2151 = vadd.f32 %v1925, %v2103
      %v2152 = vadd.f32 %v1926, %v2105
      %v2153 = vadd.f32 %v1927, %v2108
      %v2154 = vadd.f32 %v1928, %v2110
      %v2155 = vadd.f32 %v1929, %v2113
      %v2156 = vadd.f32 %v1930, %v2115
      %v2157 = vadd.f32 %v1931, %v2118
      %v2158 = vadd.f32 %v1932, %v2120
      %v2159 = vadd.f32 %v1933, %v2123
      %v2160 = vadd.f32 %v1934, %v2125
      %s2161 = scalar_lea.vmem %s226, 14
      %v2162 = vld [vmem:[%s2161] sm:$0x3]
      %vm2163 = vsmask.f32 5376
      %v2165 = vshrl.u32 %v1943, 16
      %v2167 = vrot.slane %v2165, 2
      %v2168 = vshll.u32 %v1943, 16
      %v2170 = vrot.slane %v2168, 3
      %v2171 = vor.u32 %v2167, %v2170
      %v2172 = vrot.slane %v1610, 2
      %v2173 = vrot.slane %v1613, 3
      %v2174 = vor.u32 %v2172, %v2173
      %v2175 = vsel %vm2163, %v2171, %v2174
      %v2176 = vrot.slane %v1619, 2
      %v2177 = vrot.slane %v1622, 3
      %v2178 = vor.u32 %v2176, %v2177
      %v2179 = vsel %vm2163, %v2174, %v2178
      %v2180 = vrot.slane %v1628, 2
      %v2181 = vrot.slane %v1631, 3
      %v2182 = vor.u32 %v2180, %v2181
      %v2183 = vsel %vm2163, %v2178, %v2182
      %v2184 = vrot.slane %v1637, 2
      %v2185 = vrot.slane %v1640, 3
      %v2186 = vor.u32 %v2184, %v2185
      %v2187 = vsel %vm2163, %v2182, %v2186
      %v2188 = vrot.slane %v1646, 2
      %v2189 = vrot.slane %v1649, 3
      %v2190 = vor.u32 %v2188, %v2189
      %v2191 = vsel %vm2163, %v2186, %v2190
      %v2192 = vrot.slane %v1655, 2
      %v2193 = vrot.slane %v1658, 3
      %v2194 = vor.u32 %v2192, %v2193
      %v2195 = vsel %vm2163, %v2190, %v2194
      %v2196 = vrot.slane %v1664, 2
      %v2197 = vrot.slane %v1667, 3
      %v2198 = vor.u32 %v2196, %v2197
      %v2199 = vsel %vm2163, %v2194, %v2198
      %v2200 = vrot.slane %v1673, 2
      %v2201 = vrot.slane %v1676, 3
      %v2202 = vor.u32 %v2200, %v2201
      %v2203 = vsel %vm2163, %v2198, %v2202
      %v2204 = vrot.slane %v1682, 2
      %v2205 = vrot.slane %v1685, 3
      %v2206 = vor.u32 %v2204, %v2205
      %v2207 = vsel %vm2163, %v2202, %v2206
      %v2208 = vrot.slane %v1691, 2
      %v2209 = vrot.slane %v1694, 3
      %v2210 = vor.u32 %v2208, %v2209
      %v2211 = vsel %vm2163, %v2206, %v2210
      %v2212 = vrot.slane %v1700, 2
      %v2213 = vrot.slane %v1703, 3
      %v2214 = vor.u32 %v2212, %v2213
      %v2215 = vsel %vm2163, %v2210, %v2214
      %v2216 = vrot.slane %v1709, 2
      %v2217 = vrot.slane %v1712, 3
      %v2218 = vor.u32 %v2216, %v2217
      %v2219 = vsel %vm2163, %v2214, %v2218
      %v2220 = vrot.slane %v1718, 2
      %v2221 = vrot.slane %v1721, 3
      %v2222 = vor.u32 %v2220, %v2221
      %v2223 = vsel %vm2163, %v2218, %v2222
      %v2224 = vrot.slane %v1727, 2
      %v2225 = vrot.slane %v1730, 3
      %v2226 = vor.u32 %v2224, %v2225
      %v2227 = vsel %vm2163, %v2222, %v2226
      %v2228 = vrot.slane %v1736, 2
      %v2229 = vrot.slane %v1739, 3
      %v2230 = vor.u32 %v2228, %v2229
      %v2231 = vsel %vm2163, %v2226, %v2230
      %v2233 = vshrl.u32 %v1944, 16
      %v2235 = vrot.slane %v2233, 2
      %v2236 = vshll.u32 %v1944, 16
      %v2238 = vrot.slane %v2236, 3
      %v2239 = vor.u32 %v2235, %v2238
      %v2240 = vsel %vm2163, %v2230, %v2239
      %v2242 = vsel %vm494, %v2175, 0
      %v2245 = vsel %vm494, %v2179, 0
      %v2248 = vsel %vm494, %v2183, 0
      %v2251 = vsel %vm494, %v2187, 0
      %v2254 = vsel %vm494, %v2191, 0
      %v2257 = vsel %vm494, %v2195, 0
      %v2260 = vsel %vm494, %v2199, 0
      %v2263 = vsel %vm494, %v2203, 0
      %v2266 = vsel %vm494, %v2207, 0
      %v2269 = vsel %vm494, %v2211, 0
      %v2272 = vsel %vm494, %v2215, 0
      %v2275 = vsel %vm494, %v2219, 0
      %v2278 = vsel %vm494, %v2223, 0
      %v2281 = vsel %vm494, %v2227, 0
      %v2284 = vsel %vm494, %v2231, 0
      %v2287 = vsel %vm494, %v2240, 0
      %v2290 = vsel %vm494, %v2239, 0
      %v2293 = vsel %vm546, %v2162, 0
      %2295 = vmatpush.bf16.msra.mxu0 0
      %2296 = vmatpush.bf16.msra.mxu0 0
      %2297 = vmatpush.bf16.msra.mxu0 0
      %2298 = vmatpush.bf16.msra.mxu0 0
      %2299 = vmatpush.bf16.msra.mxu0 0
      %2300 = vmatpush.bf16.msra.mxu0 0
      %2301 = vmatpush.bf16.msra.mxu0 0
      %2302 = vmatpush.bf16.msra.mxu0 %v2293
      %2303 = vmatmul.bf16.gmra.mxu0 %v2242
      %v2304 = vpop.f32.mrf.mxu0
      %v2305 = vadd.f32 0.0, %v2304
      %v2306 = vpop.f32.mrf.mxu0
      %v2307 = vadd.f32 0.0, %v2306
      %2308 = vmatmul.bf16.gmra.mxu0 %v2245
      %v2309 = vpop.f32.mrf.mxu0
      %v2310 = vadd.f32 0.0, %v2309
      %v2311 = vpop.f32.mrf.mxu0
      %v2312 = vadd.f32 0.0, %v2311
      %2313 = vmatmul.bf16.gmra.mxu0 %v2248
      %v2314 = vpop.f32.mrf.mxu0
      %v2315 = vadd.f32 0.0, %v2314
      %v2316 = vpop.f32.mrf.mxu0
      %v2317 = vadd.f32 0.0, %v2316
      %2318 = vmatmul.bf16.gmra.mxu0 %v2251
      %v2319 = vpop.f32.mrf.mxu0
      %v2320 = vadd.f32 0.0, %v2319
      %v2321 = vpop.f32.mrf.mxu0
      %v2322 = vadd.f32 0.0, %v2321
      %2323 = vmatmul.bf16.gmra.mxu0 %v2254
      %v2324 = vpop.f32.mrf.mxu0
      %v2325 = vadd.f32 0.0, %v2324
      %v2326 = vpop.f32.mrf.mxu0
      %v2327 = vadd.f32 0.0, %v2326
      %2328 = vmatmul.bf16.gmra.mxu0 %v2257
      %v2329 = vpop.f32.mrf.mxu0
      %v2330 = vadd.f32 0.0, %v2329
      %v2331 = vpop.f32.mrf.mxu0
      %v2332 = vadd.f32 0.0, %v2331
      %2333 = vmatmul.bf16.gmra.mxu0 %v2260
      %v2334 = vpop.f32.mrf.mxu0
      %v2335 = vadd.f32 0.0, %v2334
      %v2336 = vpop.f32.mrf.mxu0
      %v2337 = vadd.f32 0.0, %v2336
      %2338 = vmatmul.bf16.gmra.mxu0 %v2263
      %v2339 = vpop.f32.mrf.mxu0
      %v2340 = vadd.f32 0.0, %v2339
      %v2341 = vpop.f32.mrf.mxu0
      %v2342 = vadd.f32 0.0, %v2341
      %2343 = vmatmul.bf16.gmra.mxu0 %v2266
      %v2344 = vpop.f32.mrf.mxu0
      %v2345 = vadd.f32 0.0, %v2344
      %v2346 = vpop.f32.mrf.mxu0
      %v2347 = vadd.f32 0.0, %v2346
      %2348 = vmatmul.bf16.gmra.mxu0 %v2269
      %v2349 = vpop.f32.mrf.mxu0
      %v2350 = vadd.f32 0.0, %v2349
      %v2351 = vpop.f32.mrf.mxu0
      %v2352 = vadd.f32 0.0, %v2351
      %2353 = vmatmul.bf16.gmra.mxu0 %v2272
      %v2354 = vpop.f32.mrf.mxu0
      %v2355 = vadd.f32 0.0, %v2354
      %v2356 = vpop.f32.mrf.mxu0
      %v2357 = vadd.f32 0.0, %v2356
      %2358 = vmatmul.bf16.gmra.mxu0 %v2275
      %v2359 = vpop.f32.mrf.mxu0
      %v2360 = vadd.f32 0.0, %v2359
      %v2361 = vpop.f32.mrf.mxu0
      %v2362 = vadd.f32 0.0, %v2361
      %2363 = vmatmul.bf16.gmra.mxu0 %v2278
      %v2364 = vpop.f32.mrf.mxu0
      %v2365 = vadd.f32 0.0, %v2364
      %v2366 = vpop.f32.mrf.mxu0
      %v2367 = vadd.f32 0.0, %v2366
      %2368 = vmatmul.bf16.gmra.mxu0 %v2281
      %v2369 = vpop.f32.mrf.mxu0
      %v2370 = vadd.f32 0.0, %v2369
      %v2371 = vpop.f32.mrf.mxu0
      %v2372 = vadd.f32 0.0, %v2371
      %2373 = vmatmul.bf16.gmra.mxu0 %v2284
      %v2374 = vpop.f32.mrf.mxu0
      %v2375 = vadd.f32 0.0, %v2374
      %v2376 = vpop.f32.mrf.mxu0
      %v2377 = vadd.f32 0.0, %v2376
      %2378 = vmatmul.bf16.gmra.mxu0 %v2287
      %v2379 = vpop.f32.mrf.mxu0
      %v2380 = vadd.f32 0.0, %v2379
      %v2381 = vpop.f32.mrf.mxu0
      %v2382 = vadd.f32 0.0, %v2381
      %2383 = vmatmul.bf16.gmra.mxu0 %v2290
      %v2384 = vpop.f32.mrf.mxu0
      %v2385 = vadd.f32 0.0, %v2384
      %v2386 = vpop.f32.mrf.mxu0
      %v2387 = vadd.f32 0.0, %v2386
      %2388 = vdwg.mxu0
      %v2389 = vadd.f32 %v2127, %v2305
      %v2390 = vadd.f32 %v2128, %v2307
      %v2391 = vadd.f32 %v2129, %v2310
      %v2392 = vadd.f32 %v2130, %v2312
      %v2393 = vadd.f32 %v2131, %v2315
      %v2394 = vadd.f32 %v2132, %v2317
      %v2395 = vadd.f32 %v2133, %v2320
      %v2396 = vadd.f32 %v2134, %v2322
      %v2397 = vadd.f32 %v2135, %v2325
      %v2398 = vadd.f32 %v2136, %v2327
      %v2399 = vadd.f32 %v2137, %v2330
      %v2400 = vadd.f32 %v2138, %v2332
      %v2401 = vadd.f32 %v2139, %v2335
      %v2402 = vadd.f32 %v2140, %v2337
      %v2403 = vadd.f32 %v2141, %v2340
      %v2404 = vadd.f32 %v2142, %v2342
      %v2405 = vadd.f32 %v2143, %v2345
      %v2406 = vadd.f32 %v2144, %v2347
      %v2407 = vadd.f32 %v2145, %v2350
      %v2408 = vadd.f32 %v2146, %v2352
      %v2409 = vadd.f32 %v2147, %v2355
      %v2410 = vadd.f32 %v2148, %v2357
      %v2411 = vadd.f32 %v2149, %v2360
      %v2412 = vadd.f32 %v2150, %v2362
      %v2413 = vadd.f32 %v2151, %v2365
      %v2414 = vadd.f32 %v2152, %v2367
      %v2415 = vadd.f32 %v2153, %v2370
      %v2416 = vadd.f32 %v2154, %v2372
      %v2417 = vadd.f32 %v2155, %v2375
      %v2418 = vadd.f32 %v2156, %v2377
      %v2419 = vadd.f32 %v2157, %v2380
      %v2420 = vadd.f32 %v2158, %v2382
      %v2421 = vadd.f32 %v2159, %v2385
      %v2422 = vadd.f32 %v2160, %v2387
      %v2423 = vld [vmem:[%s222 + $0x10] sm:$0xc]
      %v2424 = vld [vmem:[%s222 + $0x14] sm:$0xf]
      %v2425 = vld [vmem:[%s222 + $0x18] sm:$0xf]
      %v2426 = vld [vmem:[%s222 + $0x1c] sm:$0xf]
      %v2427 = vld [vmem:[%s222 + $0x20] sm:$0xf]
      %v2428 = vld [vmem:[%s222 + $0x24] sm:$0xf]
      %v2429 = vld [vmem:[%s222 + $0x28] sm:$0xf]
      %v2430 = vld [vmem:[%s222 + $0x2c] sm:$0xf]
      %v2431 = vld [vmem:[%s222 + $0x30] sm:$0xf]
      %v2432 = vld [vmem:[%s222 + $0x34] sm:$0xf]
      %v2433 = vld [vmem:[%s222 + $0x38] sm:$0xf]
      %v2434 = vld [vmem:[%s222 + $0x3c] sm:$0xf]
      %v2435 = vld [vmem:[%s222 + $0x40] sm:$0xf]
      %v2436 = vld [vmem:[%s222 + $0x44] sm:$0xf]
      %v2437 = vld [vmem:[%s222 + $0x48] sm:$0xf]
      %v2438 = vld [vmem:[%s222 + $0x4c] sm:$0xf]
      %v2439 = vld [vmem:[%s222 + $0x50] sm:$0xf]
      %v2440 = vld [vmem:[%s222 + $0x54] sm:$0xf]
      %v2441 = vld [vmem:[%s222 + $0x58] sm:$0xf]
      %v2442 = vld [vmem:[%s222 + $0x5c] sm:$0xf]
      %v2443 = vld [vmem:[%s222 + $0x60] sm:$0xf]
      %v2444 = vld [vmem:[%s222 + $0x64] sm:$0xf]
      %v2445 = vld [vmem:[%s222 + $0x68] sm:$0xf]
      %v2446 = vld [vmem:[%s222 + $0x6c] sm:$0xf]
      %v2447 = vld [vmem:[%s222 + $0x70] sm:$0xf]
      %v2448 = vld [vmem:[%s222 + $0x74] sm:$0xf]
      %v2449 = vld [vmem:[%s222 + $0x78] sm:$0xf]
      %v2450 = vld [vmem:[%s222 + $0x7c] sm:$0xf]
      %v2451 = vld [vmem:[%s222 + $0x80] sm:$0xf]
      %v2452 = vld [vmem:[%s222 + $0x84] sm:$0xf]
      %v2453 = vld [vmem:[%s222 + $0x88] sm:$0xf]
      %v2454 = vld [vmem:[%s222 + $0x8c] sm:$0xf]
      %v2455 = vld [vmem:[%s222 + $0x90] sm:$0xf]
      %v2456 = vld [vmem:[%s222 + $0x94] sm:$0xf]
      %s2457 = scalar_lea.vmem %s226, 16
      %v2458 = vld [vmem:[%s2457] sm:$0x3]
      %v2493 = vunpack.c.l.b16 %v2423
      %v2494 = vunpack.c.l.b16 %v2424
      %v2495 = vunpack.c.l.b16 %v2425
      %v2496 = vunpack.c.l.b16 %v2426
      %v2497 = vunpack.c.l.b16 %v2427
      %v2498 = vunpack.c.l.b16 %v2428
      %v2499 = vunpack.c.l.b16 %v2429
      %v2500 = vunpack.c.l.b16 %v2430
      %v2501 = vunpack.c.l.b16 %v2431
      %v2502 = vunpack.c.l.b16 %v2432
      %v2503 = vunpack.c.l.b16 %v2433
      %v2504 = vunpack.c.l.b16 %v2434
      %v2505 = vunpack.c.l.b16 %v2435
      %v2506 = vunpack.c.l.b16 %v2436
      %v2507 = vunpack.c.l.b16 %v2437
      %v2508 = vunpack.c.l.b16 %v2438
      %v2509 = vunpack.c.l.b16 %v2439
      %v2510 = vunpack.c.l.b16 %v2440
      %v2511 = vunpack.c.l.b16 %v2441
      %v2512 = vunpack.c.l.b16 %v2442
      %v2513 = vunpack.c.l.b16 %v2443
      %v2514 = vunpack.c.l.b16 %v2444
      %v2515 = vunpack.c.l.b16 %v2445
      %v2516 = vunpack.c.l.b16 %v2446
      %v2517 = vunpack.c.l.b16 %v2447
      %v2518 = vunpack.c.l.b16 %v2448
      %v2519 = vunpack.c.l.b16 %v2449
      %v2520 = vunpack.c.l.b16 %v2450
      %v2521 = vunpack.c.l.b16 %v2451
      %v2522 = vunpack.c.l.b16 %v2452
      %v2523 = vunpack.c.l.b16 %v2453
      %v2524 = vunpack.c.l.b16 %v2454
      %v2525 = vunpack.c.l.b16 %v2455
      %v2526 = vunpack.c.l.b16 %v2456
      %v2527 = vpack.c.b16 %v2494, %v2493
      %v2528 = vpack.c.b16 %v2496, %v2495
      %v2529 = vpack.c.b16 %v2498, %v2497
      %v2530 = vpack.c.b16 %v2500, %v2499
      %v2531 = vpack.c.b16 %v2502, %v2501
      %v2532 = vpack.c.b16 %v2504, %v2503
      %v2533 = vpack.c.b16 %v2506, %v2505
      %v2534 = vpack.c.b16 %v2508, %v2507
      %v2535 = vpack.c.b16 %v2510, %v2509
      %v2536 = vpack.c.b16 %v2512, %v2511
      %v2537 = vpack.c.b16 %v2514, %v2513
      %v2538 = vpack.c.b16 %v2516, %v2515
      %v2539 = vpack.c.b16 %v2518, %v2517
      %v2540 = vpack.c.b16 %v2520, %v2519
      %v2541 = vpack.c.b16 %v2522, %v2521
      %v2542 = vpack.c.b16 %v2524, %v2523
      %v2543 = vpack.c.b16 %v2526, %v2525
      %v2544 = vrot.slane %v2527, 2
      %v2545 = vrot.slane %v2528, 2
      %v2546 = vsel %vm1945, %v2544, %v2545
      %v2547 = vrot.slane %v2529, 2
      %v2548 = vsel %vm1945, %v2545, %v2547
      %v2549 = vrot.slane %v2530, 2
      %v2550 = vsel %vm1945, %v2547, %v2549
      %v2551 = vrot.slane %v2531, 2
      %v2552 = vsel %vm1945, %v2549, %v2551
      %v2553 = vrot.slane %v2532, 2
      %v2554 = vsel %vm1945, %v2551, %v2553
      %v2555 = vrot.slane %v2533, 2
      %v2556 = vsel %vm1945, %v2553, %v2555
      %v2557 = vrot.slane %v2534, 2
      %v2558 = vsel %vm1945, %v2555, %v2557
      %v2559 = vrot.slane %v2535, 2
      %v2560 = vsel %vm1945, %v2557, %v2559
      %v2561 = vrot.slane %v2536, 2
      %v2562 = vsel %vm1945, %v2559, %v2561
      %v2563 = vrot.slane %v2537, 2
      %v2564 = vsel %vm1945, %v2561, %v2563
      %v2565 = vrot.slane %v2538, 2
      %v2566 = vsel %vm1945, %v2563, %v2565
      %v2567 = vrot.slane %v2539, 2
      %v2568 = vsel %vm1945, %v2565, %v2567
      %v2569 = vrot.slane %v2540, 2
      %v2570 = vsel %vm1945, %v2567, %v2569
      %v2571 = vrot.slane %v2541, 2
      %v2572 = vsel %vm1945, %v2569, %v2571
      %v2573 = vrot.slane %v2542, 2
      %v2574 = vsel %vm1945, %v2571, %v2573
      %v2575 = vrot.slane %v2543, 2
      %v2576 = vsel %vm1945, %v2573, %v2575
      %v2578 = vsel %vm494, %v2546, 0
      %v2581 = vsel %vm494, %v2548, 0
      %v2584 = vsel %vm494, %v2550, 0
      %v2587 = vsel %vm494, %v2552, 0
      %v2590 = vsel %vm494, %v2554, 0
      %v2593 = vsel %vm494, %v2556, 0
      %v2596 = vsel %vm494, %v2558, 0
      %v2599 = vsel %vm494, %v2560, 0
      %v2602 = vsel %vm494, %v2562, 0
      %v2605 = vsel %vm494, %v2564, 0
      %v2608 = vsel %vm494, %v2566, 0
      %v2611 = vsel %vm494, %v2568, 0
      %v2614 = vsel %vm494, %v2570, 0
      %v2617 = vsel %vm494, %v2572, 0
      %v2620 = vsel %vm494, %v2574, 0
      %v2623 = vsel %vm494, %v2576, 0
      %v2626 = vsel %vm494, %v2575, 0
      %v2629 = vsel %vm546, %v2458, 0
      %2631 = vmatpush.bf16.msra.mxu0 0
      %2632 = vmatpush.bf16.msra.mxu0 0
      %2633 = vmatpush.bf16.msra.mxu0 0
      %2634 = vmatpush.bf16.msra.mxu0 0
      %2635 = vmatpush.bf16.msra.mxu0 0
      %2636 = vmatpush.bf16.msra.mxu0 0
      %2637 = vmatpush.bf16.msra.mxu0 0
      %2638 = vmatpush.bf16.msra.mxu0 %v2629
      %2639 = vmatmul.bf16.gmra.mxu0 %v2578
      %v2640 = vpop.f32.mrf.mxu0
      %v2641 = vadd.f32 0.0, %v2640
      %v2642 = vpop.f32.mrf.mxu0
      %v2643 = vadd.f32 0.0, %v2642
      %2644 = vmatmul.bf16.gmra.mxu0 %v2581
      %v2645 = vpop.f32.mrf.mxu0
      %v2646 = vadd.f32 0.0, %v2645
      %v2647 = vpop.f32.mrf.mxu0
      %v2648 = vadd.f32 0.0, %v2647
      %2649 = vmatmul.bf16.gmra.mxu0 %v2584
      %v2650 = vpop.f32.mrf.mxu0
      %v2651 = vadd.f32 0.0, %v2650
      %v2652 = vpop.f32.mrf.mxu0
      %v2653 = vadd.f32 0.0, %v2652
      %2654 = vmatmul.bf16.gmra.mxu0 %v2587
      %v2655 = vpop.f32.mrf.mxu0
      %v2656 = vadd.f32 0.0, %v2655
      %v2657 = vpop.f32.mrf.mxu0
      %v2658 = vadd.f32 0.0, %v2657
      %2659 = vmatmul.bf16.gmra.mxu0 %v2590
      %v2660 = vpop.f32.mrf.mxu0
      %v2661 = vadd.f32 0.0, %v2660
      %v2662 = vpop.f32.mrf.mxu0
      %v2663 = vadd.f32 0.0, %v2662
      %2664 = vmatmul.bf16.gmra.mxu0 %v2593
      %v2665 = vpop.f32.mrf.mxu0
      %v2666 = vadd.f32 0.0, %v2665
      %v2667 = vpop.f32.mrf.mxu0
      %v2668 = vadd.f32 0.0, %v2667
      %2669 = vmatmul.bf16.gmra.mxu0 %v2596
      %v2670 = vpop.f32.mrf.mxu0
      %v2671 = vadd.f32 0.0, %v2670
      %v2672 = vpop.f32.mrf.mxu0
      %v2673 = vadd.f32 0.0, %v2672
      %2674 = vmatmul.bf16.gmra.mxu0 %v2599
      %v2675 = vpop.f32.mrf.mxu0
      %v2676 = vadd.f32 0.0, %v2675
      %v2677 = vpop.f32.mrf.mxu0
      %v2678 = vadd.f32 0.0, %v2677
      %2679 = vmatmul.bf16.gmra.mxu0 %v2602
      %v2680 = vpop.f32.mrf.mxu0
      %v2681 = vadd.f32 0.0, %v2680
      %v2682 = vpop.f32.mrf.mxu0
      %v2683 = vadd.f32 0.0, %v2682
      %2684 = vmatmul.bf16.gmra.mxu0 %v2605
      %v2685 = vpop.f32.mrf.mxu0
      %v2686 = vadd.f32 0.0, %v2685
      %v2687 = vpop.f32.mrf.mxu0
      %v2688 = vadd.f32 0.0, %v2687
      %2689 = vmatmul.bf16.gmra.mxu0 %v2608
      %v2690 = vpop.f32.mrf.mxu0
      %v2691 = vadd.f32 0.0, %v2690
      %v2692 = vpop.f32.mrf.mxu0
      %v2693 = vadd.f32 0.0, %v2692
      %2694 = vmatmul.bf16.gmra.mxu0 %v2611
      %v2695 = vpop.f32.mrf.mxu0
      %v2696 = vadd.f32 0.0, %v2695
      %v2697 = vpop.f32.mrf.mxu0
      %v2698 = vadd.f32 0.0, %v2697
      %2699 = vmatmul.bf16.gmra.mxu0 %v2614
      %v2700 = vpop.f32.mrf.mxu0
      %v2701 = vadd.f32 0.0, %v2700
      %v2702 = vpop.f32.mrf.mxu0
      %v2703 = vadd.f32 0.0, %v2702
      %2704 = vmatmul.bf16.gmra.mxu0 %v2617
      %v2705 = vpop.f32.mrf.mxu0
      %v2706 = vadd.f32 0.0, %v2705
      %v2707 = vpop.f32.mrf.mxu0
      %v2708 = vadd.f32 0.0, %v2707
      %2709 = vmatmul.bf16.gmra.mxu0 %v2620
      %v2710 = vpop.f32.mrf.mxu0
      %v2711 = vadd.f32 0.0, %v2710
      %v2712 = vpop.f32.mrf.mxu0
      %v2713 = vadd.f32 0.0, %v2712
      %2714 = vmatmul.bf16.gmra.mxu0 %v2623
      %v2715 = vpop.f32.mrf.mxu0
      %v2716 = vadd.f32 0.0, %v2715
      %v2717 = vpop.f32.mrf.mxu0
      %v2718 = vadd.f32 0.0, %v2717
      %2719 = vmatmul.bf16.gmra.mxu0 %v2626
      %v2720 = vpop.f32.mrf.mxu0
      %v2721 = vadd.f32 0.0, %v2720
      %v2722 = vpop.f32.mrf.mxu0
      %v2723 = vadd.f32 0.0, %v2722
      %2724 = vdwg.mxu0
      %v2725 = vadd.f32 %v2389, %v2641
      %v2726 = vadd.f32 %v2390, %v2643
      %v2727 = vadd.f32 %v2391, %v2646
      %v2728 = vadd.f32 %v2392, %v2648
      %v2729 = vadd.f32 %v2393, %v2651
      %v2730 = vadd.f32 %v2394, %v2653
      %v2731 = vadd.f32 %v2395, %v2656
      %v2732 = vadd.f32 %v2396, %v2658
      %v2733 = vadd.f32 %v2397, %v2661
      %v2734 = vadd.f32 %v2398, %v2663
      %v2735 = vadd.f32 %v2399, %v2666
      %v2736 = vadd.f32 %v2400, %v2668
      %v2737 = vadd.f32 %v2401, %v2671
      %v2738 = vadd.f32 %v2402, %v2673
      %v2739 = vadd.f32 %v2403, %v2676
      %v2740 = vadd.f32 %v2404, %v2678
      %v2741 = vadd.f32 %v2405, %v2681
      %v2742 = vadd.f32 %v2406, %v2683
      %v2743 = vadd.f32 %v2407, %v2686
      %v2744 = vadd.f32 %v2408, %v2688
      %v2745 = vadd.f32 %v2409, %v2691
      %v2746 = vadd.f32 %v2410, %v2693
      %v2747 = vadd.f32 %v2411, %v2696
      %v2748 = vadd.f32 %v2412, %v2698
      %v2749 = vadd.f32 %v2413, %v2701
      %v2750 = vadd.f32 %v2414, %v2703
      %v2751 = vadd.f32 %v2415, %v2706
      %v2752 = vadd.f32 %v2416, %v2708
      %v2753 = vadd.f32 %v2417, %v2711
      %v2754 = vadd.f32 %v2418, %v2713
      %v2755 = vadd.f32 %v2419, %v2716
      %v2756 = vadd.f32 %v2420, %v2718
      %v2757 = vadd.f32 %v2421, %v2721
      %v2758 = vadd.f32 %v2422, %v2723
      %s2759 = scalar_lea.vmem %s226, 18
      %v2760 = vld [vmem:[%s2759] sm:$0x3]
      %v2762 = vshrl.u32 %v2527, 16
      %v2764 = vrot.slane %v2762, 2
      %v2765 = vshll.u32 %v2527, 16
      %v2767 = vrot.slane %v2765, 3
      %v2768 = vor.u32 %v2764, %v2767
      %v2770 = vshrl.u32 %v2528, 16
      %v2772 = vrot.slane %v2770, 2
      %v2773 = vshll.u32 %v2528, 16
      %v2775 = vrot.slane %v2773, 3
      %v2776 = vor.u32 %v2772, %v2775
      %v2777 = vsel %vm2163, %v2768, %v2776
      %v2779 = vshrl.u32 %v2529, 16
      %v2781 = vrot.slane %v2779, 2
      %v2782 = vshll.u32 %v2529, 16
      %v2784 = vrot.slane %v2782, 3
      %v2785 = vor.u32 %v2781, %v2784
      %v2786 = vsel %vm2163, %v2776, %v2785
      %v2788 = vshrl.u32 %v2530, 16
      %v2790 = vrot.slane %v2788, 2
      %v2791 = vshll.u32 %v2530, 16
      %v2793 = vrot.slane %v2791, 3
      %v2794 = vor.u32 %v2790, %v2793
      %v2795 = vsel %vm2163, %v2785, %v2794
      %v2797 = vshrl.u32 %v2531, 16
      %v2799 = vrot.slane %v2797, 2
      %v2800 = vshll.u32 %v2531, 16
      %v2802 = vrot.slane %v2800, 3
      %v2803 = vor.u32 %v2799, %v2802
      %v2804 = vsel %vm2163, %v2794, %v2803
      %v2806 = vshrl.u32 %v2532, 16
      %v2808 = vrot.slane %v2806, 2
      %v2809 = vshll.u32 %v2532, 16
      %v2811 = vrot.slane %v2809, 3
      %v2812 = vor.u32 %v2808, %v2811
      %v2813 = vsel %vm2163, %v2803, %v2812
      %v2815 = vshrl.u32 %v2533, 16
      %v2817 = vrot.slane %v2815, 2
      %v2818 = vshll.u32 %v2533, 16
      %v2820 = vrot.slane %v2818, 3
      %v2821 = vor.u32 %v2817, %v2820
      %v2822 = vsel %vm2163, %v2812, %v2821
      %v2824 = vshrl.u32 %v2534, 16
      %v2826 = vrot.slane %v2824, 2
      %v2827 = vshll.u32 %v2534, 16
      %v2829 = vrot.slane %v2827, 3
      %v2830 = vor.u32 %v2826, %v2829
      %v2831 = vsel %vm2163, %v2821, %v2830
      %v2833 = vshrl.u32 %v2535, 16
      %v2835 = vrot.slane %v2833, 2
      %v2836 = vshll.u32 %v2535, 16
      %v2838 = vrot.slane %v2836, 3
      %v2839 = vor.u32 %v2835, %v2838
      %v2840 = vsel %vm2163, %v2830, %v2839
      %v2842 = vshrl.u32 %v2536, 16
      %v2844 = vrot.slane %v2842, 2
      %v2845 = vshll.u32 %v2536, 16
      %v2847 = vrot.slane %v2845, 3
      %v2848 = vor.u32 %v2844, %v2847
      %v2849 = vsel %vm2163, %v2839, %v2848
      %v2851 = vshrl.u32 %v2537, 16
      %v2853 = vrot.slane %v2851, 2
      %v2854 = vshll.u32 %v2537, 16
      %v2856 = vrot.slane %v2854, 3
      %v2857 = vor.u32 %v2853, %v2856
      %v2858 = vsel %vm2163, %v2848, %v2857
      %v2860 = vshrl.u32 %v2538, 16
      %v2862 = vrot.slane %v2860, 2
      %v2863 = vshll.u32 %v2538, 16
      %v2865 = vrot.slane %v2863, 3
      %v2866 = vor.u32 %v2862, %v2865
      %v2867 = vsel %vm2163, %v2857, %v2866
      %v2869 = vshrl.u32 %v2539, 16
      %v2871 = vrot.slane %v2869, 2
      %v2872 = vshll.u32 %v2539, 16
      %v2874 = vrot.slane %v2872, 3
      %v2875 = vor.u32 %v2871, %v2874
      %v2876 = vsel %vm2163, %v2866, %v2875
      %v2878 = vshrl.u32 %v2540, 16
      %v2880 = vrot.slane %v2878, 2
      %v2881 = vshll.u32 %v2540, 16
      %v2883 = vrot.slane %v2881, 3
      %v2884 = vor.u32 %v2880, %v2883
      %v2885 = vsel %vm2163, %v2875, %v2884
      %v2887 = vshrl.u32 %v2541, 16
      %v2889 = vrot.slane %v2887, 2
      %v2890 = vshll.u32 %v2541, 16
      %v2892 = vrot.slane %v2890, 3
      %v2893 = vor.u32 %v2889, %v2892
      %v2894 = vsel %vm2163, %v2884, %v2893
      %v2896 = vshrl.u32 %v2542, 16
      %v2898 = vrot.slane %v2896, 2
      %v2899 = vshll.u32 %v2542, 16
      %v2901 = vrot.slane %v2899, 3
      %v2902 = vor.u32 %v2898, %v2901
      %v2903 = vsel %vm2163, %v2893, %v2902
      %v2905 = vshrl.u32 %v2543, 16
      %v2907 = vrot.slane %v2905, 2
      %v2908 = vshll.u32 %v2543, 16
      %v2910 = vrot.slane %v2908, 3
      %v2911 = vor.u32 %v2907, %v2910
      %v2912 = vsel %vm2163, %v2902, %v2911
      %v2914 = vsel %vm494, %v2777, 0
      %v2917 = vsel %vm494, %v2786, 0
      %v2920 = vsel %vm494, %v2795, 0
      %v2923 = vsel %vm494, %v2804, 0
      %v2926 = vsel %vm494, %v2813, 0
      %v2929 = vsel %vm494, %v2822, 0
      %v2932 = vsel %vm494, %v2831, 0
      %v2935 = vsel %vm494, %v2840, 0
      %v2938 = vsel %vm494, %v2849, 0
      %v2941 = vsel %vm494, %v2858, 0
      %v2944 = vsel %vm494, %v2867, 0
      %v2947 = vsel %vm494, %v2876, 0
      %v2950 = vsel %vm494, %v2885, 0
      %v2953 = vsel %vm494, %v2894, 0
      %v2956 = vsel %vm494, %v2903, 0
      %v2959 = vsel %vm494, %v2912, 0
      %v2962 = vsel %vm494, %v2911, 0
      %v2965 = vsel %vm546, %v2760, 0
      %2967 = vmatpush.bf16.msra.mxu0 0
      %2968 = vmatpush.bf16.msra.mxu0 0
      %2969 = vmatpush.bf16.msra.mxu0 0
      %2970 = vmatpush.bf16.msra.mxu0 0
      %2971 = vmatpush.bf16.msra.mxu0 0
      %2972 = vmatpush.bf16.msra.mxu0 0
      %2973 = vmatpush.bf16.msra.mxu0 0
      %2974 = vmatpush.bf16.msra.mxu0 %v2965
      %2975 = vmatmul.bf16.gmra.mxu0 %v2914
      %v2976 = vpop.f32.mrf.mxu0
      %v2977 = vadd.f32 0.0, %v2976
      %v2978 = vpop.f32.mrf.mxu0
      %v2979 = vadd.f32 0.0, %v2978
      %2980 = vmatmul.bf16.gmra.mxu0 %v2917
      %v2981 = vpop.f32.mrf.mxu0
      %v2982 = vadd.f32 0.0, %v2981
      %v2983 = vpop.f32.mrf.mxu0
      %v2984 = vadd.f32 0.0, %v2983
      %2985 = vmatmul.bf16.gmra.mxu0 %v2920
      %v2986 = vpop.f32.mrf.mxu0
      %v2987 = vadd.f32 0.0, %v2986
      %v2988 = vpop.f32.mrf.mxu0
      %v2989 = vadd.f32 0.0, %v2988
      %2990 = vmatmul.bf16.gmra.mxu0 %v2923
      %v2991 = vpop.f32.mrf.mxu0
      %v2992 = vadd.f32 0.0, %v2991
      %v2993 = vpop.f32.mrf.mxu0
      %v2994 = vadd.f32 0.0, %v2993
      %2995 = vmatmul.bf16.gmra.mxu0 %v2926
      %v2996 = vpop.f32.mrf.mxu0
      %v2997 = vadd.f32 0.0, %v2996
      %v2998 = vpop.f32.mrf.mxu0
      %v2999 = vadd.f32 0.0, %v2998
      %3000 = vmatmul.bf16.gmra.mxu0 %v2929
      %v3001 = vpop.f32.mrf.mxu0
      %v3002 = vadd.f32 0.0, %v3001
      %v3003 = vpop.f32.mrf.mxu0
      %v3004 = vadd.f32 0.0, %v3003
      %3005 = vmatmul.bf16.gmra.mxu0 %v2932
      %v3006 = vpop.f32.mrf.mxu0
      %v3007 = vadd.f32 0.0, %v3006
      %v3008 = vpop.f32.mrf.mxu0
      %v3009 = vadd.f32 0.0, %v3008
      %3010 = vmatmul.bf16.gmra.mxu0 %v2935
      %v3011 = vpop.f32.mrf.mxu0
      %v3012 = vadd.f32 0.0, %v3011
      %v3013 = vpop.f32.mrf.mxu0
      %v3014 = vadd.f32 0.0, %v3013
      %3015 = vmatmul.bf16.gmra.mxu0 %v2938
      %v3016 = vpop.f32.mrf.mxu0
      %v3017 = vadd.f32 0.0, %v3016
      %v3018 = vpop.f32.mrf.mxu0
      %v3019 = vadd.f32 0.0, %v3018
      %3020 = vmatmul.bf16.gmra.mxu0 %v2941
      %v3021 = vpop.f32.mrf.mxu0
      %v3022 = vadd.f32 0.0, %v3021
      %v3023 = vpop.f32.mrf.mxu0
      %v3024 = vadd.f32 0.0, %v3023
      %3025 = vmatmul.bf16.gmra.mxu0 %v2944
      %v3026 = vpop.f32.mrf.mxu0
      %v3027 = vadd.f32 0.0, %v3026
      %v3028 = vpop.f32.mrf.mxu0
      %v3029 = vadd.f32 0.0, %v3028
      %3030 = vmatmul.bf16.gmra.mxu0 %v2947
      %v3031 = vpop.f32.mrf.mxu0
      %v3032 = vadd.f32 0.0, %v3031
      %v3033 = vpop.f32.mrf.mxu0
      %v3034 = vadd.f32 0.0, %v3033
      %3035 = vmatmul.bf16.gmra.mxu0 %v2950
      %v3036 = vpop.f32.mrf.mxu0
      %v3037 = vadd.f32 0.0, %v3036
      %v3038 = vpop.f32.mrf.mxu0
      %v3039 = vadd.f32 0.0, %v3038
      %3040 = vmatmul.bf16.gmra.mxu0 %v2953
      %v3041 = vpop.f32.mrf.mxu0
      %v3042 = vadd.f32 0.0, %v3041
      %v3043 = vpop.f32.mrf.mxu0
      %v3044 = vadd.f32 0.0, %v3043
      %3045 = vmatmul.bf16.gmra.mxu0 %v2956
      %v3046 = vpop.f32.mrf.mxu0
      %v3047 = vadd.f32 0.0, %v3046
      %v3048 = vpop.f32.mrf.mxu0
      %v3049 = vadd.f32 0.0, %v3048
      %3050 = vmatmul.bf16.gmra.mxu0 %v2959
      %v3051 = vpop.f32.mrf.mxu0
      %v3052 = vadd.f32 0.0, %v3051
      %v3053 = vpop.f32.mrf.mxu0
      %v3054 = vadd.f32 0.0, %v3053
      %3055 = vmatmul.bf16.gmra.mxu0 %v2962
      %v3056 = vpop.f32.mrf.mxu0
      %v3057 = vadd.f32 0.0, %v3056
      %v3058 = vpop.f32.mrf.mxu0
      %v3059 = vadd.f32 0.0, %v3058
      %3060 = vdwg.mxu0
      %v3061 = vadd.f32 %v2725, %v2977
      %v3062 = vadd.f32 %v2726, %v2979
      %v3063 = vadd.f32 %v2727, %v2982
      %v3064 = vadd.f32 %v2728, %v2984
      %v3065 = vadd.f32 %v2729, %v2987
      %v3066 = vadd.f32 %v2730, %v2989
      %v3067 = vadd.f32 %v2731, %v2992
      %v3068 = vadd.f32 %v2732, %v2994
      %v3069 = vadd.f32 %v2733, %v2997
      %v3070 = vadd.f32 %v2734, %v2999
      %v3071 = vadd.f32 %v2735, %v3002
      %v3072 = vadd.f32 %v2736, %v3004
      %v3073 = vadd.f32 %v2737, %v3007
      %v3074 = vadd.f32 %v2738, %v3009
      %v3075 = vadd.f32 %v2739, %v3012
      %v3076 = vadd.f32 %v2740, %v3014
      %v3077 = vadd.f32 %v2741, %v3017
      %v3078 = vadd.f32 %v2742, %v3019
      %v3079 = vadd.f32 %v2743, %v3022
      %v3080 = vadd.f32 %v2744, %v3024
      %v3081 = vadd.f32 %v2745, %v3027
      %v3082 = vadd.f32 %v2746, %v3029
      %v3083 = vadd.f32 %v2747, %v3032
      %v3084 = vadd.f32 %v2748, %v3034
      %v3085 = vadd.f32 %v2749, %v3037
      %v3086 = vadd.f32 %v2750, %v3039
      %v3087 = vadd.f32 %v2751, %v3042
      %v3088 = vadd.f32 %v2752, %v3044
      %v3089 = vadd.f32 %v2753, %v3047
      %v3090 = vadd.f32 %v2754, %v3049
      %v3091 = vadd.f32 %v2755, %v3052
      %v3092 = vadd.f32 %v2756, %v3054
      %v3093 = vadd.f32 %v2757, %v3057
      %v3094 = vadd.f32 %v2758, %v3059
      %v3095 = vld [vmem:[%s222 + $0x10] sm:$0x8]
      %v3096 = vld [vmem:[%s222 + $0x14] sm:$0xf]
      %v3097 = vld [vmem:[%s222 + $0x18] sm:$0xf]
      %v3098 = vld [vmem:[%s222 + $0x1c] sm:$0xf]
      %v3099 = vld [vmem:[%s222 + $0x20] sm:$0xf]
      %v3100 = vld [vmem:[%s222 + $0x24] sm:$0xf]
      %v3101 = vld [vmem:[%s222 + $0x28] sm:$0xf]
      %v3102 = vld [vmem:[%s222 + $0x2c] sm:$0xf]
      %v3103 = vld [vmem:[%s222 + $0x30] sm:$0xf]
      %v3104 = vld [vmem:[%s222 + $0x34] sm:$0xf]
      %v3105 = vld [vmem:[%s222 + $0x38] sm:$0xf]
      %v3106 = vld [vmem:[%s222 + $0x3c] sm:$0xf]
      %v3107 = vld [vmem:[%s222 + $0x40] sm:$0xf]
      %v3108 = vld [vmem:[%s222 + $0x44] sm:$0xf]
      %v3109 = vld [vmem:[%s222 + $0x48] sm:$0xf]
      %v3110 = vld [vmem:[%s222 + $0x4c] sm:$0xf]
      %v3111 = vld [vmem:[%s222 + $0x50] sm:$0xf]
      %v3112 = vld [vmem:[%s222 + $0x54] sm:$0xf]
      %v3113 = vld [vmem:[%s222 + $0x58] sm:$0xf]
      %v3114 = vld [vmem:[%s222 + $0x5c] sm:$0xf]
      %v3115 = vld [vmem:[%s222 + $0x60] sm:$0xf]
      %v3116 = vld [vmem:[%s222 + $0x64] sm:$0xf]
      %v3117 = vld [vmem:[%s222 + $0x68] sm:$0xf]
      %v3118 = vld [vmem:[%s222 + $0x6c] sm:$0xf]
      %v3119 = vld [vmem:[%s222 + $0x70] sm:$0xf]
      %v3120 = vld [vmem:[%s222 + $0x74] sm:$0xf]
      %v3121 = vld [vmem:[%s222 + $0x78] sm:$0xf]
      %v3122 = vld [vmem:[%s222 + $0x7c] sm:$0xf]
      %v3123 = vld [vmem:[%s222 + $0x80] sm:$0xf]
      %v3124 = vld [vmem:[%s222 + $0x84] sm:$0xf]
      %v3125 = vld [vmem:[%s222 + $0x88] sm:$0xf]
      %v3126 = vld [vmem:[%s222 + $0x8c] sm:$0xf]
      %v3127 = vld [vmem:[%s222 + $0x90] sm:$0xf]
      %v3128 = vld [vmem:[%s222 + $0x94] sm:$0xf]
      %v3129 = vld [vmem:[%s222 + $0x98] sm:$0x1]
      %s3130 = scalar_lea.vmem %s226, 20
      %v3131 = vld [vmem:[%s3130] sm:$0x3]
      %v3167 = vunpack.c.l.b16 %v3095
      %v3168 = vunpack.c.l.b16 %v3096
      %v3169 = vunpack.c.l.b16 %v3097
      %v3170 = vunpack.c.l.b16 %v3098
      %v3171 = vunpack.c.l.b16 %v3099
      %v3172 = vunpack.c.l.b16 %v3100
      %v3173 = vunpack.c.l.b16 %v3101
      %v3174 = vunpack.c.l.b16 %v3102
      %v3175 = vunpack.c.l.b16 %v3103
      %v3176 = vunpack.c.l.b16 %v3104
      %v3177 = vunpack.c.l.b16 %v3105
      %v3178 = vunpack.c.l.b16 %v3106
      %v3179 = vunpack.c.l.b16 %v3107
      %v3180 = vunpack.c.l.b16 %v3108
      %v3181 = vunpack.c.l.b16 %v3109
      %v3182 = vunpack.c.l.b16 %v3110
      %v3183 = vunpack.c.l.b16 %v3111
      %v3184 = vunpack.c.l.b16 %v3112
      %v3185 = vunpack.c.l.b16 %v3113
      %v3186 = vunpack.c.l.b16 %v3114
      %v3187 = vunpack.c.l.b16 %v3115
      %v3188 = vunpack.c.l.b16 %v3116
      %v3189 = vunpack.c.l.b16 %v3117
      %v3190 = vunpack.c.l.b16 %v3118
      %v3191 = vunpack.c.l.b16 %v3119
      %v3192 = vunpack.c.l.b16 %v3120
      %v3193 = vunpack.c.l.b16 %v3121
      %v3194 = vunpack.c.l.b16 %v3122
      %v3195 = vunpack.c.l.b16 %v3123
      %v3196 = vunpack.c.l.b16 %v3124
      %v3197 = vunpack.c.l.b16 %v3125
      %v3198 = vunpack.c.l.b16 %v3126
      %v3199 = vunpack.c.l.b16 %v3127
      %v3200 = vunpack.c.l.b16 %v3128
      %v3201 = vunpack.c.l.b16 %v3129
      %v3202 = vpack.c.b16 %v3168, %v3167
      %v3203 = vpack.c.b16 %v3170, %v3169
      %v3204 = vpack.c.b16 %v3172, %v3171
      %v3205 = vpack.c.b16 %v3174, %v3173
      %v3206 = vpack.c.b16 %v3176, %v3175
      %v3207 = vpack.c.b16 %v3178, %v3177
      %v3208 = vpack.c.b16 %v3180, %v3179
      %v3209 = vpack.c.b16 %v3182, %v3181
      %v3210 = vpack.c.b16 %v3184, %v3183
      %v3211 = vpack.c.b16 %v3186, %v3185
      %v3212 = vpack.c.b16 %v3188, %v3187
      %v3213 = vpack.c.b16 %v3190, %v3189
      %v3214 = vpack.c.b16 %v3192, %v3191
      %v3215 = vpack.c.b16 %v3194, %v3193
      %v3216 = vpack.c.b16 %v3196, %v3195
      %v3217 = vpack.c.b16 %v3198, %v3197
      %v3218 = vpack.c.b16 %v3200, %v3199
      %v3219 = vpack.c.b16 %v3201, %v3201
      %vm3220 = vcmask 1044480
      %v3221 = vrot.slane %v3202, 3
      %v3222 = vrot.slane %v3203, 3
      %v3223 = vsel %vm3220, %v3221, %v3222
      %v3224 = vrot.slane %v3204, 3
      %v3225 = vsel %vm3220, %v3222, %v3224
      %v3226 = vrot.slane %v3205, 3
      %v3227 = vsel %vm3220, %v3224, %v3226
      %v3228 = vrot.slane %v3206, 3
      %v3229 = vsel %vm3220, %v3226, %v3228
      %v3230 = vrot.slane %v3207, 3
      %v3231 = vsel %vm3220, %v3228, %v3230
      %v3232 = vrot.slane %v3208, 3
      %v3233 = vsel %vm3220, %v3230, %v3232
      %v3234 = vrot.slane %v3209, 3
      %v3235 = vsel %vm3220, %v3232, %v3234
      %v3236 = vrot.slane %v3210, 3
      %v3237 = vsel %vm3220, %v3234, %v3236
      %v3238 = vrot.slane %v3211, 3
      %v3239 = vsel %vm3220, %v3236, %v3238
      %v3240 = vrot.slane %v3212, 3
      %v3241 = vsel %vm3220, %v3238, %v3240
      %v3242 = vrot.slane %v3213, 3
      %v3243 = vsel %vm3220, %v3240, %v3242
      %v3244 = vrot.slane %v3214, 3
      %v3245 = vsel %vm3220, %v3242, %v3244
      %v3246 = vrot.slane %v3215, 3
      %v3247 = vsel %vm3220, %v3244, %v3246
      %v3248 = vrot.slane %v3216, 3
      %v3249 = vsel %vm3220, %v3246, %v3248
      %v3250 = vrot.slane %v3217, 3
      %v3251 = vsel %vm3220, %v3248, %v3250
      %v3252 = vrot.slane %v3218, 3
      %v3253 = vsel %vm3220, %v3250, %v3252
      %v3254 = vrot.slane %v3219, 3
      %v3255 = vsel %vm3220, %v3252, %v3254
      %v3257 = vsel %vm494, %v3223, 0
      %v3260 = vsel %vm494, %v3225, 0
      %v3263 = vsel %vm494, %v3227, 0
      %v3266 = vsel %vm494, %v3229, 0
      %v3269 = vsel %vm494, %v3231, 0
      %v3272 = vsel %vm494, %v3233, 0
      %v3275 = vsel %vm494, %v3235, 0
      %v3278 = vsel %vm494, %v3237, 0
      %v3281 = vsel %vm494, %v3239, 0
      %v3284 = vsel %vm494, %v3241, 0
      %v3287 = vsel %vm494, %v3243, 0
      %v3290 = vsel %vm494, %v3245, 0
      %v3293 = vsel %vm494, %v3247, 0
      %v3296 = vsel %vm494, %v3249, 0
      %v3299 = vsel %vm494, %v3251, 0
      %v3302 = vsel %vm494, %v3253, 0
      %v3305 = vsel %vm494, %v3255, 0
      %v3308 = vsel %vm546, %v3131, 0
      %3310 = vmatpush.bf16.msra.mxu0 0
      %3311 = vmatpush.bf16.msra.mxu0 0
      %3312 = vmatpush.bf16.msra.mxu0 0
      %3313 = vmatpush.bf16.msra.mxu0 0
      %3314 = vmatpush.bf16.msra.mxu0 0
      %3315 = vmatpush.bf16.msra.mxu0 0
      %3316 = vmatpush.bf16.msra.mxu0 0
      %3317 = vmatpush.bf16.msra.mxu0 %v3308
      %3318 = vmatmul.bf16.gmra.mxu0 %v3257
      %v3319 = vpop.f32.mrf.mxu0
      %v3320 = vadd.f32 0.0, %v3319
      %v3321 = vpop.f32.mrf.mxu0
      %v3322 = vadd.f32 0.0, %v3321
      %3323 = vmatmul.bf16.gmra.mxu0 %v3260
      %v3324 = vpop.f32.mrf.mxu0
      %v3325 = vadd.f32 0.0, %v3324
      %v3326 = vpop.f32.mrf.mxu0
      %v3327 = vadd.f32 0.0, %v3326
      %3328 = vmatmul.bf16.gmra.mxu0 %v3263
      %v3329 = vpop.f32.mrf.mxu0
      %v3330 = vadd.f32 0.0, %v3329
      %v3331 = vpop.f32.mrf.mxu0
      %v3332 = vadd.f32 0.0, %v3331
      %3333 = vmatmul.bf16.gmra.mxu0 %v3266
      %v3334 = vpop.f32.mrf.mxu0
      %v3335 = vadd.f32 0.0, %v3334
      %v3336 = vpop.f32.mrf.mxu0
      %v3337 = vadd.f32 0.0, %v3336
      %3338 = vmatmul.bf16.gmra.mxu0 %v3269
      %v3339 = vpop.f32.mrf.mxu0
      %v3340 = vadd.f32 0.0, %v3339
      %v3341 = vpop.f32.mrf.mxu0
      %v3342 = vadd.f32 0.0, %v3341
      %3343 = vmatmul.bf16.gmra.mxu0 %v3272
      %v3344 = vpop.f32.mrf.mxu0
      %v3345 = vadd.f32 0.0, %v3344
      %v3346 = vpop.f32.mrf.mxu0
      %v3347 = vadd.f32 0.0, %v3346
      %3348 = vmatmul.bf16.gmra.mxu0 %v3275
      %v3349 = vpop.f32.mrf.mxu0
      %v3350 = vadd.f32 0.0, %v3349
      %v3351 = vpop.f32.mrf.mxu0
      %v3352 = vadd.f32 0.0, %v3351
      %3353 = vmatmul.bf16.gmra.mxu0 %v3278
      %v3354 = vpop.f32.mrf.mxu0
      %v3355 = vadd.f32 0.0, %v3354
      %v3356 = vpop.f32.mrf.mxu0
      %v3357 = vadd.f32 0.0, %v3356
      %3358 = vmatmul.bf16.gmra.mxu0 %v3281
      %v3359 = vpop.f32.mrf.mxu0
      %v3360 = vadd.f32 0.0, %v3359
      %v3361 = vpop.f32.mrf.mxu0
      %v3362 = vadd.f32 0.0, %v3361
      %3363 = vmatmul.bf16.gmra.mxu0 %v3284
      %v3364 = vpop.f32.mrf.mxu0
      %v3365 = vadd.f32 0.0, %v3364
      %v3366 = vpop.f32.mrf.mxu0
      %v3367 = vadd.f32 0.0, %v3366
      %3368 = vmatmul.bf16.gmra.mxu0 %v3287
      %v3369 = vpop.f32.mrf.mxu0
      %v3370 = vadd.f32 0.0, %v3369
      %v3371 = vpop.f32.mrf.mxu0
      %v3372 = vadd.f32 0.0, %v3371
      %3373 = vmatmul.bf16.gmra.mxu0 %v3290
      %v3374 = vpop.f32.mrf.mxu0
      %v3375 = vadd.f32 0.0, %v3374
      %v3376 = vpop.f32.mrf.mxu0
      %v3377 = vadd.f32 0.0, %v3376
      %3378 = vmatmul.bf16.gmra.mxu0 %v3293
      %v3379 = vpop.f32.mrf.mxu0
      %v3380 = vadd.f32 0.0, %v3379
      %v3381 = vpop.f32.mrf.mxu0
      %v3382 = vadd.f32 0.0, %v3381
      %3383 = vmatmul.bf16.gmra.mxu0 %v3296
      %v3384 = vpop.f32.mrf.mxu0
      %v3385 = vadd.f32 0.0, %v3384
      %v3386 = vpop.f32.mrf.mxu0
      %v3387 = vadd.f32 0.0, %v3386
      %3388 = vmatmul.bf16.gmra.mxu0 %v3299
      %v3389 = vpop.f32.mrf.mxu0
      %v3390 = vadd.f32 0.0, %v3389
      %v3391 = vpop.f32.mrf.mxu0
      %v3392 = vadd.f32 0.0, %v3391
      %3393 = vmatmul.bf16.gmra.mxu0 %v3302
      %v3394 = vpop.f32.mrf.mxu0
      %v3395 = vadd.f32 0.0, %v3394
      %v3396 = vpop.f32.mrf.mxu0
      %v3397 = vadd.f32 0.0, %v3396
      %3398 = vmatmul.bf16.gmra.mxu0 %v3305
      %v3399 = vpop.f32.mrf.mxu0
      %v3400 = vadd.f32 0.0, %v3399
      %v3401 = vpop.f32.mrf.mxu0
      %v3402 = vadd.f32 0.0, %v3401
      %3403 = vdwg.mxu0
      %v3404 = vadd.f32 %v3061, %v3320
      %v3405 = vadd.f32 %v3062, %v3322
      %v3406 = vadd.f32 %v3063, %v3325
      %v3407 = vadd.f32 %v3064, %v3327
      %v3408 = vadd.f32 %v3065, %v3330
      %v3409 = vadd.f32 %v3066, %v3332
      %v3410 = vadd.f32 %v3067, %v3335
      %v3411 = vadd.f32 %v3068, %v3337
      %v3412 = vadd.f32 %v3069, %v3340
      %v3413 = vadd.f32 %v3070, %v3342
      %v3414 = vadd.f32 %v3071, %v3345
      %v3415 = vadd.f32 %v3072, %v3347
      %v3416 = vadd.f32 %v3073, %v3350
      %v3417 = vadd.f32 %v3074, %v3352
      %v3418 = vadd.f32 %v3075, %v3355
      %v3419 = vadd.f32 %v3076, %v3357
      %v3420 = vadd.f32 %v3077, %v3360
      %v3421 = vadd.f32 %v3078, %v3362
      %v3422 = vadd.f32 %v3079, %v3365
      %v3423 = vadd.f32 %v3080, %v3367
      %v3424 = vadd.f32 %v3081, %v3370
      %v3425 = vadd.f32 %v3082, %v3372
      %v3426 = vadd.f32 %v3083, %v3375
      %v3427 = vadd.f32 %v3084, %v3377
      %v3428 = vadd.f32 %v3085, %v3380
      %v3429 = vadd.f32 %v3086, %v3382
      %v3430 = vadd.f32 %v3087, %v3385
      %v3431 = vadd.f32 %v3088, %v3387
      %v3432 = vadd.f32 %v3089, %v3390
      %v3433 = vadd.f32 %v3090, %v3392
      %v3434 = vadd.f32 %v3091, %v3395
      %v3435 = vadd.f32 %v3092, %v3397
      %v3436 = vadd.f32 %v3093, %v3400
      %v3437 = vadd.f32 %v3094, %v3402
      %s3438 = scalar_lea.vmem %s226, 22
      %v3439 = vld [vmem:[%s3438] sm:$0x3]
      %vm3440 = vsmask.f32 4352
      %v3442 = vshrl.u32 %v3202, 16
      %v3444 = vrot.slane %v3442, 3
      %v3445 = vshll.u32 %v3202, 16
      %v3447 = vrot.slane %v3445, 4
      %v3448 = vor.u32 %v3444, %v3447
      %v3450 = vshrl.u32 %v3203, 16
      %v3452 = vrot.slane %v3450, 3
      %v3453 = vshll.u32 %v3203, 16
      %v3455 = vrot.slane %v3453, 4
      %v3456 = vor.u32 %v3452, %v3455
      %v3457 = vsel %vm3440, %v3448, %v3456
      %v3459 = vshrl.u32 %v3204, 16
      %v3461 = vrot.slane %v3459, 3
      %v3462 = vshll.u32 %v3204, 16
      %v3464 = vrot.slane %v3462, 4
      %v3465 = vor.u32 %v3461, %v3464
      %v3466 = vsel %vm3440, %v3456, %v3465
      %v3468 = vshrl.u32 %v3205, 16
      %v3470 = vrot.slane %v3468, 3
      %v3471 = vshll.u32 %v3205, 16
      %v3473 = vrot.slane %v3471, 4
      %v3474 = vor.u32 %v3470, %v3473
      %v3475 = vsel %vm3440, %v3465, %v3474
      %v3477 = vshrl.u32 %v3206, 16
      %v3479 = vrot.slane %v3477, 3
      %v3480 = vshll.u32 %v3206, 16
      %v3482 = vrot.slane %v3480, 4
      %v3483 = vor.u32 %v3479, %v3482
      %v3484 = vsel %vm3440, %v3474, %v3483
      %v3486 = vshrl.u32 %v3207, 16
      %v3488 = vrot.slane %v3486, 3
      %v3489 = vshll.u32 %v3207, 16
      %v3491 = vrot.slane %v3489, 4
      %v3492 = vor.u32 %v3488, %v3491
      %v3493 = vsel %vm3440, %v3483, %v3492
      %v3495 = vshrl.u32 %v3208, 16
      %v3497 = vrot.slane %v3495, 3
      %v3498 = vshll.u32 %v3208, 16
      %v3500 = vrot.slane %v3498, 4
      %v3501 = vor.u32 %v3497, %v3500
      %v3502 = vsel %vm3440, %v3492, %v3501
      %v3504 = vshrl.u32 %v3209, 16
      %v3506 = vrot.slane %v3504, 3
      %v3507 = vshll.u32 %v3209, 16
      %v3509 = vrot.slane %v3507, 4
      %v3510 = vor.u32 %v3506, %v3509
      %v3511 = vsel %vm3440, %v3501, %v3510
      %v3513 = vshrl.u32 %v3210, 16
      %v3515 = vrot.slane %v3513, 3
      %v3516 = vshll.u32 %v3210, 16
      %v3518 = vrot.slane %v3516, 4
      %v3519 = vor.u32 %v3515, %v3518
      %v3520 = vsel %vm3440, %v3510, %v3519
      %v3522 = vshrl.u32 %v3211, 16
      %v3524 = vrot.slane %v3522, 3
      %v3525 = vshll.u32 %v3211, 16
      %v3527 = vrot.slane %v3525, 4
      %v3528 = vor.u32 %v3524, %v3527
      %v3529 = vsel %vm3440, %v3519, %v3528
      %v3531 = vshrl.u32 %v3212, 16
      %v3533 = vrot.slane %v3531, 3
      %v3534 = vshll.u32 %v3212, 16
      %v3536 = vrot.slane %v3534, 4
      %v3537 = vor.u32 %v3533, %v3536
      %v3538 = vsel %vm3440, %v3528, %v3537
      %v3540 = vshrl.u32 %v3213, 16
      %v3542 = vrot.slane %v3540, 3
      %v3543 = vshll.u32 %v3213, 16
      %v3545 = vrot.slane %v3543, 4
      %v3546 = vor.u32 %v3542, %v3545
      %v3547 = vsel %vm3440, %v3537, %v3546
      %v3549 = vshrl.u32 %v3214, 16
      %v3551 = vrot.slane %v3549, 3
      %v3552 = vshll.u32 %v3214, 16
      %v3554 = vrot.slane %v3552, 4
      %v3555 = vor.u32 %v3551, %v3554
      %v3556 = vsel %vm3440, %v3546, %v3555
      %v3558 = vshrl.u32 %v3215, 16
      %v3560 = vrot.slane %v3558, 3
      %v3561 = vshll.u32 %v3215, 16
      %v3563 = vrot.slane %v3561, 4
      %v3564 = vor.u32 %v3560, %v3563
      %v3565 = vsel %vm3440, %v3555, %v3564
      %v3567 = vshrl.u32 %v3216, 16
      %v3569 = vrot.slane %v3567, 3
      %v3570 = vshll.u32 %v3216, 16
      %v3572 = vrot.slane %v3570, 4
      %v3573 = vor.u32 %v3569, %v3572
      %v3574 = vsel %vm3440, %v3564, %v3573
      %v3576 = vshrl.u32 %v3217, 16
      %v3578 = vrot.slane %v3576, 3
      %v3579 = vshll.u32 %v3217, 16
      %v3581 = vrot.slane %v3579, 4
      %v3582 = vor.u32 %v3578, %v3581
      %v3583 = vsel %vm3440, %v3573, %v3582
      %v3585 = vshrl.u32 %v3218, 16
      %v3587 = vrot.slane %v3585, 3
      %v3588 = vshll.u32 %v3218, 16
      %v3590 = vrot.slane %v3588, 4
      %v3591 = vor.u32 %v3587, %v3590
      %v3592 = vsel %vm3440, %v3582, %v3591
      %v3594 = vshrl.u32 %v3219, 16
      %v3596 = vrot.slane %v3594, 3
      %v3597 = vshll.u32 %v3219, 16
      %v3599 = vrot.slane %v3597, 4
      %v3600 = vor.u32 %v3596, %v3599
      %v3601 = vsel %vm3440, %v3591, %v3600
      %v3603 = vsel %vm494, %v3457, 0
      %v3606 = vsel %vm494, %v3466, 0
      %v3609 = vsel %vm494, %v3475, 0
      %v3612 = vsel %vm494, %v3484, 0
      %v3615 = vsel %vm494, %v3493, 0
      %v3618 = vsel %vm494, %v3502, 0
      %v3621 = vsel %vm494, %v3511, 0
      %v3624 = vsel %vm494, %v3520, 0
      %v3627 = vsel %vm494, %v3529, 0
      %v3630 = vsel %vm494, %v3538, 0
      %v3633 = vsel %vm494, %v3547, 0
      %v3636 = vsel %vm494, %v3556, 0
      %v3639 = vsel %vm494, %v3565, 0
      %v3642 = vsel %vm494, %v3574, 0
      %v3645 = vsel %vm494, %v3583, 0
      %v3648 = vsel %vm494, %v3592, 0
      %v3651 = vsel %vm494, %v3601, 0
      %v3654 = vsel %vm546, %v3439, 0
      %3656 = vmatpush.bf16.msra.mxu0 0
      %3657 = vmatpush.bf16.msra.mxu0 0
      %3658 = vmatpush.bf16.msra.mxu0 0
      %3659 = vmatpush.bf16.msra.mxu0 0
      %3660 = vmatpush.bf16.msra.mxu0 0
      %3661 = vmatpush.bf16.msra.mxu0 0
      %3662 = vmatpush.bf16.msra.mxu0 0
      %3663 = vmatpush.bf16.msra.mxu0 %v3654
      %3664 = vmatmul.bf16.gmra.mxu0 %v3603
      %v3665 = vpop.f32.mrf.mxu0
      %v3666 = vadd.f32 0.0, %v3665
      %v3667 = vpop.f32.mrf.mxu0
      %v3668 = vadd.f32 0.0, %v3667
      %3669 = vmatmul.bf16.gmra.mxu0 %v3606
      %v3670 = vpop.f32.mrf.mxu0
      %v3671 = vadd.f32 0.0, %v3670
      %v3672 = vpop.f32.mrf.mxu0
      %v3673 = vadd.f32 0.0, %v3672
      %3674 = vmatmul.bf16.gmra.mxu0 %v3609
      %v3675 = vpop.f32.mrf.mxu0
      %v3676 = vadd.f32 0.0, %v3675
      %v3677 = vpop.f32.mrf.mxu0
      %v3678 = vadd.f32 0.0, %v3677
      %3679 = vmatmul.bf16.gmra.mxu0 %v3612
      %v3680 = vpop.f32.mrf.mxu0
      %v3681 = vadd.f32 0.0, %v3680
      %v3682 = vpop.f32.mrf.mxu0
      %v3683 = vadd.f32 0.0, %v3682
      %3684 = vmatmul.bf16.gmra.mxu0 %v3615
      %v3685 = vpop.f32.mrf.mxu0
      %v3686 = vadd.f32 0.0, %v3685
      %v3687 = vpop.f32.mrf.mxu0
      %v3688 = vadd.f32 0.0, %v3687
      %3689 = vmatmul.bf16.gmra.mxu0 %v3618
      %v3690 = vpop.f32.mrf.mxu0
      %v3691 = vadd.f32 0.0, %v3690
      %v3692 = vpop.f32.mrf.mxu0
      %v3693 = vadd.f32 0.0, %v3692
      %3694 = vmatmul.bf16.gmra.mxu0 %v3621
      %v3695 = vpop.f32.mrf.mxu0
      %v3696 = vadd.f32 0.0, %v3695
      %v3697 = vpop.f32.mrf.mxu0
      %v3698 = vadd.f32 0.0, %v3697
      %3699 = vmatmul.bf16.gmra.mxu0 %v3624
      %v3700 = vpop.f32.mrf.mxu0
      %v3701 = vadd.f32 0.0, %v3700
      %v3702 = vpop.f32.mrf.mxu0
      %v3703 = vadd.f32 0.0, %v3702
      %3704 = vmatmul.bf16.gmra.mxu0 %v3627
      %v3705 = vpop.f32.mrf.mxu0
      %v3706 = vadd.f32 0.0, %v3705
      %v3707 = vpop.f32.mrf.mxu0
      %v3708 = vadd.f32 0.0, %v3707
      %3709 = vmatmul.bf16.gmra.mxu0 %v3630
      %v3710 = vpop.f32.mrf.mxu0
      %v3711 = vadd.f32 0.0, %v3710
      %v3712 = vpop.f32.mrf.mxu0
      %v3713 = vadd.f32 0.0, %v3712
      %3714 = vmatmul.bf16.gmra.mxu0 %v3633
      %v3715 = vpop.f32.mrf.mxu0
      %v3716 = vadd.f32 0.0, %v3715
      %v3717 = vpop.f32.mrf.mxu0
      %v3718 = vadd.f32 0.0, %v3717
      %3719 = vmatmul.bf16.gmra.mxu0 %v3636
      %v3720 = vpop.f32.mrf.mxu0
      %v3721 = vadd.f32 0.0, %v3720
      %v3722 = vpop.f32.mrf.mxu0
      %v3723 = vadd.f32 0.0, %v3722
      %3724 = vmatmul.bf16.gmra.mxu0 %v3639
      %v3725 = vpop.f32.mrf.mxu0
      %v3726 = vadd.f32 0.0, %v3725
      %v3727 = vpop.f32.mrf.mxu0
      %v3728 = vadd.f32 0.0, %v3727
      %3729 = vmatmul.bf16.gmra.mxu0 %v3642
      %v3730 = vpop.f32.mrf.mxu0
      %v3731 = vadd.f32 0.0, %v3730
      %v3732 = vpop.f32.mrf.mxu0
      %v3733 = vadd.f32 0.0, %v3732
      %3734 = vmatmul.bf16.gmra.mxu0 %v3645
      %v3735 = vpop.f32.mrf.mxu0
      %v3736 = vadd.f32 0.0, %v3735
      %v3737 = vpop.f32.mrf.mxu0
      %v3738 = vadd.f32 0.0, %v3737
      %3739 = vmatmul.bf16.gmra.mxu0 %v3648
      %v3740 = vpop.f32.mrf.mxu0
      %v3741 = vadd.f32 0.0, %v3740
      %v3742 = vpop.f32.mrf.mxu0
      %v3743 = vadd.f32 0.0, %v3742
      %3744 = vmatmul.bf16.gmra.mxu0 %v3651
      %v3745 = vpop.f32.mrf.mxu0
      %v3746 = vadd.f32 0.0, %v3745
      %v3747 = vpop.f32.mrf.mxu0
      %v3748 = vadd.f32 0.0, %v3747
      %3749 = vdwg.mxu0
      %v3750 = vadd.f32 %v3404, %v3666
      %v3751 = vadd.f32 %v3405, %v3668
      %v3752 = vadd.f32 %v3406, %v3671
      %v3753 = vadd.f32 %v3407, %v3673
      %v3754 = vadd.f32 %v3408, %v3676
      %v3755 = vadd.f32 %v3409, %v3678
      %v3756 = vadd.f32 %v3410, %v3681
      %v3757 = vadd.f32 %v3411, %v3683
      %v3758 = vadd.f32 %v3412, %v3686
      %v3759 = vadd.f32 %v3413, %v3688
      %v3760 = vadd.f32 %v3414, %v3691
      %v3761 = vadd.f32 %v3415, %v3693
      %v3762 = vadd.f32 %v3416, %v3696
      %v3763 = vadd.f32 %v3417, %v3698
      %v3764 = vadd.f32 %v3418, %v3701
      %v3765 = vadd.f32 %v3419, %v3703
      %v3766 = vadd.f32 %v3420, %v3706
      %v3767 = vadd.f32 %v3421, %v3708
      %v3768 = vadd.f32 %v3422, %v3711
      %v3769 = vadd.f32 %v3423, %v3713
      %v3770 = vadd.f32 %v3424, %v3716
      %v3771 = vadd.f32 %v3425, %v3718
      %v3772 = vadd.f32 %v3426, %v3721
      %v3773 = vadd.f32 %v3427, %v3723
      %v3774 = vadd.f32 %v3428, %v3726
      %v3775 = vadd.f32 %v3429, %v3728
      %v3776 = vadd.f32 %v3430, %v3731
      %v3777 = vadd.f32 %v3431, %v3733
      %v3778 = vadd.f32 %v3432, %v3736
      %v3779 = vadd.f32 %v3433, %v3738
      %v3780 = vadd.f32 %v3434, %v3741
      %v3781 = vadd.f32 %v3435, %v3743
      %v3782 = vadd.f32 %v3436, %v3746
      %v3783 = vadd.f32 %v3437, %v3748
      %v3784 = vld [vmem:[%s222 + $0x18] sm:$0x8]
      %v3785 = vld [vmem:[%s222 + $0x1c] sm:$0xf]
      %v3786 = vld [vmem:[%s222 + $0x20] sm:$0xf]
      %v3787 = vld [vmem:[%s222 + $0x24] sm:$0xf]
      %v3788 = vld [vmem:[%s222 + $0x28] sm:$0xf]
      %v3789 = vld [vmem:[%s222 + $0x2c] sm:$0xf]
      %v3790 = vld [vmem:[%s222 + $0x30] sm:$0xf]
      %v3791 = vld [vmem:[%s222 + $0x34] sm:$0xf]
      %v3792 = vld [vmem:[%s222 + $0x38] sm:$0xf]
      %v3793 = vld [vmem:[%s222 + $0x3c] sm:$0xf]
      %v3794 = vld [vmem:[%s222 + $0x40] sm:$0xf]
      %v3795 = vld [vmem:[%s222 + $0x44] sm:$0xf]
      %v3796 = vld [vmem:[%s222 + $0x48] sm:$0xf]
      %v3797 = vld [vmem:[%s222 + $0x4c] sm:$0xf]
      %v3798 = vld [vmem:[%s222 + $0x50] sm:$0xf]
      %v3799 = vld [vmem:[%s222 + $0x54] sm:$0xf]
      %v3800 = vld [vmem:[%s222 + $0x58] sm:$0xf]
      %v3801 = vld [vmem:[%s222 + $0x5c] sm:$0xf]
      %v3802 = vld [vmem:[%s222 + $0x60] sm:$0xf]
      %v3803 = vld [vmem:[%s222 + $0x64] sm:$0xf]
      %v3804 = vld [vmem:[%s222 + $0x68] sm:$0xf]
      %v3805 = vld [vmem:[%s222 + $0x6c] sm:$0xf]
      %v3806 = vld [vmem:[%s222 + $0x70] sm:$0xf]
      %v3807 = vld [vmem:[%s222 + $0x74] sm:$0xf]
      %v3808 = vld [vmem:[%s222 + $0x78] sm:$0xf]
      %v3809 = vld [vmem:[%s222 + $0x7c] sm:$0xf]
      %v3810 = vld [vmem:[%s222 + $0x80] sm:$0xf]
      %v3811 = vld [vmem:[%s222 + $0x84] sm:$0xf]
      %v3812 = vld [vmem:[%s222 + $0x88] sm:$0xf]
      %v3813 = vld [vmem:[%s222 + $0x8c] sm:$0xf]
      %v3814 = vld [vmem:[%s222 + $0x90] sm:$0xf]
      %v3815 = vld [vmem:[%s222 + $0x94] sm:$0xf]
      %v3816 = vld [vmem:[%s222 + $0x98] sm:$0xf]
      %v3817 = vld [vmem:[%s222 + $0x9c] sm:$0xf]
      %v3818 = vld [vmem:[%s222 + $0xa0] sm:$0x1]
      %s3819 = scalar_lea.vmem %s226, 24
      %v3820 = vld [vmem:[%s3819] sm:$0x3]
      %v3856 = vunpack.c.l.b16 %v3784
      %v3857 = vunpack.c.l.b16 %v3785
      %v3858 = vunpack.c.l.b16 %v3786
      %v3859 = vunpack.c.l.b16 %v3787
      %v3860 = vunpack.c.l.b16 %v3788
      %v3861 = vunpack.c.l.b16 %v3789
      %v3862 = vunpack.c.l.b16 %v3790
      %v3863 = vunpack.c.l.b16 %v3791
      %v3864 = vunpack.c.l.b16 %v3792
      %v3865 = vunpack.c.l.b16 %v3793
      %v3866 = vunpack.c.l.b16 %v3794
      %v3867 = vunpack.c.l.b16 %v3795
      %v3868 = vunpack.c.l.b16 %v3796
      %v3869 = vunpack.c.l.b16 %v3797
      %v3870 = vunpack.c.l.b16 %v3798
      %v3871 = vunpack.c.l.b16 %v3799
      %v3872 = vunpack.c.l.b16 %v3800
      %v3873 = vunpack.c.l.b16 %v3801
      %v3874 = vunpack.c.l.b16 %v3802
      %v3875 = vunpack.c.l.b16 %v3803
      %v3876 = vunpack.c.l.b16 %v3804
      %v3877 = vunpack.c.l.b16 %v3805
      %v3878 = vunpack.c.l.b16 %v3806
      %v3879 = vunpack.c.l.b16 %v3807
      %v3880 = vunpack.c.l.b16 %v3808
      %v3881 = vunpack.c.l.b16 %v3809
      %v3882 = vunpack.c.l.b16 %v3810
      %v3883 = vunpack.c.l.b16 %v3811
      %v3884 = vunpack.c.l.b16 %v3812
      %v3885 = vunpack.c.l.b16 %v3813
      %v3886 = vunpack.c.l.b16 %v3814
      %v3887 = vunpack.c.l.b16 %v3815
      %v3888 = vunpack.c.l.b16 %v3816
      %v3889 = vunpack.c.l.b16 %v3817
      %v3890 = vunpack.c.l.b16 %v3818
      %v3891 = vpack.c.b16 %v3857, %v3856
      %v3892 = vpack.c.b16 %v3859, %v3858
      %v3893 = vpack.c.b16 %v3861, %v3860
      %v3894 = vpack.c.b16 %v3863, %v3862
      %v3895 = vpack.c.b16 %v3865, %v3864
      %v3896 = vpack.c.b16 %v3867, %v3866
      %v3897 = vpack.c.b16 %v3869, %v3868
      %v3898 = vpack.c.b16 %v3871, %v3870
      %v3899 = vpack.c.b16 %v3873, %v3872
      %v3900 = vpack.c.b16 %v3875, %v3874
      %v3901 = vpack.c.b16 %v3877, %v3876
      %v3902 = vpack.c.b16 %v3879, %v3878
      %v3903 = vpack.c.b16 %v3881, %v3880
      %v3904 = vpack.c.b16 %v3883, %v3882
      %v3905 = vpack.c.b16 %v3885, %v3884
      %v3906 = vpack.c.b16 %v3887, %v3886
      %v3907 = vpack.c.b16 %v3889, %v3888
      %v3908 = vpack.c.b16 %v3890, %v3890
      %v3909 = vrot.slane %v3891, 3
      %v3910 = vrot.slane %v3892, 3
      %v3911 = vsel %vm3220, %v3909, %v3910
      %v3912 = vrot.slane %v3893, 3
      %v3913 = vsel %vm3220, %v3910, %v3912
      %v3914 = vrot.slane %v3894, 3
      %v3915 = vsel %vm3220, %v3912, %v3914
      %v3916 = vrot.slane %v3895, 3
      %v3917 = vsel %vm3220, %v3914, %v3916
      %v3918 = vrot.slane %v3896, 3
      %v3919 = vsel %vm3220, %v3916, %v3918
      %v3920 = vrot.slane %v3897, 3
      %v3921 = vsel %vm3220, %v3918, %v3920
      %v3922 = vrot.slane %v3898, 3
      %v3923 = vsel %vm3220, %v3920, %v3922
      %v3924 = vrot.slane %v3899, 3
      %v3925 = vsel %vm3220, %v3922, %v3924
      %v3926 = vrot.slane %v3900, 3
      %v3927 = vsel %vm3220, %v3924, %v3926
      %v3928 = vrot.slane %v3901, 3
      %v3929 = vsel %vm3220, %v3926, %v3928
      %v3930 = vrot.slane %v3902, 3
      %v3931 = vsel %vm3220, %v3928, %v3930
      %v3932 = vrot.slane %v3903, 3
      %v3933 = vsel %vm3220, %v3930, %v3932
      %v3934 = vrot.slane %v3904, 3
      %v3935 = vsel %vm3220, %v3932, %v3934
      %v3936 = vrot.slane %v3905, 3
      %v3937 = vsel %vm3220, %v3934, %v3936
      %v3938 = vrot.slane %v3906, 3
      %v3939 = vsel %vm3220, %v3936, %v3938
      %v3940 = vrot.slane %v3907, 3
      %v3941 = vsel %vm3220, %v3938, %v3940
      %v3942 = vrot.slane %v3908, 3
      %v3943 = vsel %vm3220, %v3940, %v3942
      %v3945 = vsel %vm494, %v3911, 0
      %v3948 = vsel %vm494, %v3913, 0
      %v3951 = vsel %vm494, %v3915, 0
      %v3954 = vsel %vm494, %v3917, 0
      %v3957 = vsel %vm494, %v3919, 0
      %v3960 = vsel %vm494, %v3921, 0
      %v3963 = vsel %vm494, %v3923, 0
      %v3966 = vsel %vm494, %v3925, 0
      %v3969 = vsel %vm494, %v3927, 0
      %v3972 = vsel %vm494, %v3929, 0
      %v3975 = vsel %vm494, %v3931, 0
      %v3978 = vsel %vm494, %v3933, 0
      %v3981 = vsel %vm494, %v3935, 0
      %v3984 = vsel %vm494, %v3937, 0
      %v3987 = vsel %vm494, %v3939, 0
      %v3990 = vsel %vm494, %v3941, 0
      %v3993 = vsel %vm494, %v3943, 0
      %v3996 = vsel %vm546, %v3820, 0
      %3998 = vmatpush.bf16.msra.mxu0 0
      %3999 = vmatpush.bf16.msra.mxu0 0
      %4000 = vmatpush.bf16.msra.mxu0 0
      %4001 = vmatpush.bf16.msra.mxu0 0
      %4002 = vmatpush.bf16.msra.mxu0 0
      %4003 = vmatpush.bf16.msra.mxu0 0
      %4004 = vmatpush.bf16.msra.mxu0 0
      %4005 = vmatpush.bf16.msra.mxu0 %v3996
      %4006 = vmatmul.bf16.gmra.mxu0 %v3945
      %v4007 = vpop.f32.mrf.mxu0
      %v4008 = vadd.f32 0.0, %v4007
      %v4009 = vpop.f32.mrf.mxu0
      %v4010 = vadd.f32 0.0, %v4009
      %4011 = vmatmul.bf16.gmra.mxu0 %v3948
      %v4012 = vpop.f32.mrf.mxu0
      %v4013 = vadd.f32 0.0, %v4012
      %v4014 = vpop.f32.mrf.mxu0
      %v4015 = vadd.f32 0.0, %v4014
      %4016 = vmatmul.bf16.gmra.mxu0 %v3951
      %v4017 = vpop.f32.mrf.mxu0
      %v4018 = vadd.f32 0.0, %v4017
      %v4019 = vpop.f32.mrf.mxu0
      %v4020 = vadd.f32 0.0, %v4019
      %4021 = vmatmul.bf16.gmra.mxu0 %v3954
      %v4022 = vpop.f32.mrf.mxu0
      %v4023 = vadd.f32 0.0, %v4022
      %v4024 = vpop.f32.mrf.mxu0
      %v4025 = vadd.f32 0.0, %v4024
      %4026 = vmatmul.bf16.gmra.mxu0 %v3957
      %v4027 = vpop.f32.mrf.mxu0
      %v4028 = vadd.f32 0.0, %v4027
      %v4029 = vpop.f32.mrf.mxu0
      %v4030 = vadd.f32 0.0, %v4029
      %4031 = vmatmul.bf16.gmra.mxu0 %v3960
      %v4032 = vpop.f32.mrf.mxu0
      %v4033 = vadd.f32 0.0, %v4032
      %v4034 = vpop.f32.mrf.mxu0
      %v4035 = vadd.f32 0.0, %v4034
      %4036 = vmatmul.bf16.gmra.mxu0 %v3963
      %v4037 = vpop.f32.mrf.mxu0
      %v4038 = vadd.f32 0.0, %v4037
      %v4039 = vpop.f32.mrf.mxu0
      %v4040 = vadd.f32 0.0, %v4039
      %4041 = vmatmul.bf16.gmra.mxu0 %v3966
      %v4042 = vpop.f32.mrf.mxu0
      %v4043 = vadd.f32 0.0, %v4042
      %v4044 = vpop.f32.mrf.mxu0
      %v4045 = vadd.f32 0.0, %v4044
      %4046 = vmatmul.bf16.gmra.mxu0 %v3969
      %v4047 = vpop.f32.mrf.mxu0
      %v4048 = vadd.f32 0.0, %v4047
      %v4049 = vpop.f32.mrf.mxu0
      %v4050 = vadd.f32 0.0, %v4049
      %4051 = vmatmul.bf16.gmra.mxu0 %v3972
      %v4052 = vpop.f32.mrf.mxu0
      %v4053 = vadd.f32 0.0, %v4052
      %v4054 = vpop.f32.mrf.mxu0
      %v4055 = vadd.f32 0.0, %v4054
      %4056 = vmatmul.bf16.gmra.mxu0 %v3975
      %v4057 = vpop.f32.mrf.mxu0
      %v4058 = vadd.f32 0.0, %v4057
      %v4059 = vpop.f32.mrf.mxu0
      %v4060 = vadd.f32 0.0, %v4059
      %4061 = vmatmul.bf16.gmra.mxu0 %v3978
      %v4062 = vpop.f32.mrf.mxu0
      %v4063 = vadd.f32 0.0, %v4062
      %v4064 = vpop.f32.mrf.mxu0
      %v4065 = vadd.f32 0.0, %v4064
      %4066 = vmatmul.bf16.gmra.mxu0 %v3981
      %v4067 = vpop.f32.mrf.mxu0
      %v4068 = vadd.f32 0.0, %v4067
      %v4069 = vpop.f32.mrf.mxu0
      %v4070 = vadd.f32 0.0, %v4069
      %4071 = vmatmul.bf16.gmra.mxu0 %v3984
      %v4072 = vpop.f32.mrf.mxu0
      %v4073 = vadd.f32 0.0, %v4072
      %v4074 = vpop.f32.mrf.mxu0
      %v4075 = vadd.f32 0.0, %v4074
      %4076 = vmatmul.bf16.gmra.mxu0 %v3987
      %v4077 = vpop.f32.mrf.mxu0
      %v4078 = vadd.f32 0.0, %v4077
      %v4079 = vpop.f32.mrf.mxu0
      %v4080 = vadd.f32 0.0, %v4079
      %4081 = vmatmul.bf16.gmra.mxu0 %v3990
      %v4082 = vpop.f32.mrf.mxu0
      %v4083 = vadd.f32 0.0, %v4082
      %v4084 = vpop.f32.mrf.mxu0
      %v4085 = vadd.f32 0.0, %v4084
      %4086 = vmatmul.bf16.gmra.mxu0 %v3993
      %v4087 = vpop.f32.mrf.mxu0
      %v4088 = vadd.f32 0.0, %v4087
      %v4089 = vpop.f32.mrf.mxu0
      %v4090 = vadd.f32 0.0, %v4089
      %4091 = vdwg.mxu0
      %v4092 = vadd.f32 %v3750, %v4008
      %v4093 = vadd.f32 %v3751, %v4010
      %v4094 = vadd.f32 %v3752, %v4013
      %v4095 = vadd.f32 %v3753, %v4015
      %v4096 = vadd.f32 %v3754, %v4018
      %v4097 = vadd.f32 %v3755, %v4020
      %v4098 = vadd.f32 %v3756, %v4023
      %v4099 = vadd.f32 %v3757, %v4025
      %v4100 = vadd.f32 %v3758, %v4028
      %v4101 = vadd.f32 %v3759, %v4030
      %v4102 = vadd.f32 %v3760, %v4033
      %v4103 = vadd.f32 %v3761, %v4035
      %v4104 = vadd.f32 %v3762, %v4038
      %v4105 = vadd.f32 %v3763, %v4040
      %v4106 = vadd.f32 %v3764, %v4043
      %v4107 = vadd.f32 %v3765, %v4045
      %v4108 = vadd.f32 %v3766, %v4048
      %v4109 = vadd.f32 %v3767, %v4050
      %v4110 = vadd.f32 %v3768, %v4053
      %v4111 = vadd.f32 %v3769, %v4055
      %v4112 = vadd.f32 %v3770, %v4058
      %v4113 = vadd.f32 %v3771, %v4060
      %v4114 = vadd.f32 %v3772, %v4063
      %v4115 = vadd.f32 %v3773, %v4065
      %v4116 = vadd.f32 %v3774, %v4068
      %v4117 = vadd.f32 %v3775, %v4070
      %v4118 = vadd.f32 %v3776, %v4073
      %v4119 = vadd.f32 %v3777, %v4075
      %v4120 = vadd.f32 %v3778, %v4078
      %v4121 = vadd.f32 %v3779, %v4080
      %v4122 = vadd.f32 %v3780, %v4083
      %v4123 = vadd.f32 %v3781, %v4085
      %v4124 = vadd.f32 %v3782, %v4088
      %v4125 = vadd.f32 %v3783, %v4090
      %s4126 = scalar_lea.vmem %s226, 26
      %v4127 = vld [vmem:[%s4126] sm:$0x3]
      %v4129 = vshrl.u32 %v3891, 16
      %v4131 = vrot.slane %v4129, 3
      %v4132 = vshll.u32 %v3891, 16
      %v4134 = vrot.slane %v4132, 4
      %v4135 = vor.u32 %v4131, %v4134
      %v4137 = vshrl.u32 %v3892, 16
      %v4139 = vrot.slane %v4137, 3
      %v4140 = vshll.u32 %v3892, 16
      %v4142 = vrot.slane %v4140, 4
      %v4143 = vor.u32 %v4139, %v4142
      %v4144 = vsel %vm3440, %v4135, %v4143
      %v4146 = vshrl.u32 %v3893, 16
      %v4148 = vrot.slane %v4146, 3
      %v4149 = vshll.u32 %v3893, 16
      %v4151 = vrot.slane %v4149, 4
      %v4152 = vor.u32 %v4148, %v4151
      %v4153 = vsel %vm3440, %v4143, %v4152
      %v4155 = vshrl.u32 %v3894, 16
      %v4157 = vrot.slane %v4155, 3
      %v4158 = vshll.u32 %v3894, 16
      %v4160 = vrot.slane %v4158, 4
      %v4161 = vor.u32 %v4157, %v4160
      %v4162 = vsel %vm3440, %v4152, %v4161
      %v4164 = vshrl.u32 %v3895, 16
      %v4166 = vrot.slane %v4164, 3
      %v4167 = vshll.u32 %v3895, 16
      %v4169 = vrot.slane %v4167, 4
      %v4170 = vor.u32 %v4166, %v4169
      %v4171 = vsel %vm3440, %v4161, %v4170
      %v4173 = vshrl.u32 %v3896, 16
      %v4175 = vrot.slane %v4173, 3
      %v4176 = vshll.u32 %v3896, 16
      %v4178 = vrot.slane %v4176, 4
      %v4179 = vor.u32 %v4175, %v4178
      %v4180 = vsel %vm3440, %v4170, %v4179
      %v4182 = vshrl.u32 %v3897, 16
      %v4184 = vrot.slane %v4182, 3
      %v4185 = vshll.u32 %v3897, 16
      %v4187 = vrot.slane %v4185, 4
      %v4188 = vor.u32 %v4184, %v4187
      %v4189 = vsel %vm3440, %v4179, %v4188
      %v4191 = vshrl.u32 %v3898, 16
      %v4193 = vrot.slane %v4191, 3
      %v4194 = vshll.u32 %v3898, 16
      %v4196 = vrot.slane %v4194, 4
      %v4197 = vor.u32 %v4193, %v4196
      %v4198 = vsel %vm3440, %v4188, %v4197
      %v4200 = vshrl.u32 %v3899, 16
      %v4202 = vrot.slane %v4200, 3
      %v4203 = vshll.u32 %v3899, 16
      %v4205 = vrot.slane %v4203, 4
      %v4206 = vor.u32 %v4202, %v4205
      %v4207 = vsel %vm3440, %v4197, %v4206
      %v4209 = vshrl.u32 %v3900, 16
      %v4211 = vrot.slane %v4209, 3
      %v4212 = vshll.u32 %v3900, 16
      %v4214 = vrot.slane %v4212, 4
      %v4215 = vor.u32 %v4211, %v4214
      %v4216 = vsel %vm3440, %v4206, %v4215
      %v4218 = vshrl.u32 %v3901, 16
      %v4220 = vrot.slane %v4218, 3
      %v4221 = vshll.u32 %v3901, 16
      %v4223 = vrot.slane %v4221, 4
      %v4224 = vor.u32 %v4220, %v4223
      %v4225 = vsel %vm3440, %v4215, %v4224
      %v4227 = vshrl.u32 %v3902, 16
      %v4229 = vrot.slane %v4227, 3
      %v4230 = vshll.u32 %v3902, 16
      %v4232 = vrot.slane %v4230, 4
      %v4233 = vor.u32 %v4229, %v4232
      %v4234 = vsel %vm3440, %v4224, %v4233
      %v4236 = vshrl.u32 %v3903, 16
      %v4238 = vrot.slane %v4236, 3
      %v4239 = vshll.u32 %v3903, 16
      %v4241 = vrot.slane %v4239, 4
      %v4242 = vor.u32 %v4238, %v4241
      %v4243 = vsel %vm3440, %v4233, %v4242
      %v4245 = vshrl.u32 %v3904, 16
      %v4247 = vrot.slane %v4245, 3
      %v4248 = vshll.u32 %v3904, 16
      %v4250 = vrot.slane %v4248, 4
      %v4251 = vor.u32 %v4247, %v4250
      %v4252 = vsel %vm3440, %v4242, %v4251
      %v4254 = vshrl.u32 %v3905, 16
      %v4256 = vrot.slane %v4254, 3
      %v4257 = vshll.u32 %v3905, 16
      %v4259 = vrot.slane %v4257, 4
      %v4260 = vor.u32 %v4256, %v4259
      %v4261 = vsel %vm3440, %v4251, %v4260
      %v4263 = vshrl.u32 %v3906, 16
      %v4265 = vrot.slane %v4263, 3
      %v4266 = vshll.u32 %v3906, 16
      %v4268 = vrot.slane %v4266, 4
      %v4269 = vor.u32 %v4265, %v4268
      %v4270 = vsel %vm3440, %v4260, %v4269
      %v4272 = vshrl.u32 %v3907, 16
      %v4274 = vrot.slane %v4272, 3
      %v4275 = vshll.u32 %v3907, 16
      %v4277 = vrot.slane %v4275, 4
      %v4278 = vor.u32 %v4274, %v4277
      %v4279 = vsel %vm3440, %v4269, %v4278
      %v4281 = vshrl.u32 %v3908, 16
      %v4283 = vrot.slane %v4281, 3
      %v4284 = vshll.u32 %v3908, 16
      %v4286 = vrot.slane %v4284, 4
      %v4287 = vor.u32 %v4283, %v4286
      %v4288 = vsel %vm3440, %v4278, %v4287
      %v4290 = vsel %vm494, %v4144, 0
      %v4293 = vsel %vm494, %v4153, 0
      %v4296 = vsel %vm494, %v4162, 0
      %v4299 = vsel %vm494, %v4171, 0
      %v4302 = vsel %vm494, %v4180, 0
      %v4305 = vsel %vm494, %v4189, 0
      %v4308 = vsel %vm494, %v4198, 0
      %v4311 = vsel %vm494, %v4207, 0
      %v4314 = vsel %vm494, %v4216, 0
      %v4317 = vsel %vm494, %v4225, 0
      %v4320 = vsel %vm494, %v4234, 0
      %v4323 = vsel %vm494, %v4243, 0
      %v4326 = vsel %vm494, %v4252, 0
      %v4329 = vsel %vm494, %v4261, 0
      %v4332 = vsel %vm494, %v4270, 0
      %v4335 = vsel %vm494, %v4279, 0
      %v4338 = vsel %vm494, %v4288, 0
      %v4341 = vsel %vm546, %v4127, 0
      %4343 = vmatpush.bf16.msra.mxu0 0
      %4344 = vmatpush.bf16.msra.mxu0 0
      %4345 = vmatpush.bf16.msra.mxu0 0
      %4346 = vmatpush.bf16.msra.mxu0 0
      %4347 = vmatpush.bf16.msra.mxu0 0
      %4348 = vmatpush.bf16.msra.mxu0 0
      %4349 = vmatpush.bf16.msra.mxu0 0
      %4350 = vmatpush.bf16.msra.mxu0 %v4341
      %4351 = vmatmul.bf16.gmra.mxu0 %v4290
      %v4352 = vpop.f32.mrf.mxu0
      %v4353 = vadd.f32 0.0, %v4352
      %v4354 = vpop.f32.mrf.mxu0
      %v4355 = vadd.f32 0.0, %v4354
      %4356 = vmatmul.bf16.gmra.mxu0 %v4293
      %v4357 = vpop.f32.mrf.mxu0
      %v4358 = vadd.f32 0.0, %v4357
      %v4359 = vpop.f32.mrf.mxu0
      %v4360 = vadd.f32 0.0, %v4359
      %4361 = vmatmul.bf16.gmra.mxu0 %v4296
      %v4362 = vpop.f32.mrf.mxu0
      %v4363 = vadd.f32 0.0, %v4362
      %v4364 = vpop.f32.mrf.mxu0
      %v4365 = vadd.f32 0.0, %v4364
      %4366 = vmatmul.bf16.gmra.mxu0 %v4299
      %v4367 = vpop.f32.mrf.mxu0
      %v4368 = vadd.f32 0.0, %v4367
      %v4369 = vpop.f32.mrf.mxu0
      %v4370 = vadd.f32 0.0, %v4369
      %4371 = vmatmul.bf16.gmra.mxu0 %v4302
      %v4372 = vpop.f32.mrf.mxu0
      %v4373 = vadd.f32 0.0, %v4372
      %v4374 = vpop.f32.mrf.mxu0
      %v4375 = vadd.f32 0.0, %v4374
      %4376 = vmatmul.bf16.gmra.mxu0 %v4305
      %v4377 = vpop.f32.mrf.mxu0
      %v4378 = vadd.f32 0.0, %v4377
      %v4379 = vpop.f32.mrf.mxu0
      %v4380 = vadd.f32 0.0, %v4379
      %4381 = vmatmul.bf16.gmra.mxu0 %v4308
      %v4382 = vpop.f32.mrf.mxu0
      %v4383 = vadd.f32 0.0, %v4382
      %v4384 = vpop.f32.mrf.mxu0
      %v4385 = vadd.f32 0.0, %v4384
      %4386 = vmatmul.bf16.gmra.mxu0 %v4311
      %v4387 = vpop.f32.mrf.mxu0
      %v4388 = vadd.f32 0.0, %v4387
      %v4389 = vpop.f32.mrf.mxu0
      %v4390 = vadd.f32 0.0, %v4389
      %4391 = vmatmul.bf16.gmra.mxu0 %v4314
      %v4392 = vpop.f32.mrf.mxu0
      %v4393 = vadd.f32 0.0, %v4392
      %v4394 = vpop.f32.mrf.mxu0
      %v4395 = vadd.f32 0.0, %v4394
      %4396 = vmatmul.bf16.gmra.mxu0 %v4317
      %v4397 = vpop.f32.mrf.mxu0
      %v4398 = vadd.f32 0.0, %v4397
      %v4399 = vpop.f32.mrf.mxu0
      %v4400 = vadd.f32 0.0, %v4399
      %4401 = vmatmul.bf16.gmra.mxu0 %v4320
      %v4402 = vpop.f32.mrf.mxu0
      %v4403 = vadd.f32 0.0, %v4402
      %v4404 = vpop.f32.mrf.mxu0
      %v4405 = vadd.f32 0.0, %v4404
      %4406 = vmatmul.bf16.gmra.mxu0 %v4323
      %v4407 = vpop.f32.mrf.mxu0
      %v4408 = vadd.f32 0.0, %v4407
      %v4409 = vpop.f32.mrf.mxu0
      %v4410 = vadd.f32 0.0, %v4409
      %4411 = vmatmul.bf16.gmra.mxu0 %v4326
      %v4412 = vpop.f32.mrf.mxu0
      %v4413 = vadd.f32 0.0, %v4412
      %v4414 = vpop.f32.mrf.mxu0
      %v4415 = vadd.f32 0.0, %v4414
      %4416 = vmatmul.bf16.gmra.mxu0 %v4329
      %v4417 = vpop.f32.mrf.mxu0
      %v4418 = vadd.f32 0.0, %v4417
      %v4419 = vpop.f32.mrf.mxu0
      %v4420 = vadd.f32 0.0, %v4419
      %4421 = vmatmul.bf16.gmra.mxu0 %v4332
      %v4422 = vpop.f32.mrf.mxu0
      %v4423 = vadd.f32 0.0, %v4422
      %v4424 = vpop.f32.mrf.mxu0
      %v4425 = vadd.f32 0.0, %v4424
      %4426 = vmatmul.bf16.gmra.mxu0 %v4335
      %v4427 = vpop.f32.mrf.mxu0
      %v4428 = vadd.f32 0.0, %v4427
      %v4429 = vpop.f32.mrf.mxu0
      %v4430 = vadd.f32 0.0, %v4429
      %4431 = vmatmul.bf16.gmra.mxu0 %v4338
      %v4432 = vpop.f32.mrf.mxu0
      %v4433 = vadd.f32 0.0, %v4432
      %v4434 = vpop.f32.mrf.mxu0
      %v4435 = vadd.f32 0.0, %v4434
      %4436 = vdwg.mxu0
      %v4437 = vadd.f32 %v4092, %v4353
      %v4438 = vadd.f32 %v4093, %v4355
      %v4439 = vadd.f32 %v4094, %v4358
      %v4440 = vadd.f32 %v4095, %v4360
      %v4441 = vadd.f32 %v4096, %v4363
      %v4442 = vadd.f32 %v4097, %v4365
      %v4443 = vadd.f32 %v4098, %v4368
      %v4444 = vadd.f32 %v4099, %v4370
      %v4445 = vadd.f32 %v4100, %v4373
      %v4446 = vadd.f32 %v4101, %v4375
      %v4447 = vadd.f32 %v4102, %v4378
      %v4448 = vadd.f32 %v4103, %v4380
      %v4449 = vadd.f32 %v4104, %v4383
      %v4450 = vadd.f32 %v4105, %v4385
      %v4451 = vadd.f32 %v4106, %v4388
      %v4452 = vadd.f32 %v4107, %v4390
      %v4453 = vadd.f32 %v4108, %v4393
      %v4454 = vadd.f32 %v4109, %v4395
      %v4455 = vadd.f32 %v4110, %v4398
      %v4456 = vadd.f32 %v4111, %v4400
      %v4457 = vadd.f32 %v4112, %v4403
      %v4458 = vadd.f32 %v4113, %v4405
      %v4459 = vadd.f32 %v4114, %v4408
      %v4460 = vadd.f32 %v4115, %v4410
      %v4461 = vadd.f32 %v4116, %v4413
      %v4462 = vadd.f32 %v4117, %v4415
      %v4463 = vadd.f32 %v4118, %v4418
      %v4464 = vadd.f32 %v4119, %v4420
      %v4465 = vadd.f32 %v4120, %v4423
      %v4466 = vadd.f32 %v4121, %v4425
      %v4467 = vadd.f32 %v4122, %v4428
      %v4468 = vadd.f32 %v4123, %v4430
      %v4469 = vadd.f32 %v4124, %v4433
      %v4470 = vadd.f32 %v4125, %v4435
      %v4471 = vld [vmem:[%s222 + $0xa0] sm:$0x3]
      %s4472 = scalar_lea.vmem %s226, 28
      %v4473 = vld [vmem:[%s4472] sm:$0x3]
      %v4475 = vunpack.c.l.b16 %v4471
      %v4476 = vpack.c.b16 %v3858, %v3857
      %v4477 = vpack.c.b16 %v3860, %v3859
      %v4478 = vpack.c.b16 %v3862, %v3861
      %v4479 = vpack.c.b16 %v3864, %v3863
      %v4480 = vpack.c.b16 %v3866, %v3865
      %v4481 = vpack.c.b16 %v3868, %v3867
      %v4482 = vpack.c.b16 %v3870, %v3869
      %v4483 = vpack.c.b16 %v3872, %v3871
      %v4484 = vpack.c.b16 %v3874, %v3873
      %v4485 = vpack.c.b16 %v3876, %v3875
      %v4486 = vpack.c.b16 %v3878, %v3877
      %v4487 = vpack.c.b16 %v3880, %v3879
      %v4488 = vpack.c.b16 %v3882, %v3881
      %v4489 = vpack.c.b16 %v3884, %v3883
      %v4490 = vpack.c.b16 %v3886, %v3885
      %v4491 = vpack.c.b16 %v3888, %v3887
      %v4492 = vpack.c.b16 %v4475, %v3889
      %v4494 = vsel %vm494, %v4476, 0
      %v4497 = vsel %vm494, %v4477, 0
      %v4500 = vsel %vm494, %v4478, 0
      %v4503 = vsel %vm494, %v4479, 0
      %v4506 = vsel %vm494, %v4480, 0
      %v4509 = vsel %vm494, %v4481, 0
      %v4512 = vsel %vm494, %v4482, 0
      %v4515 = vsel %vm494, %v4483, 0
      %v4518 = vsel %vm494, %v4484, 0
      %v4521 = vsel %vm494, %v4485, 0
      %v4524 = vsel %vm494, %v4486, 0
      %v4527 = vsel %vm494, %v4487, 0
      %v4530 = vsel %vm494, %v4488, 0
      %v4533 = vsel %vm494, %v4489, 0
      %v4536 = vsel %vm494, %v4490, 0
      %v4539 = vsel %vm494, %v4491, 0
      %v4542 = vsel %vm494, %v4492, 0
      %v4545 = vsel %vm546, %v4473, 0
      %4547 = vmatpush.bf16.msra.mxu0 0
      %4548 = vmatpush.bf16.msra.mxu0 0
      %4549 = vmatpush.bf16.msra.mxu0 0
      %4550 = vmatpush.bf16.msra.mxu0 0
      %4551 = vmatpush.bf16.msra.mxu0 0
      %4552 = vmatpush.bf16.msra.mxu0 0
      %4553 = vmatpush.bf16.msra.mxu0 0
      %4554 = vmatpush.bf16.msra.mxu0 %v4545
      %4555 = vmatmul.bf16.gmra.mxu0 %v4494
      %v4556 = vpop.f32.mrf.mxu0
      %v4557 = vadd.f32 0.0, %v4556
      %v4558 = vpop.f32.mrf.mxu0
      %v4559 = vadd.f32 0.0, %v4558
      %4560 = vmatmul.bf16.gmra.mxu0 %v4497
      %v4561 = vpop.f32.mrf.mxu0
      %v4562 = vadd.f32 0.0, %v4561
      %v4563 = vpop.f32.mrf.mxu0
      %v4564 = vadd.f32 0.0, %v4563
      %4565 = vmatmul.bf16.gmra.mxu0 %v4500
      %v4566 = vpop.f32.mrf.mxu0
      %v4567 = vadd.f32 0.0, %v4566
      %v4568 = vpop.f32.mrf.mxu0
      %v4569 = vadd.f32 0.0, %v4568
      %4570 = vmatmul.bf16.gmra.mxu0 %v4503
      %v4571 = vpop.f32.mrf.mxu0
      %v4572 = vadd.f32 0.0, %v4571
      %v4573 = vpop.f32.mrf.mxu0
      %v4574 = vadd.f32 0.0, %v4573
      %4575 = vmatmul.bf16.gmra.mxu0 %v4506
      %v4576 = vpop.f32.mrf.mxu0
      %v4577 = vadd.f32 0.0, %v4576
      %v4578 = vpop.f32.mrf.mxu0
      %v4579 = vadd.f32 0.0, %v4578
      %4580 = vmatmul.bf16.gmra.mxu0 %v4509
      %v4581 = vpop.f32.mrf.mxu0
      %v4582 = vadd.f32 0.0, %v4581
      %v4583 = vpop.f32.mrf.mxu0
      %v4584 = vadd.f32 0.0, %v4583
      %4585 = vmatmul.bf16.gmra.mxu0 %v4512
      %v4586 = vpop.f32.mrf.mxu0
      %v4587 = vadd.f32 0.0, %v4586
      %v4588 = vpop.f32.mrf.mxu0
      %v4589 = vadd.f32 0.0, %v4588
      %4590 = vmatmul.bf16.gmra.mxu0 %v4515
      %v4591 = vpop.f32.mrf.mxu0
      %v4592 = vadd.f32 0.0, %v4591
      %v4593 = vpop.f32.mrf.mxu0
      %v4594 = vadd.f32 0.0, %v4593
      %4595 = vmatmul.bf16.gmra.mxu0 %v4518
      %v4596 = vpop.f32.mrf.mxu0
      %v4597 = vadd.f32 0.0, %v4596
      %v4598 = vpop.f32.mrf.mxu0
      %v4599 = vadd.f32 0.0, %v4598
      %4600 = vmatmul.bf16.gmra.mxu0 %v4521
      %v4601 = vpop.f32.mrf.mxu0
      %v4602 = vadd.f32 0.0, %v4601
      %v4603 = vpop.f32.mrf.mxu0
      %v4604 = vadd.f32 0.0, %v4603
      %4605 = vmatmul.bf16.gmra.mxu0 %v4524
      %v4606 = vpop.f32.mrf.mxu0
      %v4607 = vadd.f32 0.0, %v4606
      %v4608 = vpop.f32.mrf.mxu0
      %v4609 = vadd.f32 0.0, %v4608
      %4610 = vmatmul.bf16.gmra.mxu0 %v4527
      %v4611 = vpop.f32.mrf.mxu0
      %v4612 = vadd.f32 0.0, %v4611
      %v4613 = vpop.f32.mrf.mxu0
      %v4614 = vadd.f32 0.0, %v4613
      %4615 = vmatmul.bf16.gmra.mxu0 %v4530
      %v4616 = vpop.f32.mrf.mxu0
      %v4617 = vadd.f32 0.0, %v4616
      %v4618 = vpop.f32.mrf.mxu0
      %v4619 = vadd.f32 0.0, %v4618
      %4620 = vmatmul.bf16.gmra.mxu0 %v4533
      %v4621 = vpop.f32.mrf.mxu0
      %v4622 = vadd.f32 0.0, %v4621
      %v4623 = vpop.f32.mrf.mxu0
      %v4624 = vadd.f32 0.0, %v4623
      %4625 = vmatmul.bf16.gmra.mxu0 %v4536
      %v4626 = vpop.f32.mrf.mxu0
      %v4627 = vadd.f32 0.0, %v4626
      %v4628 = vpop.f32.mrf.mxu0
      %v4629 = vadd.f32 0.0, %v4628
      %4630 = vmatmul.bf16.gmra.mxu0 %v4539
      %v4631 = vpop.f32.mrf.mxu0
      %v4632 = vadd.f32 0.0, %v4631
      %v4633 = vpop.f32.mrf.mxu0
      %v4634 = vadd.f32 0.0, %v4633
      %4635 = vmatmul.bf16.gmra.mxu0 %v4542
      %v4636 = vpop.f32.mrf.mxu0
      %v4637 = vadd.f32 0.0, %v4636
      %v4638 = vpop.f32.mrf.mxu0
      %v4639 = vadd.f32 0.0, %v4638
      %4640 = vdwg.mxu0
      %v4641 = vadd.f32 %v4437, %v4557
      %v4642 = vadd.f32 %v4438, %v4559
      %v4643 = vadd.f32 %v4439, %v4562
      %v4644 = vadd.f32 %v4440, %v4564
      %v4645 = vadd.f32 %v4441, %v4567
      %v4646 = vadd.f32 %v4442, %v4569
      %v4647 = vadd.f32 %v4443, %v4572
      %v4648 = vadd.f32 %v4444, %v4574
      %v4649 = vadd.f32 %v4445, %v4577
      %v4650 = vadd.f32 %v4446, %v4579
      %v4651 = vadd.f32 %v4447, %v4582
      %v4652 = vadd.f32 %v4448, %v4584
      %v4653 = vadd.f32 %v4449, %v4587
      %v4654 = vadd.f32 %v4450, %v4589
      %v4655 = vadd.f32 %v4451, %v4592
      %v4656 = vadd.f32 %v4452, %v4594
      %v4657 = vadd.f32 %v4453, %v4597
      %v4658 = vadd.f32 %v4454, %v4599
      %v4659 = vadd.f32 %v4455, %v4602
      %v4660 = vadd.f32 %v4456, %v4604
      %v4661 = vadd.f32 %v4457, %v4607
      %v4662 = vadd.f32 %v4458, %v4609
      %v4663 = vadd.f32 %v4459, %v4612
      %v4664 = vadd.f32 %v4460, %v4614
      %v4665 = vadd.f32 %v4461, %v4617
      %v4666 = vadd.f32 %v4462, %v4619
      %v4667 = vadd.f32 %v4463, %v4622
      %v4668 = vadd.f32 %v4464, %v4624
      %v4669 = vadd.f32 %v4465, %v4627
      %v4670 = vadd.f32 %v4466, %v4629
      %v4671 = vadd.f32 %v4467, %v4632
      %v4672 = vadd.f32 %v4468, %v4634
      %v4673 = vadd.f32 %v4469, %v4637
      %v4674 = vadd.f32 %v4470, %v4639
      %s4675 = scalar_lea.vmem %s226, 30
      %v4676 = vld [vmem:[%s4675] sm:$0x3]
      %v4677 = vshrl.u32 %v4476, 16
      %v4679 = vshll.u32 %v4476, 16
      %v4681 = vrot.slane %v4679, 1
      %v4682 = vor.u32 %v4677, %v4681
      %v4683 = vshll.u32 %v4477, 16
      %v4685 = vrot.slane %v4683, 1
      %v4686 = vsel %vm358, %v4682, %v4685
      %v4687 = vshrl.u32 %v4477, 16
      %v4689 = vor.u32 %v4687, %v4685
      %v4690 = vshll.u32 %v4478, 16
      %v4692 = vrot.slane %v4690, 1
      %v4693 = vsel %vm358, %v4689, %v4692
      %v4694 = vshrl.u32 %v4478, 16
      %v4696 = vor.u32 %v4694, %v4692
      %v4697 = vshll.u32 %v4479, 16
      %v4699 = vrot.slane %v4697, 1
      %v4700 = vsel %vm358, %v4696, %v4699
      %v4701 = vshrl.u32 %v4479, 16
      %v4703 = vor.u32 %v4701, %v4699
      %v4704 = vshll.u32 %v4480, 16
      %v4706 = vrot.slane %v4704, 1
      %v4707 = vsel %vm358, %v4703, %v4706
      %v4708 = vshrl.u32 %v4480, 16
      %v4710 = vor.u32 %v4708, %v4706
      %v4711 = vshll.u32 %v4481, 16
      %v4713 = vrot.slane %v4711, 1
      %v4714 = vsel %vm358, %v4710, %v4713
      %v4715 = vshrl.u32 %v4481, 16
      %v4717 = vor.u32 %v4715, %v4713
      %v4718 = vshll.u32 %v4482, 16
      %v4720 = vrot.slane %v4718, 1
      %v4721 = vsel %vm358, %v4717, %v4720
      %v4722 = vshrl.u32 %v4482, 16
      %v4724 = vor.u32 %v4722, %v4720
      %v4725 = vshll.u32 %v4483, 16
      %v4727 = vrot.slane %v4725, 1
      %v4728 = vsel %vm358, %v4724, %v4727
      %v4729 = vshrl.u32 %v4483, 16
      %v4731 = vor.u32 %v4729, %v4727
      %v4732 = vshll.u32 %v4484, 16
      %v4734 = vrot.slane %v4732, 1
      %v4735 = vsel %vm358, %v4731, %v4734
      %v4736 = vshrl.u32 %v4484, 16
      %v4738 = vor.u32 %v4736, %v4734
      %v4739 = vshll.u32 %v4485, 16
      %v4741 = vrot.slane %v4739, 1
      %v4742 = vsel %vm358, %v4738, %v4741
      %v4743 = vshrl.u32 %v4485, 16
      %v4745 = vor.u32 %v4743, %v4741
      %v4746 = vshll.u32 %v4486, 16
      %v4748 = vrot.slane %v4746, 1
      %v4749 = vsel %vm358, %v4745, %v4748
      %v4750 = vshrl.u32 %v4486, 16
      %v4752 = vor.u32 %v4750, %v4748
      %v4753 = vshll.u32 %v4487, 16
      %v4755 = vrot.slane %v4753, 1
      %v4756 = vsel %vm358, %v4752, %v4755
      %v4757 = vshrl.u32 %v4487, 16
      %v4759 = vor.u32 %v4757, %v4755
      %v4760 = vshll.u32 %v4488, 16
      %v4762 = vrot.slane %v4760, 1
      %v4763 = vsel %vm358, %v4759, %v4762
      %v4764 = vshrl.u32 %v4488, 16
      %v4766 = vor.u32 %v4764, %v4762
      %v4767 = vshll.u32 %v4489, 16
      %v4769 = vrot.slane %v4767, 1
      %v4770 = vsel %vm358, %v4766, %v4769
      %v4771 = vshrl.u32 %v4489, 16
      %v4773 = vor.u32 %v4771, %v4769
      %v4774 = vshll.u32 %v4490, 16
      %v4776 = vrot.slane %v4774, 1
      %v4777 = vsel %vm358, %v4773, %v4776
      %v4778 = vshrl.u32 %v4490, 16
      %v4780 = vor.u32 %v4778, %v4776
      %v4781 = vshll.u32 %v4491, 16
      %v4783 = vrot.slane %v4781, 1
      %v4784 = vsel %vm358, %v4780, %v4783
      %v4785 = vshrl.u32 %v4491, 16
      %v4787 = vor.u32 %v4785, %v4783
      %v4788 = vshll.u32 %v4492, 16
      %v4790 = vrot.slane %v4788, 1
      %v4791 = vsel %vm358, %v4787, %v4790
      %v4792 = vshrl.u32 %v4492, 16
      %v4794 = vor.u32 %v4792, %v4790
      %v4796 = vsel %vm494, %v4686, 0
      %v4799 = vsel %vm494, %v4693, 0
      %v4802 = vsel %vm494, %v4700, 0
      %v4805 = vsel %vm494, %v4707, 0
      %v4808 = vsel %vm494, %v4714, 0
      %v4811 = vsel %vm494, %v4721, 0
      %v4814 = vsel %vm494, %v4728, 0
      %v4817 = vsel %vm494, %v4735, 0
      %v4820 = vsel %vm494, %v4742, 0
      %v4823 = vsel %vm494, %v4749, 0
      %v4826 = vsel %vm494, %v4756, 0
      %v4829 = vsel %vm494, %v4763, 0
      %v4832 = vsel %vm494, %v4770, 0
      %v4835 = vsel %vm494, %v4777, 0
      %v4838 = vsel %vm494, %v4784, 0
      %v4841 = vsel %vm494, %v4791, 0
      %v4844 = vsel %vm494, %v4794, 0
      %v4847 = vsel %vm546, %v4676, 0
      %4849 = vmatpush.bf16.msra.mxu0 0
      %4850 = vmatpush.bf16.msra.mxu0 0
      %4851 = vmatpush.bf16.msra.mxu0 0
      %4852 = vmatpush.bf16.msra.mxu0 0
      %4853 = vmatpush.bf16.msra.mxu0 0
      %4854 = vmatpush.bf16.msra.mxu0 0
      %4855 = vmatpush.bf16.msra.mxu0 0
      %4856 = vmatpush.bf16.msra.mxu0 %v4847
      %4857 = vmatmul.bf16.gmra.mxu0 %v4796
      %v4858 = vpop.f32.mrf.mxu0
      %v4859 = vadd.f32 0.0, %v4858
      %v4860 = vpop.f32.mrf.mxu0
      %v4861 = vadd.f32 0.0, %v4860
      %4862 = vmatmul.bf16.gmra.mxu0 %v4799
      %v4863 = vpop.f32.mrf.mxu0
      %v4864 = vadd.f32 0.0, %v4863
      %v4865 = vpop.f32.mrf.mxu0
      %v4866 = vadd.f32 0.0, %v4865
      %4867 = vmatmul.bf16.gmra.mxu0 %v4802
      %v4868 = vpop.f32.mrf.mxu0
      %v4869 = vadd.f32 0.0, %v4868
      %v4870 = vpop.f32.mrf.mxu0
      %v4871 = vadd.f32 0.0, %v4870
      %4872 = vmatmul.bf16.gmra.mxu0 %v4805
      %v4873 = vpop.f32.mrf.mxu0
      %v4874 = vadd.f32 0.0, %v4873
      %v4875 = vpop.f32.mrf.mxu0
      %v4876 = vadd.f32 0.0, %v4875
      %4877 = vmatmul.bf16.gmra.mxu0 %v4808
      %v4878 = vpop.f32.mrf.mxu0
      %v4879 = vadd.f32 0.0, %v4878
      %v4880 = vpop.f32.mrf.mxu0
      %v4881 = vadd.f32 0.0, %v4880
      %4882 = vmatmul.bf16.gmra.mxu0 %v4811
      %v4883 = vpop.f32.mrf.mxu0
      %v4884 = vadd.f32 0.0, %v4883
      %v4885 = vpop.f32.mrf.mxu0
      %v4886 = vadd.f32 0.0, %v4885
      %4887 = vmatmul.bf16.gmra.mxu0 %v4814
      %v4888 = vpop.f32.mrf.mxu0
      %v4889 = vadd.f32 0.0, %v4888
      %v4890 = vpop.f32.mrf.mxu0
      %v4891 = vadd.f32 0.0, %v4890
      %4892 = vmatmul.bf16.gmra.mxu0 %v4817
      %v4893 = vpop.f32.mrf.mxu0
      %v4894 = vadd.f32 0.0, %v4893
      %v4895 = vpop.f32.mrf.mxu0
      %v4896 = vadd.f32 0.0, %v4895
      %4897 = vmatmul.bf16.gmra.mxu0 %v4820
      %v4898 = vpop.f32.mrf.mxu0
      %v4899 = vadd.f32 0.0, %v4898
      %v4900 = vpop.f32.mrf.mxu0
      %v4901 = vadd.f32 0.0, %v4900
      %4902 = vmatmul.bf16.gmra.mxu0 %v4823
      %v4903 = vpop.f32.mrf.mxu0
      %v4904 = vadd.f32 0.0, %v4903
      %v4905 = vpop.f32.mrf.mxu0
      %v4906 = vadd.f32 0.0, %v4905
      %4907 = vmatmul.bf16.gmra.mxu0 %v4826
      %v4908 = vpop.f32.mrf.mxu0
      %v4909 = vadd.f32 0.0, %v4908
      %v4910 = vpop.f32.mrf.mxu0
      %v4911 = vadd.f32 0.0, %v4910
      %4912 = vmatmul.bf16.gmra.mxu0 %v4829
      %v4913 = vpop.f32.mrf.mxu0
      %v4914 = vadd.f32 0.0, %v4913
      %v4915 = vpop.f32.mrf.mxu0
      %v4916 = vadd.f32 0.0, %v4915
      %4917 = vmatmul.bf16.gmra.mxu0 %v4832
      %v4918 = vpop.f32.mrf.mxu0
      %v4919 = vadd.f32 0.0, %v4918
      %v4920 = vpop.f32.mrf.mxu0
      %v4921 = vadd.f32 0.0, %v4920
      %4922 = vmatmul.bf16.gmra.mxu0 %v4835
      %v4923 = vpop.f32.mrf.mxu0
      %v4924 = vadd.f32 0.0, %v4923
      %v4925 = vpop.f32.mrf.mxu0
      %v4926 = vadd.f32 0.0, %v4925
      %4927 = vmatmul.bf16.gmra.mxu0 %v4838
      %v4928 = vpop.f32.mrf.mxu0
      %v4929 = vadd.f32 0.0, %v4928
      %v4930 = vpop.f32.mrf.mxu0
      %v4931 = vadd.f32 0.0, %v4930
      %4932 = vmatmul.bf16.gmra.mxu0 %v4841
      %v4933 = vpop.f32.mrf.mxu0
      %v4934 = vadd.f32 0.0, %v4933
      %v4935 = vpop.f32.mrf.mxu0
      %v4936 = vadd.f32 0.0, %v4935
      %4937 = vmatmul.bf16.gmra.mxu0 %v4844
      %v4938 = vpop.f32.mrf.mxu0
      %v4939 = vadd.f32 0.0, %v4938
      %v4940 = vpop.f32.mrf.mxu0
      %v4941 = vadd.f32 0.0, %v4940
      %4942 = vdwg.mxu0
      %v4943 = vadd.f32 %v4641, %v4859
      %v4944 = vadd.f32 %v4642, %v4861
      %v4945 = vadd.f32 %v4643, %v4864
      %v4946 = vadd.f32 %v4644, %v4866
      %v4947 = vadd.f32 %v4645, %v4869
      %v4948 = vadd.f32 %v4646, %v4871
      %v4949 = vadd.f32 %v4647, %v4874
      %v4950 = vadd.f32 %v4648, %v4876
      %v4951 = vadd.f32 %v4649, %v4879
      %v4952 = vadd.f32 %v4650, %v4881
      %v4953 = vadd.f32 %v4651, %v4884
      %v4954 = vadd.f32 %v4652, %v4886
      %v4955 = vadd.f32 %v4653, %v4889
      %v4956 = vadd.f32 %v4654, %v4891
      %v4957 = vadd.f32 %v4655, %v4894
      %v4958 = vadd.f32 %v4656, %v4896
      %v4959 = vadd.f32 %v4657, %v4899
      %v4960 = vadd.f32 %v4658, %v4901
      %v4961 = vadd.f32 %v4659, %v4904
      %v4962 = vadd.f32 %v4660, %v4906
      %v4963 = vadd.f32 %v4661, %v4909
      %v4964 = vadd.f32 %v4662, %v4911
      %v4965 = vadd.f32 %v4663, %v4914
      %v4966 = vadd.f32 %v4664, %v4916
      %v4967 = vadd.f32 %v4665, %v4919
      %v4968 = vadd.f32 %v4666, %v4921
      %v4969 = vadd.f32 %v4667, %v4924
      %v4970 = vadd.f32 %v4668, %v4926
      %v4971 = vadd.f32 %v4669, %v4929
      %v4972 = vadd.f32 %v4670, %v4931
      %v4973 = vadd.f32 %v4671, %v4934
      %v4974 = vadd.f32 %v4672, %v4936
      %v4975 = vadd.f32 %v4673, %v4939
      %v4976 = vadd.f32 %v4674, %v4941
      %v4977 = vld [vmem:[%s2] sm:$0xff]
      %v4978 = vld [vmem:[%s2 + $0x8] sm:$0xff]
      %v4979 = vld [vmem:[%s2 + $0x10] sm:$0xff]
      %v4980 = vld [vmem:[%s2 + $0x18] sm:$0xff]
      %v4981 = vld [vmem:[%s2 + $0x20] sm:$0xff]
      %v4982 = vld [vmem:[%s2 + $0x28] sm:$0xff]
      %v4983 = vld [vmem:[%s2 + $0x30] sm:$0xff]
      %v4984 = vld [vmem:[%s2 + $0x38] sm:$0xff]
      %v4985 = vld [vmem:[%s2 + $0x40] sm:$0xff]
      %v4986 = vld [vmem:[%s2 + $0x48] sm:$0xff]
      %v4987 = vld [vmem:[%s2 + $0x50] sm:$0xff]
      %v4988 = vld [vmem:[%s2 + $0x58] sm:$0xff]
      %v4989 = vld [vmem:[%s2 + $0x60] sm:$0xff]
      %v4990 = vld [vmem:[%s2 + $0x68] sm:$0xff]
      %v4991 = vld [vmem:[%s2 + $0x70] sm:$0xff]
      %v4992 = vld [vmem:[%s2 + $0x78] sm:$0xff]
      %v4993 = vld [vmem:[%s2 + $0x80] sm:$0xff]
      %v4994 = vld [vmem:[%s2 + $0x88] sm:$0xff]
      %v4995 = vld [vmem:[%s2 + $0x90] sm:$0xff]
      %v4996 = vld [vmem:[%s2 + $0x98] sm:$0xff]
      %v4997 = vld [vmem:[%s2 + $0xa0] sm:$0xff]
      %v4998 = vld [vmem:[%s2 + $0xa8] sm:$0xff]
      %v4999 = vld [vmem:[%s2 + $0xb0] sm:$0xff]
      %v5000 = vld [vmem:[%s2 + $0xb8] sm:$0xff]
      %v5001 = vld [vmem:[%s2 + $0xc0] sm:$0xff]
      %v5002 = vld [vmem:[%s2 + $0xc8] sm:$0xff]
      %v5003 = vld [vmem:[%s2 + $0xd0] sm:$0xff]
      %v5004 = vld [vmem:[%s2 + $0xd8] sm:$0xff]
      %v5005 = vld [vmem:[%s2 + $0xe0] sm:$0xff]
      %v5006 = vld [vmem:[%s2 + $0xe8] sm:$0xff]
      %v5007 = vld [vmem:[%s2 + $0xf0] sm:$0xff]
      %v5008 = vld [vmem:[%s2 + $0xf8] sm:$0xff]
      %v5009 = vld [vmem:[%s2 + $0x100] sm:$0xff]
      %v5010 = vld [vmem:[%s2 + $0x108] sm:$0x7]
      %5012 = vset.pattern.permute.xlu0 0
      %5013 = vperm.xlu0 %5012, %v4977
      %v5014 = vpop.permute.xlu0 %5013
      %5017 = vset.pattern.permute.xlu0 0
      %5018 = vperm.xlu0 %5017, %v4978
      %v5019 = vpop.permute.xlu0 %5018
      %5022 = vset.pattern.permute.xlu0 0
      %5023 = vperm.xlu0 %5022, %v4979
      %v5024 = vpop.permute.xlu0 %5023
      %5027 = vset.pattern.permute.xlu0 0
      %5028 = vperm.xlu0 %5027, %v4980
      %v5029 = vpop.permute.xlu0 %5028
      %5032 = vset.pattern.permute.xlu0 0
      %5033 = vperm.xlu0 %5032, %v4981
      %v5034 = vpop.permute.xlu0 %5033
      %5037 = vset.pattern.permute.xlu0 0
      %5038 = vperm.xlu0 %5037, %v4982
      %v5039 = vpop.permute.xlu0 %5038
      %5042 = vset.pattern.permute.xlu0 0
      %5043 = vperm.xlu0 %5042, %v4983
      %v5044 = vpop.permute.xlu0 %5043
      %5047 = vset.pattern.permute.xlu0 0
      %5048 = vperm.xlu0 %5047, %v4984
      %v5049 = vpop.permute.xlu0 %5048
      %5052 = vset.pattern.permute.xlu0 0
      %5053 = vperm.xlu0 %5052, %v4985
      %v5054 = vpop.permute.xlu0 %5053
      %5057 = vset.pattern.permute.xlu0 0
      %5058 = vperm.xlu0 %5057, %v4986
      %v5059 = vpop.permute.xlu0 %5058
      %5062 = vset.pattern.permute.xlu0 0
      %5063 = vperm.xlu0 %5062, %v4987
      %v5064 = vpop.permute.xlu0 %5063
      %5067 = vset.pattern.permute.xlu0 0
      %5068 = vperm.xlu0 %5067, %v4988
      %v5069 = vpop.permute.xlu0 %5068
      %5072 = vset.pattern.permute.xlu0 0
      %5073 = vperm.xlu0 %5072, %v4989
      %v5074 = vpop.permute.xlu0 %5073
      %5077 = vset.pattern.permute.xlu0 0
      %5078 = vperm.xlu0 %5077, %v4990
      %v5079 = vpop.permute.xlu0 %5078
      %5082 = vset.pattern.permute.xlu0 0
      %5083 = vperm.xlu0 %5082, %v4991
      %v5084 = vpop.permute.xlu0 %5083
      %5087 = vset.pattern.permute.xlu0 0
      %5088 = vperm.xlu0 %5087, %v4992
      %v5089 = vpop.permute.xlu0 %5088
      %5092 = vset.pattern.permute.xlu0 0
      %5093 = vperm.xlu0 %5092, %v4993
      %v5094 = vpop.permute.xlu0 %5093
      %5097 = vset.pattern.permute.xlu0 0
      %5098 = vperm.xlu0 %5097, %v4994
      %v5099 = vpop.permute.xlu0 %5098
      %5102 = vset.pattern.permute.xlu0 0
      %5103 = vperm.xlu0 %5102, %v4995
      %v5104 = vpop.permute.xlu0 %5103
      %5107 = vset.pattern.permute.xlu0 0
      %5108 = vperm.xlu0 %5107, %v4996
      %v5109 = vpop.permute.xlu0 %5108
      %5112 = vset.pattern.permute.xlu0 0
      %5113 = vperm.xlu0 %5112, %v4997
      %v5114 = vpop.permute.xlu0 %5113
      %5117 = vset.pattern.permute.xlu0 0
      %5118 = vperm.xlu0 %5117, %v4998
      %v5119 = vpop.permute.xlu0 %5118
      %5122 = vset.pattern.permute.xlu0 0
      %5123 = vperm.xlu0 %5122, %v4999
      %v5124 = vpop.permute.xlu0 %5123
      %5127 = vset.pattern.permute.xlu0 0
      %5128 = vperm.xlu0 %5127, %v5000
      %v5129 = vpop.permute.xlu0 %5128
      %5132 = vset.pattern.permute.xlu0 0
      %5133 = vperm.xlu0 %5132, %v5001
      %v5134 = vpop.permute.xlu0 %5133
      %5137 = vset.pattern.permute.xlu0 0
      %5138 = vperm.xlu0 %5137, %v5002
      %v5139 = vpop.permute.xlu0 %5138
      %5142 = vset.pattern.permute.xlu0 0
      %5143 = vperm.xlu0 %5142, %v5003
      %v5144 = vpop.permute.xlu0 %5143
      %5147 = vset.pattern.permute.xlu0 0
      %5148 = vperm.xlu0 %5147, %v5004
      %v5149 = vpop.permute.xlu0 %5148
      %5152 = vset.pattern.permute.xlu0 0
      %5153 = vperm.xlu0 %5152, %v5005
      %v5154 = vpop.permute.xlu0 %5153
      %5157 = vset.pattern.permute.xlu0 0
      %5158 = vperm.xlu0 %5157, %v5006
      %v5159 = vpop.permute.xlu0 %5158
      %5162 = vset.pattern.permute.xlu0 0
      %5163 = vperm.xlu0 %5162, %v5007
      %v5164 = vpop.permute.xlu0 %5163
      %5167 = vset.pattern.permute.xlu0 0
      %5168 = vperm.xlu0 %5167, %v5008
      %v5169 = vpop.permute.xlu0 %5168
      %5172 = vset.pattern.permute.xlu0 0
      %5173 = vperm.xlu0 %5172, %v5009
      %v5174 = vpop.permute.xlu0 %5173
      %5177 = vset.pattern.permute.xlu0 0
      %5178 = vperm.xlu0 %5177, %v5010
      %v5179 = vpop.permute.xlu0 %5178
      %v5181 = vmul.f32 %v4943, %v5014
      %v5182 = vmul.f32 %v4944, %v5019
      %v5183 = vmul.f32 %v4945, %v5024
      %v5184 = vmul.f32 %v4946, %v5029
      %v5185 = vmul.f32 %v4947, %v5034
      %v5186 = vmul.f32 %v4948, %v5039
      %v5187 = vmul.f32 %v4949, %v5044
      %v5188 = vmul.f32 %v4950, %v5049
      %v5189 = vmul.f32 %v4951, %v5054
      %v5190 = vmul.f32 %v4952, %v5059
      %v5191 = vmul.f32 %v4953, %v5064
      %v5192 = vmul.f32 %v4954, %v5069
      %v5193 = vmul.f32 %v4955, %v5074
      %v5194 = vmul.f32 %v4956, %v5079
      %v5195 = vmul.f32 %v4957, %v5084
      %v5196 = vmul.f32 %v4958, %v5089
      %v5197 = vmul.f32 %v4959, %v5094
      %v5198 = vmul.f32 %v4960, %v5099
      %v5199 = vmul.f32 %v4961, %v5104
      %v5200 = vmul.f32 %v4962, %v5109
      %v5201 = vmul.f32 %v4963, %v5114
      %v5202 = vmul.f32 %v4964, %v5119
      %v5203 = vmul.f32 %v4965, %v5124
      %v5204 = vmul.f32 %v4966, %v5129
      %v5205 = vmul.f32 %v4967, %v5134
      %v5206 = vmul.f32 %v4968, %v5139
      %v5207 = vmul.f32 %v4969, %v5144
      %v5208 = vmul.f32 %v4970, %v5149
      %v5209 = vmul.f32 %v4971, %v5154
      %v5210 = vmul.f32 %v4972, %v5159
      %v5211 = vmul.f32 %v4973, %v5164
      %v5212 = vmul.f32 %v4974, %v5169
      %v5213 = vmul.f32 %v4975, %v5174
      %v5214 = vmul.f32 %v4976, %v5179
      %vm5215 = vcmask 64512
      %v5216 = vsel %vm5215, %v5181, 0.0
      %v5217 = vsel %vm5215, %v5182, 0.0
      %v5218 = vadd.f32 %v5216, %v5217
      %v5219 = vsel %vm5215, %v5183, 0.0
      %v5220 = vadd.f32 %v5218, %v5219
      %v5221 = vsel %vm5215, %v5184, 0.0
      %v5222 = vadd.f32 %v5220, %v5221
      %v5223 = vsel %vm5215, %v5185, 0.0
      %v5224 = vadd.f32 %v5222, %v5223
      %v5225 = vsel %vm5215, %v5186, 0.0
      %v5226 = vadd.f32 %v5224, %v5225
      %v5227 = vsel %vm5215, %v5187, 0.0
      %v5228 = vadd.f32 %v5226, %v5227
      %v5229 = vsel %vm5215, %v5188, 0.0
      %v5230 = vadd.f32 %v5228, %v5229
      %v5231 = vsel %vm5215, %v5189, 0.0
      %v5232 = vadd.f32 %v5230, %v5231
      %v5233 = vsel %vm5215, %v5190, 0.0
      %v5234 = vadd.f32 %v5232, %v5233
      %v5235 = vsel %vm5215, %v5191, 0.0
      %v5236 = vadd.f32 %v5234, %v5235
      %v5237 = vsel %vm5215, %v5192, 0.0
      %v5238 = vadd.f32 %v5236, %v5237
      %v5239 = vsel %vm5215, %v5193, 0.0
      %v5240 = vadd.f32 %v5238, %v5239
      %v5241 = vsel %vm5215, %v5194, 0.0
      %v5242 = vadd.f32 %v5240, %v5241
      %v5243 = vsel %vm5215, %v5195, 0.0
      %v5244 = vadd.f32 %v5242, %v5243
      %v5245 = vsel %vm5215, %v5196, 0.0
      %v5246 = vadd.f32 %v5244, %v5245
      %v5247 = vsel %vm5215, %v5197, 0.0
      %v5248 = vadd.f32 %v5246, %v5247
      %v5249 = vsel %vm5215, %v5198, 0.0
      %v5250 = vadd.f32 %v5248, %v5249
      %v5251 = vsel %vm5215, %v5199, 0.0
      %v5252 = vadd.f32 %v5250, %v5251
      %v5253 = vsel %vm5215, %v5200, 0.0
      %v5254 = vadd.f32 %v5252, %v5253
      %v5255 = vsel %vm5215, %v5201, 0.0
      %v5256 = vadd.f32 %v5254, %v5255
      %v5257 = vsel %vm5215, %v5202, 0.0
      %v5258 = vadd.f32 %v5256, %v5257
      %v5259 = vsel %vm5215, %v5203, 0.0
      %v5260 = vadd.f32 %v5258, %v5259
      %v5261 = vsel %vm5215, %v5204, 0.0
      %v5262 = vadd.f32 %v5260, %v5261
      %v5263 = vsel %vm5215, %v5205, 0.0
      %v5264 = vadd.f32 %v5262, %v5263
      %v5265 = vsel %vm5215, %v5206, 0.0
      %v5266 = vadd.f32 %v5264, %v5265
      %v5267 = vsel %vm5215, %v5207, 0.0
      %v5268 = vadd.f32 %v5266, %v5267
      %v5269 = vsel %vm5215, %v5208, 0.0
      %v5270 = vadd.f32 %v5268, %v5269
      %v5271 = vsel %vm5215, %v5209, 0.0
      %v5272 = vadd.f32 %v5270, %v5271
      %v5273 = vsel %vm5215, %v5210, 0.0
      %v5274 = vadd.f32 %v5272, %v5273
      %v5275 = vsel %vm5215, %v5211, 0.0
      %v5276 = vadd.f32 %v5274, %v5275
      %v5277 = vsel %vm5215, %v5212, 0.0
      %v5278 = vadd.f32 %v5276, %v5277
      %v5279 = vsel %vm5215, %v5213, 0.0
      %v5280 = vadd.f32 %v5278, %v5279
      %vm5281 = vcmask 59392
      %v5282 = vsel %vm5281, %v5214, 0.0
      %v5283 = vadd.f32 %v5280, %v5282
      %v5284 = vrot.slane %v5283, 4
      %v5285 = vadd.f32 %v5283, %v5284
      %v5286 = vrot.slane %v5285, 2
      %v5287 = vadd.f32 %v5285, %v5286
      %v5288 = vrot.slane %v5287, 1
      %v5289 = vadd.f32 %v5287, %v5288
      %v5290 = vmul.f32 %v4943, %v4943
      %v5291 = vmul.f32 %v4944, %v4944
      %v5292 = vmul.f32 %v4945, %v4945
      %v5293 = vmul.f32 %v4946, %v4946
      %v5294 = vmul.f32 %v4947, %v4947
      %v5295 = vmul.f32 %v4948, %v4948
      %v5296 = vmul.f32 %v4949, %v4949
      %v5297 = vmul.f32 %v4950, %v4950
      %v5298 = vmul.f32 %v4951, %v4951
      %v5299 = vmul.f32 %v4952, %v4952
      %v5300 = vmul.f32 %v4953, %v4953
      %v5301 = vmul.f32 %v4954, %v4954
      %v5302 = vmul.f32 %v4955, %v4955
      %v5303 = vmul.f32 %v4956, %v4956
      %v5304 = vmul.f32 %v4957, %v4957
      %v5305 = vmul.f32 %v4958, %v4958
      %v5306 = vmul.f32 %v4959, %v4959
      %v5307 = vmul.f32 %v4960, %v4960
      %v5308 = vmul.f32 %v4961, %v4961
      %v5309 = vmul.f32 %v4962, %v4962
      %v5310 = vmul.f32 %v4963, %v4963
      %v5311 = vmul.f32 %v4964, %v4964
      %v5312 = vmul.f32 %v4965, %v4965
      %v5313 = vmul.f32 %v4966, %v4966
      %v5314 = vmul.f32 %v4967, %v4967
      %v5315 = vmul.f32 %v4968, %v4968
      %v5316 = vmul.f32 %v4969, %v4969
      %v5317 = vmul.f32 %v4970, %v4970
      %v5318 = vmul.f32 %v4971, %v4971
      %v5319 = vmul.f32 %v4972, %v4972
      %v5320 = vmul.f32 %v4973, %v4973
      %v5321 = vmul.f32 %v4974, %v4974
      %v5322 = vmul.f32 %v4975, %v4975
      %v5323 = vmul.f32 %v4976, %v4976
      %v5324 = vmul.f32 %v5290, %v5014
      %v5325 = vmul.f32 %v5291, %v5019
      %v5326 = vmul.f32 %v5292, %v5024
      %v5327 = vmul.f32 %v5293, %v5029
      %v5328 = vmul.f32 %v5294, %v5034
      %v5329 = vmul.f32 %v5295, %v5039
      %v5330 = vmul.f32 %v5296, %v5044
      %v5331 = vmul.f32 %v5297, %v5049
      %v5332 = vmul.f32 %v5298, %v5054
      %v5333 = vmul.f32 %v5299, %v5059
      %v5334 = vmul.f32 %v5300, %v5064
      %v5335 = vmul.f32 %v5301, %v5069
      %v5336 = vmul.f32 %v5302, %v5074
      %v5337 = vmul.f32 %v5303, %v5079
      %v5338 = vmul.f32 %v5304, %v5084
      %v5339 = vmul.f32 %v5305, %v5089
      %v5340 = vmul.f32 %v5306, %v5094
      %v5341 = vmul.f32 %v5307, %v5099
      %v5342 = vmul.f32 %v5308, %v5104
      %v5343 = vmul.f32 %v5309, %v5109
      %v5344 = vmul.f32 %v5310, %v5114
      %v5345 = vmul.f32 %v5311, %v5119
      %v5346 = vmul.f32 %v5312, %v5124
      %v5347 = vmul.f32 %v5313, %v5129
      %v5348 = vmul.f32 %v5314, %v5134
      %v5349 = vmul.f32 %v5315, %v5139
      %v5350 = vmul.f32 %v5316, %v5144
      %v5351 = vmul.f32 %v5317, %v5149
      %v5352 = vmul.f32 %v5318, %v5154
      %v5353 = vmul.f32 %v5319, %v5159
      %v5354 = vmul.f32 %v5320, %v5164
      %v5355 = vmul.f32 %v5321, %v5169
      %v5356 = vmul.f32 %v5322, %v5174
      %v5357 = vmul.f32 %v5323, %v5179
      %v5358 = vsel %vm5215, %v5324, 0.0
      %v5359 = vsel %vm5215, %v5325, 0.0
      %v5360 = vadd.f32 %v5358, %v5359
      %v5361 = vsel %vm5215, %v5326, 0.0
      %v5362 = vadd.f32 %v5360, %v5361
      %v5363 = vsel %vm5215, %v5327, 0.0
      %v5364 = vadd.f32 %v5362, %v5363
      %v5365 = vsel %vm5215, %v5328, 0.0
      %v5366 = vadd.f32 %v5364, %v5365
      %v5367 = vsel %vm5215, %v5329, 0.0
      %v5368 = vadd.f32 %v5366, %v5367
      %v5369 = vsel %vm5215, %v5330, 0.0
      %v5370 = vadd.f32 %v5368, %v5369
      %v5371 = vsel %vm5215, %v5331, 0.0
      %v5372 = vadd.f32 %v5370, %v5371
      %v5373 = vsel %vm5215, %v5332, 0.0
      %v5374 = vadd.f32 %v5372, %v5373
      %v5375 = vsel %vm5215, %v5333, 0.0
      %v5376 = vadd.f32 %v5374, %v5375
      %v5377 = vsel %vm5215, %v5334, 0.0
      %v5378 = vadd.f32 %v5376, %v5377
      %v5379 = vsel %vm5215, %v5335, 0.0
      %v5380 = vadd.f32 %v5378, %v5379
      %v5381 = vsel %vm5215, %v5336, 0.0
      %v5382 = vadd.f32 %v5380, %v5381
      %v5383 = vsel %vm5215, %v5337, 0.0
      %v5384 = vadd.f32 %v5382, %v5383
      %v5385 = vsel %vm5215, %v5338, 0.0
      %v5386 = vadd.f32 %v5384, %v5385
      %v5387 = vsel %vm5215, %v5339, 0.0
      %v5388 = vadd.f32 %v5386, %v5387
      %v5389 = vsel %vm5215, %v5340, 0.0
      %v5390 = vadd.f32 %v5388, %v5389
      %v5391 = vsel %vm5215, %v5341, 0.0
      %v5392 = vadd.f32 %v5390, %v5391
      %v5393 = vsel %vm5215, %v5342, 0.0
      %v5394 = vadd.f32 %v5392, %v5393
      %v5395 = vsel %vm5215, %v5343, 0.0
      %v5396 = vadd.f32 %v5394, %v5395
      %v5397 = vsel %vm5215, %v5344, 0.0
      %v5398 = vadd.f32 %v5396, %v5397
      %v5399 = vsel %vm5215, %v5345, 0.0
      %v5400 = vadd.f32 %v5398, %v5399
      %v5401 = vsel %vm5215, %v5346, 0.0
      %v5402 = vadd.f32 %v5400, %v5401
      %v5403 = vsel %vm5215, %v5347, 0.0
      %v5404 = vadd.f32 %v5402, %v5403
      %v5405 = vsel %vm5215, %v5348, 0.0
      %v5406 = vadd.f32 %v5404, %v5405
      %v5407 = vsel %vm5215, %v5349, 0.0
      %v5408 = vadd.f32 %v5406, %v5407
      %v5409 = vsel %vm5215, %v5350, 0.0
      %v5410 = vadd.f32 %v5408, %v5409
      %v5411 = vsel %vm5215, %v5351, 0.0
      %v5412 = vadd.f32 %v5410, %v5411
      %v5413 = vsel %vm5215, %v5352, 0.0
      %v5414 = vadd.f32 %v5412, %v5413
      %v5415 = vsel %vm5215, %v5353, 0.0
      %v5416 = vadd.f32 %v5414, %v5415
      %v5417 = vsel %vm5215, %v5354, 0.0
      %v5418 = vadd.f32 %v5416, %v5417
      %v5419 = vsel %vm5215, %v5355, 0.0
      %v5420 = vadd.f32 %v5418, %v5419
      %v5421 = vsel %vm5215, %v5356, 0.0
      %v5422 = vadd.f32 %v5420, %v5421
      %v5423 = vsel %vm5281, %v5357, 0.0
      %v5424 = vadd.f32 %v5422, %v5423
      %v5425 = vrot.slane %v5424, 4
      %v5426 = vadd.f32 %v5424, %v5425
      %v5427 = vrot.slane %v5426, 2
      %v5428 = vadd.f32 %v5426, %v5427
      %v5429 = vrot.slane %v5428, 1
      %v5430 = vadd.f32 %v5428, %v5429
      %v5431 = vmul.f32 %v5289, 0.0044444446
      %v5432 = vmul.f32 %v5430, 0.0044444446
      %v5433 = vmul.f32 %v5431, %v5431
      %v5434 = vsub.f32 %v5432, %v5433
      %v5435 = vmax.f32 %v5434, 0.0
      %v5436 = vsub.f32 %v4943, %v5431
      %v5437 = vsub.f32 %v4944, %v5431
      %v5438 = vsub.f32 %v4945, %v5431
      %v5439 = vsub.f32 %v4946, %v5431
      %v5440 = vsub.f32 %v4947, %v5431
      %v5441 = vsub.f32 %v4948, %v5431
      %v5442 = vsub.f32 %v4949, %v5431
      %v5443 = vsub.f32 %v4950, %v5431
      %v5444 = vsub.f32 %v4951, %v5431
      %v5445 = vsub.f32 %v4952, %v5431
      %v5446 = vsub.f32 %v4953, %v5431
      %v5447 = vsub.f32 %v4954, %v5431
      %v5448 = vsub.f32 %v4955, %v5431
      %v5449 = vsub.f32 %v4956, %v5431
      %v5450 = vsub.f32 %v4957, %v5431
      %v5451 = vsub.f32 %v4958, %v5431
      %v5452 = vsub.f32 %v4959, %v5431
      %v5453 = vsub.f32 %v4960, %v5431
      %v5454 = vsub.f32 %v4961, %v5431
      %v5455 = vsub.f32 %v4962, %v5431
      %v5456 = vsub.f32 %v4963, %v5431
      %v5457 = vsub.f32 %v4964, %v5431
      %v5458 = vsub.f32 %v4965, %v5431
      %v5459 = vsub.f32 %v4966, %v5431
      %v5460 = vsub.f32 %v4967, %v5431
      %v5461 = vsub.f32 %v4968, %v5431
      %v5462 = vsub.f32 %v4969, %v5431
      %v5463 = vsub.f32 %v4970, %v5431
      %v5464 = vsub.f32 %v4971, %v5431
      %v5465 = vsub.f32 %v4972, %v5431
      %v5466 = vsub.f32 %v4973, %v5431
      %v5467 = vsub.f32 %v4974, %v5431
      %v5468 = vsub.f32 %v4975, %v5431
      %v5469 = vsub.f32 %v4976, %v5431
      %v5470 = vadd.f32 %v5435, 1e-05
      %v5471 = vrsqrt.pop %v5470
      %v5472 = vmul.f32 %v5471, %v5470
      %v5473 = vmul.f32 %v5472, %v5471
      %v5474 = vmul.f32 0.5, %v5473
      %v5475 = vsub.f32 1.5, %v5474
      %v5476 = vmul.f32 %v5471, %v5475
      %vm5477 = vweird.f32 %v5470
      %vm5478 = vweird.f32 %v5471
      %vm5479 = vmor %vm5477, %vm5478
      %v5480 = vsel %vm5479, %v5471, %v5476
      %v5481 = vmul.f32 %v5436, %v5480
      %v5482 = vmul.f32 %v5437, %v5480
      %v5483 = vmul.f32 %v5438, %v5480
      %v5484 = vmul.f32 %v5439, %v5480
      %v5485 = vmul.f32 %v5440, %v5480
      %v5486 = vmul.f32 %v5441, %v5480
      %v5487 = vmul.f32 %v5442, %v5480
      %v5488 = vmul.f32 %v5443, %v5480
      %v5489 = vmul.f32 %v5444, %v5480
      %v5490 = vmul.f32 %v5445, %v5480
      %v5491 = vmul.f32 %v5446, %v5480
      %v5492 = vmul.f32 %v5447, %v5480
      %v5493 = vmul.f32 %v5448, %v5480
      %v5494 = vmul.f32 %v5449, %v5480
      %v5495 = vmul.f32 %v5450, %v5480
      %v5496 = vmul.f32 %v5451, %v5480
      %v5497 = vmul.f32 %v5452, %v5480
      %v5498 = vmul.f32 %v5453, %v5480
      %v5499 = vmul.f32 %v5454, %v5480
      %v5500 = vmul.f32 %v5455, %v5480
      %v5501 = vmul.f32 %v5456, %v5480
      %v5502 = vmul.f32 %v5457, %v5480
      %v5503 = vmul.f32 %v5458, %v5480
      %v5504 = vmul.f32 %v5459, %v5480
      %v5505 = vmul.f32 %v5460, %v5480
      %v5506 = vmul.f32 %v5461, %v5480
      %v5507 = vmul.f32 %v5462, %v5480
      %v5508 = vmul.f32 %v5463, %v5480
      %v5509 = vmul.f32 %v5464, %v5480
      %v5510 = vmul.f32 %v5465, %v5480
      %v5511 = vmul.f32 %v5466, %v5480
      %v5512 = vmul.f32 %v5467, %v5480
      %v5513 = vmul.f32 %v5468, %v5480
      %v5514 = vmul.f32 %v5469, %v5480
      %vm5515 = vcmp.gt.f32.partialorder %v5481, 0.0
      %vm5516 = vcmp.gt.f32.partialorder %v5482, 0.0
      %vm5517 = vcmp.gt.f32.partialorder %v5483, 0.0
      %vm5518 = vcmp.gt.f32.partialorder %v5484, 0.0
      %vm5519 = vcmp.gt.f32.partialorder %v5485, 0.0
      %vm5520 = vcmp.gt.f32.partialorder %v5486, 0.0
      %vm5521 = vcmp.gt.f32.partialorder %v5487, 0.0
      %vm5522 = vcmp.gt.f32.partialorder %v5488, 0.0
      %vm5523 = vcmp.gt.f32.partialorder %v5489, 0.0
      %vm5524 = vcmp.gt.f32.partialorder %v5490, 0.0
      %vm5525 = vcmp.gt.f32.partialorder %v5491, 0.0
      %vm5526 = vcmp.gt.f32.partialorder %v5492, 0.0
      %vm5527 = vcmp.gt.f32.partialorder %v5493, 0.0
      %vm5528 = vcmp.gt.f32.partialorder %v5494, 0.0
      %vm5529 = vcmp.gt.f32.partialorder %v5495, 0.0
      %vm5530 = vcmp.gt.f32.partialorder %v5496, 0.0
      %vm5531 = vcmp.gt.f32.partialorder %v5497, 0.0
      %vm5532 = vcmp.gt.f32.partialorder %v5498, 0.0
      %vm5533 = vcmp.gt.f32.partialorder %v5499, 0.0
      %vm5534 = vcmp.gt.f32.partialorder %v5500, 0.0
      %vm5535 = vcmp.gt.f32.partialorder %v5501, 0.0
      %vm5536 = vcmp.gt.f32.partialorder %v5502, 0.0
      %vm5537 = vcmp.gt.f32.partialorder %v5503, 0.0
      %vm5538 = vcmp.gt.f32.partialorder %v5504, 0.0
      %vm5539 = vcmp.gt.f32.partialorder %v5505, 0.0
      %vm5540 = vcmp.gt.f32.partialorder %v5506, 0.0
      %vm5541 = vcmp.gt.f32.partialorder %v5507, 0.0
      %vm5542 = vcmp.gt.f32.partialorder %v5508, 0.0
      %vm5543 = vcmp.gt.f32.partialorder %v5509, 0.0
      %vm5544 = vcmp.gt.f32.partialorder %v5510, 0.0
      %vm5545 = vcmp.gt.f32.partialorder %v5511, 0.0
      %vm5546 = vcmp.gt.f32.partialorder %v5512, 0.0
      %vm5547 = vcmp.gt.f32.partialorder %v5513, 0.0
      %vm5548 = vcmp.gt.f32.partialorder %v5514, 0.0
      %v5549 = vmul.f32 %v5481, 0.2
      %v5550 = vmul.f32 %v5482, 0.2
      %v5551 = vmul.f32 %v5483, 0.2
      %v5552 = vmul.f32 %v5484, 0.2
      %v5553 = vmul.f32 %v5485, 0.2
      %v5554 = vmul.f32 %v5486, 0.2
      %v5555 = vmul.f32 %v5487, 0.2
      %v5556 = vmul.f32 %v5488, 0.2
      %v5557 = vmul.f32 %v5489, 0.2
      %v5558 = vmul.f32 %v5490, 0.2
      %v5559 = vmul.f32 %v5491, 0.2
      %v5560 = vmul.f32 %v5492, 0.2
      %v5561 = vmul.f32 %v5493, 0.2
      %v5562 = vmul.f32 %v5494, 0.2
      %v5563 = vmul.f32 %v5495, 0.2
      %v5564 = vmul.f32 %v5496, 0.2
      %v5565 = vmul.f32 %v5497, 0.2
      %v5566 = vmul.f32 %v5498, 0.2
      %v5567 = vmul.f32 %v5499, 0.2
      %v5568 = vmul.f32 %v5500, 0.2
      %v5569 = vmul.f32 %v5501, 0.2
      %v5570 = vmul.f32 %v5502, 0.2
      %v5571 = vmul.f32 %v5503, 0.2
      %v5572 = vmul.f32 %v5504, 0.2
      %v5573 = vmul.f32 %v5505, 0.2
      %v5574 = vmul.f32 %v5506, 0.2
      %v5575 = vmul.f32 %v5507, 0.2
      %v5576 = vmul.f32 %v5508, 0.2
      %v5577 = vmul.f32 %v5509, 0.2
      %v5578 = vmul.f32 %v5510, 0.2
      %v5579 = vmul.f32 %v5511, 0.2
      %v5580 = vmul.f32 %v5512, 0.2
      %v5581 = vmul.f32 %v5513, 0.2
      %v5582 = vmul.f32 %v5514, 0.2
      %v5583 = vsel %vm5515, %v5481, %v5549
      %v5584 = vsel %vm5516, %v5482, %v5550
      %v5585 = vsel %vm5517, %v5483, %v5551
      %v5586 = vsel %vm5518, %v5484, %v5552
      %v5587 = vsel %vm5519, %v5485, %v5553
      %v5588 = vsel %vm5520, %v5486, %v5554
      %v5589 = vsel %vm5521, %v5487, %v5555
      %v5590 = vsel %vm5522, %v5488, %v5556
      %v5591 = vsel %vm5523, %v5489, %v5557
      %v5592 = vsel %vm5524, %v5490, %v5558
      %v5593 = vsel %vm5525, %v5491, %v5559
      %v5594 = vsel %vm5526, %v5492, %v5560
      %v5595 = vsel %vm5527, %v5493, %v5561
      %v5596 = vsel %vm5528, %v5494, %v5562
      %v5597 = vsel %vm5529, %v5495, %v5563
      %v5598 = vsel %vm5530, %v5496, %v5564
      %v5599 = vsel %vm5531, %v5497, %v5565
      %v5600 = vsel %vm5532, %v5498, %v5566
      %v5601 = vsel %vm5533, %v5499, %v5567
      %v5602 = vsel %vm5534, %v5500, %v5568
      %v5603 = vsel %vm5535, %v5501, %v5569
      %v5604 = vsel %vm5536, %v5502, %v5570
      %v5605 = vsel %vm5537, %v5503, %v5571
      %v5606 = vsel %vm5538, %v5504, %v5572
      %v5607 = vsel %vm5539, %v5505, %v5573
      %v5608 = vsel %vm5540, %v5506, %v5574
      %v5609 = vsel %vm5541, %v5507, %v5575
      %v5610 = vsel %vm5542, %v5508, %v5576
      %v5611 = vsel %vm5543, %v5509, %v5577
      %v5612 = vsel %vm5544, %v5510, %v5578
      %v5613 = vsel %vm5545, %v5511, %v5579
      %v5614 = vsel %vm5546, %v5512, %v5580
      %v5615 = vsel %vm5547, %v5513, %v5581
      %v5616 = vsel %vm5548, %v5514, %v5582
      %v5617 = vld [vmem:[%s3] sm:$0xff]
      %v5618 = vld [vmem:[%s3 + $0x8] sm:$0xf]
      %v5619 = vld [vmem:[%s3 + $0xc] sm:$0xff]
      %v5620 = vld [vmem:[%s3 + $0x14] sm:$0xf]
      %v5621 = vld [vmem:[%s3 + $0x18] sm:$0xff]
      %v5622 = vld [vmem:[%s3 + $0x20] sm:$0xf]
      %v5623 = vld [vmem:[%s3 + $0x24] sm:$0xff]
      %v5624 = vld [vmem:[%s3 + $0x2c] sm:$0xf]
      %v5625 = vld [vmem:[%s3 + $0x30] sm:$0xff]
      %v5626 = vld [vmem:[%s3 + $0x38] sm:$0xf]
      %v5627 = vld [vmem:[%s3 + $0x3c] sm:$0xff]
      %v5628 = vld [vmem:[%s3 + $0x44] sm:$0xf]
      %v5629 = vld [vmem:[%s3 + $0x48] sm:$0xff]
      %v5630 = vld [vmem:[%s3 + $0x50] sm:$0xf]
      %v5631 = vld [vmem:[%s3 + $0x54] sm:$0xff]
      %v5632 = vld [vmem:[%s3 + $0x5c] sm:$0xf]
      %v5633 = vpack.c.bf16 %v5584, %v5583
      %v5634 = vpack.c.bf16 %v5586, %v5585
      %v5635 = vpack.c.bf16 %v5588, %v5587
      %v5636 = vpack.c.bf16 %v5590, %v5589
      %v5637 = vpack.c.bf16 %v5592, %v5591
      %v5638 = vpack.c.bf16 %v5594, %v5593
      %v5639 = vpack.c.bf16 %v5596, %v5595
      %v5640 = vpack.c.bf16 %v5598, %v5597
      %v5641 = vpack.c.bf16 %v5600, %v5599
      %v5642 = vpack.c.bf16 %v5602, %v5601
      %v5643 = vpack.c.bf16 %v5604, %v5603
      %v5644 = vpack.c.bf16 %v5606, %v5605
      %v5645 = vpack.c.bf16 %v5608, %v5607
      %v5646 = vpack.c.bf16 %v5610, %v5609
      %v5647 = vpack.c.bf16 %v5612, %v5611
      %v5648 = vpack.c.bf16 %v5614, %v5613
      %v5649 = vpack.c.bf16 %v5616, %v5615
      %v5666 = vunpack.c.l.b16 %v5617
      %v5667 = vunpack.c.h.b16 %v5617
      %v5668 = vunpack.c.l.b16 %v5618
      %v5669 = vunpack.c.l.b16 %v5619
      %v5670 = vunpack.c.h.b16 %v5619
      %v5671 = vunpack.c.l.b16 %v5620
      %v5672 = vunpack.c.l.b16 %v5621
      %v5673 = vunpack.c.h.b16 %v5621
      %v5674 = vunpack.c.l.b16 %v5622
      %v5675 = vunpack.c.l.b16 %v5623
      %v5676 = vunpack.c.h.b16 %v5623
      %v5677 = vunpack.c.l.b16 %v5624
      %v5678 = vunpack.c.l.b16 %v5625
      %v5679 = vunpack.c.h.b16 %v5625
      %v5680 = vunpack.c.l.b16 %v5626
      %v5681 = vunpack.c.l.b16 %v5627
      %v5682 = vunpack.c.h.b16 %v5627
      %v5683 = vunpack.c.l.b16 %v5628
      %v5684 = vunpack.c.l.b16 %v5629
      %v5685 = vunpack.c.h.b16 %v5629
      %v5686 = vunpack.c.l.b16 %v5630
      %v5687 = vunpack.c.l.b16 %v5631
      %v5688 = vunpack.c.h.b16 %v5631
      %v5689 = vunpack.c.l.b16 %v5632
      %v5690 = vpack.c.b16 %v5669, %v5666
      %v5691 = vpack.c.b16 %v5670, %v5667
      %v5692 = vpack.c.b16 %v5671, %v5668
      %v5693 = vpack.c.b16 %v5675, %v5672
      %v5694 = vpack.c.b16 %v5676, %v5673
      %v5695 = vpack.c.b16 %v5677, %v5674
      %v5696 = vpack.c.b16 %v5681, %v5678
      %v5697 = vpack.c.b16 %v5682, %v5679
      %v5698 = vpack.c.b16 %v5683, %v5680
      %v5699 = vpack.c.b16 %v5687, %v5684
      %v5700 = vpack.c.b16 %v5688, %v5685
      %v5701 = vpack.c.b16 %v5689, %v5686
      %vm5710 = vcmask 89088
      %v5712 = vsel %vm5710, %v5692, 0
      %v5715 = vsel %vm5710, %v5695, 0
      %v5718 = vsel %vm5710, %v5698, 0
      %v5721 = vsel %vm5710, %v5701, 0
      %vm5723 = vcmask 1044480
      %vm5724 = vcmask 1045504
      %v5725 = vsel %vm5723, 4294967295, 65535
      %v5726 = vsel %vm5724, %v5725, 0
      %v5728 = vand.u32 %v5649, %v5726
      %5730 = vmatpush.bf16.msra.mxu0 %v5640
      %5731 = vmatpush.bf16.msra.mxu0 %v5639
      %5732 = vmatpush.bf16.msra.mxu0 %v5638
      %5733 = vmatpush.bf16.msra.mxu0 %v5637
      %5734 = vmatpush.bf16.msra.mxu0 %v5636
      %5735 = vmatpush.bf16.msra.mxu0 %v5635
      %5736 = vmatpush.bf16.msra.mxu0 %v5634
      %5737 = vmatpush.bf16.msra.mxu0 %v5633
      %5738 = vmatmul.bf16.gmra.mxu0 %v5690
      %v5739 = vpop.f32.mrf.mxu0
      %v5740 = vadd.f32 0.0, %v5739
      %v5741 = vpop.f32.mrf.mxu0
      %v5742 = vadd.f32 0.0, %v5741
      %5743 = vmatmul.bf16.gmra.mxu0 %v5693
      %v5744 = vpop.f32.mrf.mxu0
      %v5745 = vadd.f32 0.0, %v5744
      %v5746 = vpop.f32.mrf.mxu0
      %v5747 = vadd.f32 0.0, %v5746
      %5748 = vmatmul.bf16.gmra.mxu0 %v5696
      %v5749 = vpop.f32.mrf.mxu0
      %v5750 = vadd.f32 0.0, %v5749
      %v5751 = vpop.f32.mrf.mxu0
      %v5752 = vadd.f32 0.0, %v5751
      %5753 = vmatmul.bf16.gmra.mxu0 %v5699
      %v5754 = vpop.f32.mrf.mxu0
      %v5755 = vadd.f32 0.0, %v5754
      %v5756 = vpop.f32.mrf.mxu0
      %v5757 = vadd.f32 0.0, %v5756
      %5758 = vdwg.mxu0
      %5759 = vmatpush.bf16.msra.mxu0 %v5648
      %5760 = vmatpush.bf16.msra.mxu0 %v5647
      %5761 = vmatpush.bf16.msra.mxu0 %v5646
      %5762 = vmatpush.bf16.msra.mxu0 %v5645
      %5763 = vmatpush.bf16.msra.mxu0 %v5644
      %5764 = vmatpush.bf16.msra.mxu0 %v5643
      %5765 = vmatpush.bf16.msra.mxu0 %v5642
      %5766 = vmatpush.bf16.msra.mxu0 %v5641
      %5767 = vmatmul.bf16.gmra.mxu0 %v5691
      %v5768 = vpop.f32.mrf.mxu0
      %v5769 = vadd.f32 %v5740, %v5768
      %v5770 = vpop.f32.mrf.mxu0
      %v5771 = vadd.f32 %v5742, %v5770
      %5772 = vmatmul.bf16.gmra.mxu0 %v5694
      %v5773 = vpop.f32.mrf.mxu0
      %v5774 = vadd.f32 %v5745, %v5773
      %v5775 = vpop.f32.mrf.mxu0
      %v5776 = vadd.f32 %v5747, %v5775
      %5777 = vmatmul.bf16.gmra.mxu0 %v5697
      %v5778 = vpop.f32.mrf.mxu0
      %v5779 = vadd.f32 %v5750, %v5778
      %v5780 = vpop.f32.mrf.mxu0
      %v5781 = vadd.f32 %v5752, %v5780
      %5782 = vmatmul.bf16.gmra.mxu0 %v5700
      %v5783 = vpop.f32.mrf.mxu0
      %v5784 = vadd.f32 %v5755, %v5783
      %v5785 = vpop.f32.mrf.mxu0
      %v5786 = vadd.f32 %v5757, %v5785
      %5787 = vdwg.mxu0
      %5788 = vmatpush.bf16.msra.mxu0 0
      %5789 = vmatpush.bf16.msra.mxu0 0
      %5790 = vmatpush.bf16.msra.mxu0 0
      %5791 = vmatpush.bf16.msra.mxu0 0
      %5792 = vmatpush.bf16.msra.mxu0 0
      %5793 = vmatpush.bf16.msra.mxu0 0
      %5794 = vmatpush.bf16.msra.mxu0 0
      %5795 = vmatpush.bf16.msra.mxu0 %v5728
      %5796 = vmatmul.bf16.gmra.mxu0 %v5712
      %v5797 = vpop.f32.mrf.mxu0
      %v5798 = vadd.f32 %v5769, %v5797
      %v5799 = vpop.f32.mrf.mxu0
      %v5800 = vadd.f32 %v5771, %v5799
      %5801 = vmatmul.bf16.gmra.mxu0 %v5715
      %v5802 = vpop.f32.mrf.mxu0
      %v5803 = vadd.f32 %v5774, %v5802
      %v5804 = vpop.f32.mrf.mxu0
      %v5805 = vadd.f32 %v5776, %v5804
      %5806 = vmatmul.bf16.gmra.mxu0 %v5718
      %v5807 = vpop.f32.mrf.mxu0
      %v5808 = vadd.f32 %v5779, %v5807
      %v5809 = vpop.f32.mrf.mxu0
      %v5810 = vadd.f32 %v5781, %v5809
      %5811 = vmatmul.bf16.gmra.mxu0 %v5721
      %v5812 = vpop.f32.mrf.mxu0
      %v5813 = vadd.f32 %v5784, %v5812
      %v5814 = vpop.f32.mrf.mxu0
      %v5815 = vadd.f32 %v5786, %v5814
      %5816 = vdwg.mxu0
      %5817 = vst.msk [vmem:[%s234] sm:$0xff] %vm5215, %v5798
      %5818 = vst.msk [vmem:[%s234 + $0x8] sm:$0xff] %vm5215, %v5800
      %5819 = vst.msk [vmem:[%s234 + $0x10] sm:$0xff] %vm5215, %v5803
      %5820 = vst.msk [vmem:[%s234 + $0x18] sm:$0xff] %vm5215, %v5805
      %5821 = vst.msk [vmem:[%s234 + $0x20] sm:$0xff] %vm5215, %v5808
      %5822 = vst.msk [vmem:[%s234 + $0x28] sm:$0xff] %vm5215, %v5810
      %5823 = vst.msk [vmem:[%s234 + $0x30] sm:$0xff] %vm5215, %v5813
      %5824 = vst.msk [vmem:[%s234 + $0x38] sm:$0xff] %vm5215, %v5815
      %p5825 = scmp.lt.s32.totalorder %s19, 1
      %s5826 = scalar_select %p5825, %s19, 1
      %p5827 = scmp.lt.s32.totalorder %s20, 0
      %s5828 = scalar_select %p5827, %s20, 0
      %s5829 = smul.addr %s5826, 8
      %s5830 = sadd.s32 %s5828, %s5829
      %s5831 = smul.addr %s5830, 8
      %s5832 = scalar_lea.vmem %s4, %s5831
      // Predicated region
      $region37: #{tpu_custom_call.1} parent=35 // pred_check
        %p5833 = pneg %p141
      $region38: #{tpu_custom_call.1} parent=35 // pred_check_branch
        %5835 = sbr.rel (%p5833) target = $region40
      $region39: #{tpu_custom_call.1} parent=35 // pred_region
        _
      $region40: #{tpu_custom_call.1} parent=35 // pred_fallthru
        _
    $region36: #{tpu_custom_call.1} parent=5 // pred_fallthru
      _
    %p5836 = scmp.le.s32.totalorder 2, %s10
    // Predicated region
    $region41: #{tpu_custom_call.1} parent=5 // pred_check
      %p5837 = pneg %p5836
    $region42: #{tpu_custom_call.1} parent=5 // pred_check_branch
      %5839 = sbr.rel (%p5837) target = $region44
    $region43: #{tpu_custom_call.1} parent=5 // pred_region
      %s5840 = ssub.s32 %s10, 2
      // Predicated region
      $region45: #{tpu_custom_call.1} parent=43 // pred_check
        %p5841 = pneg %p147
      $region46: #{tpu_custom_call.1} parent=43 // pred_check_branch
        %5843 = sbr.rel (%p5841) target = $region48
      $region47: #{tpu_custom_call.1} parent=43 // pred_region
        %p5844 = scmp.lt.s32.totalorder %s21, 1
        %s5845 = scalar_select %p5844, %s21, 1
        %p5846 = scmp.lt.s32.totalorder %s22, 0
        %s5847 = scalar_select %p5846, %s22, 0
        %s5848 = smul.addr %s5845, 8
        %s5849 = sadd.s32 %s5847, %s5848
        %s5850 = smul.addr %s5849, 8
        %s5851 = scalar_lea.vmem %s4, %s5850
      $region48: #{tpu_custom_call.1} parent=43 // pred_fallthru
        _
    $region44: #{tpu_custom_call.1} parent=5 // pred_fallthru
      _
  $region6: #{tpu_custom_call.1} parent=0 // loop_footer
    %s14 = sadd.s32 1, %s10
  $region7: #{tpu_custom_call.1} parent=0 // loop_footer_branch
    %9 = sbr.rel target = $region3
  $region8: #{tpu_custom_call.1} parent=0 // loop_exit
    _

</llo_original>
